<compile_context>
chip_gen: v6e
topology: v6e:2x2x1
jax: 0.10.0
libtpu: 0.0.40
codegen_flags: <defaults>
</compile_context>

<pallas_src>
import numpy as np
import jax
import jax.numpy as jnp
from jax.experimental import pallas as pl
from jax.experimental.pallas import tpu as pltpu

LN_EPS = 1e-5
D_MODEL = 256
_SQRT_HALF = 0.7071067811865476
VMEM_LIMIT_BYTES = 48 * 1024 * 1024   # < 64 MiB physical on v7x, plenty on v5e/v6e

GLOBAL_NUM = 20
PLAYER_NUM = 22
NANA_NUM = 27
ANALOG_DIM = 6
BTN_DIM = 12
FLAGS_DIM = 5
NANA_FLAGS = 6
PROJ_NUM_PER = 5
PROJ_SLOTS = 8

FEATURE_DIMS = {
    "stage": 64, "port": 32, "character": 128, "action": 128, "costume": 1,
    "proj_owner": 32, "proj_type": 64, "proj_subtype": 64,
    "global_numeric": 64, "player_numeric": 128, "nana_numeric": 96,
    "analog": 64, "proj_numeric": 64, "buttons": 64, "flags": 64,
    "nana_buttons": 64, "nana_flags": 64,
}
_D = FEATURE_DIMS

# (param name, input dim, output dim) in the reference dense_parts order.
DENSE_SEGMENTS = (
    ("glob_enc", GLOBAL_NUM, _D["global_numeric"]),
    ("num_enc", PLAYER_NUM, _D["player_numeric"]),
    ("num_enc", PLAYER_NUM, _D["player_numeric"]),
    ("nana_num_enc", NANA_NUM, _D["nana_numeric"]),
    ("nana_num_enc", NANA_NUM, _D["nana_numeric"]),
    ("analog_enc", ANALOG_DIM, _D["analog"]),
    ("analog_enc", ANALOG_DIM, _D["analog"]),
    ("analog_enc", ANALOG_DIM, _D["analog"]),
    ("analog_enc", ANALOG_DIM, _D["analog"]),
    ("proj_num_enc", PROJ_NUM_PER * PROJ_SLOTS, _D["proj_numeric"]),
    ("btn_enc", BTN_DIM * 2, _D["buttons"]),
    ("flag_enc", FLAGS_DIM * 2, _D["flags"]),
    ("nana_btn_enc", BTN_DIM * 2, _D["nana_buttons"]),
    ("nana_flag_enc", NANA_FLAGS * 2, _D["nana_flags"]),
)
DENSE_IN = sum(s[1] for s in DENSE_SEGMENTS)       # 252 real numeric features
DENSE_IN_PAD = 256                                 # lane-aligned (2 x 128)
DENSE_OUT = sum(s[2] for s in DENSE_SEGMENTS)      # 1088 real
DENSE_OUT_PAD = 1152                               # 9 x 128 (pad cols are exact zeros)

EMB_DIM = (
    _D["stage"] + 2 * _D["port"] + 4 * _D["character"] + 4 * _D["action"]
    + 2 * _D["costume"]
    + PROJ_SLOTS * (_D["proj_owner"] + _D["proj_type"] + _D["proj_subtype"])
)                                                  # 2434 real
EMB_PAD = 2560                                     # 20 x 128 (pad cols are exact zeros)
TOTAL_DIM = EMB_DIM + DENSE_OUT                    # 3522 (matches reference, LN divisor)


def _round_up(n, m):
    return -(-n // m) * m


def _choose_tile(n):
    # Cap at 512 rows (fits comfortably in 48 MiB scoped VMEM incl. resident bf16
    # weights + temporaries) and shrink so the row grid has >= 4 steps when the
    # batch allows it (>= 2 per TensorCore on v7x, keeps the pipeline overlapped).
    # Minimum 16 rows (bf16 sublane packing on the embedding slab block).
    tile = 512
    while tile > 16 and pl.cdiv(n, tile) < 4:
        tile //= 2
    return tile


# ----------------------------------------------------------------------------
# Fused kernel:
#   Stage 1 — 14 per-segment LayerNorm->Linear->ReLU encoders:
#     per-segment LN stats via two INDEPENDENT segment-averaging matmuls
#     (mean = x@A, E[x^2] = (x*x)@A, var = E[x^2]-mean^2), then one
#     block-diagonal bf16 matmul (-> all 14 Linear layers) + bias + ReLU.
#     Result h (TILE, 1152) stays in VMEM (never written to HBM).
#   Stage 2 — LayerNorm(3522) over [emb_slab | h] (stats combined across the two
#     pieces, E[x^2]-mean^2, divisor = 3522 real columns), Linear -> exact-erf GELU.
# ----------------------------------------------------------------------------
def _fused_frame_kernel(xd_ref, xe_ref, a_ref, gin_ref, bin_ref, wbd_ref, bd_ref,
                        ge_ref, be_ref, gh_ref, bh_ref, we_ref, wh_ref, bp_ref,
                        o_ref):
    # ---- Stage 1: dense feature encoders ----
    x = xd_ref[...]                                   # (TILE, 256) f32, 4 zero pad cols
    A = a_ref[...]                                    # (256, 256) segment-averaging matrix
    mean = jnp.dot(x, A, preferred_element_type=jnp.float32)
    msq = jnp.dot(x * x, A, preferred_element_type=jnp.float32)
    var = msq - mean * mean                           # biased variance (torch LayerNorm)
    xn = (x - mean) * jax.lax.rsqrt(var + LN_EPS) * gin_ref[...] + bin_ref[...]
    h = jnp.dot(xn.astype(jnp.bfloat16), wbd_ref[...],
                preferred_element_type=jnp.float32)
    h = jnp.maximum(h + bd_ref[...], 0.0)             # (TILE, 1152) f32; pad cols stay 0

    # ---- Stage 2: final projection (LN stats over the 3522 real columns) ----
    xe = xe_ref[...].astype(jnp.float32)              # (TILE, 2560); bf16 stream, pad cols 0
    inv_d = 1.0 / TOTAL_DIM
    mu = (jnp.sum(xe, axis=-1, keepdims=True)
          + jnp.sum(h, axis=-1, keepdims=True)) * inv_d
    ex2 = (jnp.sum(xe * xe, axis=-1, keepdims=True)
           + jnp.sum(h * h, axis=-1, keepdims=True)) * inv_d
    r = jax.lax.rsqrt(ex2 - mu * mu + LN_EPS)
    # Pad columns: gamma/beta = 0 and the matching W rows are 0, so they contribute
    # nothing to the matmul.  Padded batch rows (all-zero inputs) produce finite
    # garbage through rsqrt(eps) and are sliced off by the wrapper.
    xne = ((xe - mu) * r) * ge_ref[...] + be_ref[...]
    xnh = ((h - mu) * r) * gh_ref[...] + bh_ref[...]
    y = jnp.dot(xne.astype(jnp.bfloat16), we_ref[...],
                preferred_element_type=jnp.float32)
    y = y + jnp.dot(xnh.astype(jnp.bfloat16), wh_ref[...],
                    preferred_element_type=jnp.float32)
    y = y + bp_ref[...]
    o_ref[...] = 0.5 * y * (1.0 + jax.lax.erf(y * _SQRT_HALF))   # exact erf GELU


def _fused_call(xd, xe, fp, tile):
    n = xd.shape[0]

    def const(shape):
        return pl.BlockSpec(shape, lambda i: (0, 0))

    return pl.pallas_call(
        _fused_frame_kernel,
        out_shape=jax.ShapeDtypeStruct((n, D_MODEL), jnp.float32),
        grid=(n // tile,),
        in_specs=[
            pl.BlockSpec((tile, DENSE_IN_PAD), lambda i: (i, 0)),   # dense inputs (f32, tiled)
            pl.BlockSpec((tile, EMB_PAD), lambda i: (i, 0)),        # embedding slab (bf16, tiled)
            const((DENSE_IN_PAD, DENSE_IN_PAD)),                    # seg-avg matrix (resident)
            const((1, DENSE_IN_PAD)),                               # gamma_in
            const((1, DENSE_IN_PAD)),                               # beta_in
            const((DENSE_IN_PAD, DENSE_OUT_PAD)),                   # W block-diag (bf16)
            const((1, DENSE_OUT_PAD)),                              # bias_dense
            const((1, EMB_PAD)),                                    # gamma_emb
            const((1, EMB_PAD)),                                    # beta_emb
            const((1, DENSE_OUT_PAD)),                              # gamma_dense-out
            const((1, DENSE_OUT_PAD)),                              # beta_dense-out
            const((EMB_PAD, D_MODEL)),                              # W_emb (bf16)
            const((DENSE_OUT_PAD, D_MODEL)),                        # W_dense-out (bf16)
            const((1, D_MODEL)),                                    # bias_proj
        ],
        out_specs=pl.BlockSpec((tile, D_MODEL), lambda i: (i, 0)),
        compiler_params=pltpu.CompilerParams(
            dimension_semantics=("parallel",),
            vmem_limit_bytes=VMEM_LIMIT_BYTES),
    )(xd, xe, fp["seg_avg"], fp["g_in"], fp["b_in"], fp["w_bd"], fp["bias_d"],
      fp["g_e"], fp["b_e"], fp["g_h"], fp["b_h"], fp["w_e"], fp["w_h"], fp["bias_p"])


# ----------------------------------------------------------------------------
# Parameter initialization (deterministic, synthetic) + fused-layout derivation
# ----------------------------------------------------------------------------
def _init_emb(key, num, dim):
    # Tables stored in bf16 so the gather/concat/stream of the (N, 2560) slab is bf16.
    return (jax.random.normal(key, (num, dim), jnp.float32) * 0.02).astype(jnp.bfloat16)


def _init_mlp(key, din, dout):
    k1, k2 = jax.random.split(key)
    return {
        "gamma": jnp.ones((din,), jnp.float32),
        "beta": jnp.zeros((din,), jnp.float32),
        "w": jax.random.normal(k1, (din, dout), jnp.float32) * 0.02,
        "bias": jax.random.normal(k2, (dout,), jnp.float32) * 0.02,
    }


def _build_fused(params):
    # Segment-averaging matrix A: A[k, j] = 1/din iff k and j in the same segment.
    # Pad rows/cols are zero so LN stats use only the real 252 features.
    A = np.zeros((DENSE_IN_PAD, DENSE_IN_PAD), np.float32)
    off = 0
    for _, din, _ in DENSE_SEGMENTS:
        A[off:off + din, off:off + din] = 1.0 / din
        off += din

    g_in = jnp.zeros((DENSE_IN_PAD,), jnp.float32)
    b_in = jnp.zeros((DENSE_IN_PAD,), jnp.float32)
    w_bd = jnp.zeros((DENSE_IN_PAD, DENSE_OUT_PAD), jnp.float32)
    bias_d = jnp.zeros((DENSE_OUT_PAD,), jnp.float32)
    ri, ci = 0, 0
    for name, din, dout in DENSE_SEGMENTS:
        p = params[name]
        g_in = g_in.at[ri:ri + din].set(p["gamma"])
        b_in = b_in.at[ri:ri + din].set(p["beta"])
        w_bd = w_bd.at[ri:ri + din, ci:ci + dout].set(p["w"])
        bias_d = bias_d.at[ci:ci + dout].set(p["bias"])
        ri += din
        ci += dout

    pj = params["proj"]
    g_e = jnp.zeros((EMB_PAD,), jnp.float32).at[:EMB_DIM].set(pj["gamma"][:EMB_DIM])
    b_e = jnp.zeros((EMB_PAD,), jnp.float32).at[:EMB_DIM].set(pj["beta"][:EMB_DIM])
    g_h = jnp.zeros((DENSE_OUT_PAD,), jnp.float32).at[:DENSE_OUT].set(pj["gamma"][EMB_DIM:])
    b_h = jnp.zeros((DENSE_OUT_PAD,), jnp.float32).at[:DENSE_OUT].set(pj["beta"][EMB_DIM:])
    w_e = jnp.zeros((EMB_PAD, D_MODEL), jnp.float32).at[:EMB_DIM].set(pj["w"][:EMB_DIM])
    w_h = jnp.zeros((DENSE_OUT_PAD, D_MODEL), jnp.float32).at[:DENSE_OUT].set(pj["w"][EMB_DIM:])

    return {
        "seg_avg": jnp.asarray(A),
        "g_in": g_in.reshape(1, DENSE_IN_PAD),
        "b_in": b_in.reshape(1, DENSE_IN_PAD),
        "w_bd": w_bd.astype(jnp.bfloat16),
        "bias_d": bias_d.reshape(1, DENSE_OUT_PAD),
        "g_e": g_e.reshape(1, EMB_PAD),
        "b_e": b_e.reshape(1, EMB_PAD),
        "g_h": g_h.reshape(1, DENSE_OUT_PAD),
        "b_h": b_h.reshape(1, DENSE_OUT_PAD),
        "w_e": w_e.astype(jnp.bfloat16),
        "w_h": w_h.astype(jnp.bfloat16),
        "bias_p": pj["bias"].reshape(1, D_MODEL),
    }


def init_params(key, num_stages, num_ports, num_characters, num_actions,
                num_costumes, num_proj_types, num_proj_subtypes):
    D = FEATURE_DIMS
    keys = iter(jax.random.split(key, 32))
    params = {
        "stage_emb": _init_emb(next(keys), num_stages, D["stage"]),
        "port_emb": _init_emb(next(keys), num_ports, D["port"]),
        "char_emb": _init_emb(next(keys), num_characters, D["character"]),
        "act_emb": _init_emb(next(keys), num_actions, D["action"]),
        "cost_emb": _init_emb(next(keys), num_costumes, D["costume"]),
        "ptype_emb": _init_emb(next(keys), num_proj_types, D["proj_type"]),
        "psub_emb": _init_emb(next(keys), num_proj_subtypes, D["proj_subtype"]),
        "glob_enc": _init_mlp(next(keys), GLOBAL_NUM, D["global_numeric"]),
        "num_enc": _init_mlp(next(keys), PLAYER_NUM, D["player_numeric"]),
        "nana_num_enc": _init_mlp(next(keys), NANA_NUM, D["nana_numeric"]),
        "analog_enc": _init_mlp(next(keys), ANALOG_DIM, D["analog"]),
        "proj_num_enc": _init_mlp(next(keys), PROJ_NUM_PER * PROJ_SLOTS, D["proj_numeric"]),
        "btn_enc": _init_mlp(next(keys), BTN_DIM * 2, D["buttons"]),
        "flag_enc": _init_mlp(next(keys), FLAGS_DIM * 2, D["flags"]),
        "nana_btn_enc": _init_mlp(next(keys), BTN_DIM * 2, D["nana_buttons"]),
        "nana_flag_enc": _init_mlp(next(keys), NANA_FLAGS * 2, D["nana_flags"]),
        "proj": _init_mlp(next(keys), TOTAL_DIM, D_MODEL),
    }
    params["fused"] = _build_fused(params)
    return params


# ----------------------------------------------------------------------------
# Forward pass
# ----------------------------------------------------------------------------
def frame_encoder_forward(params, seq):
    B, T = seq["stage"].shape
    N = B * T
    fused = params["fused"]
    f32 = lambda a: a.astype(jnp.float32)

    def embed(table, ids):
        return jnp.take(table, ids.reshape(-1), axis=0)         # (N, D) bf16

    cat_parts = [
        embed(params["stage_emb"], seq["stage"]),
        embed(params["port_emb"], seq["self_port"]),
        embed(params["port_emb"], seq["opp_port"]),
        embed(params["char_emb"], seq["self_character"]),
        embed(params["char_emb"], seq["opp_character"]),
        embed(params["act_emb"], seq["self_action"]),
        embed(params["act_emb"], seq["opp_action"]),
        embed(params["cost_emb"], seq["self_costume"]),
        embed(params["cost_emb"], seq["opp_costume"]),
        embed(params["char_emb"], seq["self_nana_character"]),
        embed(params["char_emb"], seq["opp_nana_character"]),
        embed(params["act_emb"], seq["self_nana_action"]),
        embed(params["act_emb"], seq["opp_nana_action"]),
    ]
    for j in range(PROJ_SLOTS):
        cat_parts.append(embed(params["port_emb"], seq[f"proj{j}_owner"]))
        cat_parts.append(embed(params["ptype_emb"], seq[f"proj{j}_type"]))
        cat_parts.append(embed(params["psub_emb"], seq[f"proj{j}_subtype"]))
    # lane padding 2434 -> 2560 folded into the concat (zero columns, gamma/W rows are 0)
    cat_parts.append(jnp.zeros((N, EMB_PAD - EMB_DIM), jnp.bfloat16))
    emb_slab = jnp.concatenate(cat_parts, axis=-1)               # (N, EMB_PAD) bf16

    dense_inputs = [
        f32(seq["numeric"]).reshape(N, GLOBAL_NUM),
        f32(seq["self_numeric"]).reshape(N, PLAYER_NUM),
        f32(seq["opp_numeric"]).reshape(N, PLAYER_NUM),
        f32(seq["self_nana_numeric"]).reshape(N, NANA_NUM),
        f32(seq["opp_nana_numeric"]).reshape(N, NANA_NUM),
        f32(seq["self_analog"]).reshape(N, ANALOG_DIM),
        f32(seq["opp_analog"]).reshape(N, ANALOG_DIM),
        f32(seq["self_nana_analog"]).reshape(N, ANALOG_DIM),
        f32(seq["opp_nana_analog"]).reshape(N, ANALOG_DIM),
    ]
    dense_inputs += [f32(seq[f"{k}_numeric"]).reshape(N, PROJ_NUM_PER)
                     for k in range(PROJ_SLOTS)]
    dense_inputs += [
        f32(seq["self_buttons"]).reshape(N, BTN_DIM),
        f32(seq["opp_buttons"]).reshape(N, BTN_DIM),
        f32(seq["self_flags"]).reshape(N, FLAGS_DIM),
        f32(seq["opp_flags"]).reshape(N, FLAGS_DIM),
        f32(seq["self_nana_buttons"]).reshape(N, BTN_DIM),
        f32(seq["opp_nana_buttons"]).reshape(N, BTN_DIM),
        f32(seq["self_nana_flags"]).reshape(N, NANA_FLAGS),
        f32(seq["opp_nana_flags"]).reshape(N, NANA_FLAGS),
        jnp.zeros((N, DENSE_IN_PAD - DENSE_IN), jnp.float32),    # 252 -> 256 zero pad
    ]
    dense_slab = jnp.concatenate(dense_inputs, axis=-1)          # (N, 256) f32
    assert dense_slab.shape[-1] == DENSE_IN_PAD
    assert emb_slab.shape[-1] == EMB_PAD

    tile = _choose_tile(N)
    n_pad = _round_up(N, tile)
    if n_pad != N:
        emb_slab = jnp.pad(emb_slab, ((0, n_pad - N), (0, 0)))
        dense_slab = jnp.pad(dense_slab, ((0, n_pad - N), (0, 0)))

    # concat_dropout / per-encoder dropout: identity in eval mode.
    out = _fused_call(dense_slab, emb_slab, fused, tile)          # (n_pad, 256)
    return out[:N].reshape(B, T, D_MODEL)


# ----------------------------------------------------------------------------
# Demo
# ----------------------------------------------------------------------------
if __name__ == "__main__":
    B, T = 2, 8
    num_stages, num_ports, num_characters = 6, 4, 8
    num_actions, num_costumes = 10, 4
    num_proj_types, num_proj_subtypes = 6, 6

    key = jax.random.PRNGKey(0)
    pkey, dkey = jax.random.split(key)
    params = init_params(pkey, num_stages, num_ports, num_characters, num_actions,
                         num_costumes, num_proj_types, num_proj_subtypes)

    keys = iter(jax.random.split(dkey, 96))

    def cat(n):
        return jax.random.randint(next(keys), (B, T), 0, n, jnp.int32)

    def num(d):
        return jax.random.normal(next(keys), (B, T, d), jnp.float32)

    def boolv(d):
        return jax.random.bernoulli(next(keys), 0.3, (B, T, d))

    seq = {
        "stage": cat(num_stages),
        "self_port": cat(num_ports), "opp_port": cat(num_ports),
        "self_character": cat(num_characters), "opp_character": cat(num_characters),
        "self_action": cat(num_actions), "opp_action": cat(num_actions),
        "self_costume": cat(num_costumes), "opp_costume": cat(num_costumes),
        "self_nana_character": cat(num_characters), "opp_nana_character": cat(num_characters),
        "self_nana_action": cat(num_actions), "opp_nana_action": cat(num_actions),
        "numeric": num(GLOBAL_NUM),
        "self_numeric": num(PLAYER_NUM), "opp_numeric": num(PLAYER_NUM),
        "self_nana_numeric": num(NANA_NUM), "opp_nana_numeric": num(NANA_NUM),
        "self_analog": num(ANALOG_DIM), "opp_analog": num(ANALOG_DIM),
        "self_nana_analog": num(ANALOG_DIM), "opp_nana_analog": num(ANALOG_DIM),
        "self_buttons": boolv(BTN_DIM), "opp_buttons": boolv(BTN_DIM),
        "self_flags": boolv(FLAGS_DIM), "opp_flags": boolv(FLAGS_DIM),
        "self_nana_buttons": boolv(BTN_DIM), "opp_nana_buttons": boolv(BTN_DIM),
        "self_nana_flags": boolv(NANA_FLAGS), "opp_nana_flags": boolv(NANA_FLAGS),
    }
    for j in range(PROJ_SLOTS):
        seq[f"proj{j}_owner"] = cat(num_ports)
        seq[f"proj{j}_type"] = cat(num_proj_types)
        seq[f"proj{j}_subtype"] = cat(num_proj_subtypes)
        seq[f"{j}_numeric"] = num(PROJ_NUM_PER)

    out = jax.block_until_ready(frame_encoder_forward(params, seq))
    assert out.shape == (B, T, D_MODEL), out.shape
    assert out.dtype == jnp.float32
    assert bool(jnp.all(jnp.isfinite(out)))
    print("KERNEL_OK")
</pallas_src>

<mosaic_0001>
module attributes {stable_mosaic.version = 11 : i64} {
  func.func @_fused_frame_kernel(%arg0: i32, %arg1: memref<16x256xf32, #tpu.memory_space<vmem>>, %arg2: memref<16x2560xbf16, #tpu.memory_space<vmem>>, %arg3: memref<256x256xf32, #tpu.memory_space<vmem>>, %arg4: memref<1x256xf32, #tpu.memory_space<vmem>>, %arg5: memref<1x256xf32, #tpu.memory_space<vmem>>, %arg6: memref<256x1152xbf16, #tpu.memory_space<vmem>>, %arg7: memref<1x1152xf32, #tpu.memory_space<vmem>>, %arg8: memref<1x2560xf32, #tpu.memory_space<vmem>>, %arg9: memref<1x2560xf32, #tpu.memory_space<vmem>>, %arg10: memref<1x1152xf32, #tpu.memory_space<vmem>>, %arg11: memref<1x1152xf32, #tpu.memory_space<vmem>>, %arg12: memref<2560x256xbf16, #tpu.memory_space<vmem>>, %arg13: memref<1152x256xbf16, #tpu.memory_space<vmem>>, %arg14: memref<1x256xf32, #tpu.memory_space<vmem>>, %arg15: memref<16x256xf32, #tpu.memory_space<vmem>>) attributes {dimension_semantics = [#tpu.dimension_semantics<parallel>], iteration_bounds = array<i64: 1>, scalar_prefetch = 0 : i64, scratch_operands = 0 : i64, tpu.core_type = #tpu.core_type<tc>, window_params = [{transform_indices = @transform_0, window_bounds = array<i64: 16, 256>}, {transform_indices = @transform_1, window_bounds = array<i64: 16, 2560>}, {pipeline_mode = #tpu.pipeline_mode<synchronous>, transform_indices = @transform_2, window_bounds = array<i64: 256, 256>}, {pipeline_mode = #tpu.pipeline_mode<synchronous>, transform_indices = @transform_3, window_bounds = array<i64: 1, 256>}, {pipeline_mode = #tpu.pipeline_mode<synchronous>, transform_indices = @transform_4, window_bounds = array<i64: 1, 256>}, {pipeline_mode = #tpu.pipeline_mode<synchronous>, transform_indices = @transform_5, window_bounds = array<i64: 256, 1152>}, {pipeline_mode = #tpu.pipeline_mode<synchronous>, transform_indices = @transform_6, window_bounds = array<i64: 1, 1152>}, {pipeline_mode = #tpu.pipeline_mode<synchronous>, transform_indices = @transform_7, window_bounds = array<i64: 1, 2560>}, {pipeline_mode = #tpu.pipeline_mode<synchronous>, transform_indices = @transform_8, window_bounds = array<i64: 1, 2560>}, {pipeline_mode = #tpu.pipeline_mode<synchronous>, transform_indices = @transform_9, window_bounds = array<i64: 1, 1152>}, {pipeline_mode = #tpu.pipeline_mode<synchronous>, transform_indices = @transform_10, window_bounds = array<i64: 1, 1152>}, {pipeline_mode = #tpu.pipeline_mode<synchronous>, transform_indices = @transform_11, window_bounds = array<i64: 2560, 256>}, {pipeline_mode = #tpu.pipeline_mode<synchronous>, transform_indices = @transform_12, window_bounds = array<i64: 1152, 256>}, {pipeline_mode = #tpu.pipeline_mode<synchronous>, transform_indices = @transform_13, window_bounds = array<i64: 1, 256>}, {transform_indices = @transform_14, window_bounds = array<i64: 16, 256>}]} {
    %c0 = arith.constant 0 : index
    %c0_0 = arith.constant 0 : index
    %0 = vector.load %arg1[%c0, %c0_0] : memref<16x256xf32, #tpu.memory_space<vmem>>, vector<16x256xf32>
    %c0_1 = arith.constant 0 : index
    %c0_2 = arith.constant 0 : index
    %1 = vector.load %arg3[%c0_1, %c0_2] : memref<256x256xf32, #tpu.memory_space<vmem>>, vector<256x256xf32>
    %cst = arith.constant dense<0.000000e+00> : vector<16x256xf32>
    %2 = tpu.matmul %0, %1, %cst {dimension_numbers = #tpu.dot_dimension_numbers<[1], [0], [0], [1], [0, 0, 1, 1], [], []>} : vector<16x256xf32>, vector<256x256xf32>, vector<16x256xf32> -> vector<16x256xf32>
    %3 = arith.mulf %0, %0 : vector<16x256xf32>
    %cst_3 = arith.constant dense<0.000000e+00> : vector<16x256xf32>
    %4 = tpu.matmul %3, %1, %cst_3 {dimension_numbers = #tpu.dot_dimension_numbers<[1], [0], [0], [1], [0, 0, 1, 1], [], []>} : vector<16x256xf32>, vector<256x256xf32>, vector<16x256xf32> -> vector<16x256xf32>
    %5 = arith.mulf %2, %2 : vector<16x256xf32>
    %6 = arith.subf %4, %5 : vector<16x256xf32>
    %7 = arith.subf %0, %2 : vector<16x256xf32>
    %cst_4 = arith.constant 9.99999974E-6 : f32
    %8 = vector.broadcast %cst_4 : f32 to vector<16x256xf32>
    %9 = arith.addf %6, %8 : vector<16x256xf32>
    %10 = math.rsqrt %9 : vector<16x256xf32>
    %11 = arith.mulf %7, %10 : vector<16x256xf32>
    %c0_5 = arith.constant 0 : index
    %c0_6 = arith.constant 0 : index
    %12 = vector.load %arg4[%c0_5, %c0_6] : memref<1x256xf32, #tpu.memory_space<vmem>>, vector<1x256xf32>
    %13 = vector.broadcast %12 : vector<1x256xf32> to vector<16x256xf32>
    %14 = arith.mulf %11, %13 : vector<16x256xf32>
    %c0_7 = arith.constant 0 : index
    %c0_8 = arith.constant 0 : index
    %15 = vector.load %arg5[%c0_7, %c0_8] : memref<1x256xf32, #tpu.memory_space<vmem>>, vector<1x256xf32>
    %16 = vector.broadcast %15 : vector<1x256xf32> to vector<16x256xf32>
    %17 = arith.addf %14, %16 : vector<16x256xf32>
    %18 = arith.truncf %17 : vector<16x256xf32> to vector<16x256xbf16>
    %c0_9 = arith.constant 0 : index
    %c0_10 = arith.constant 0 : index
    %19 = vector.load %arg6[%c0_9, %c0_10] : memref<256x1152xbf16, #tpu.memory_space<vmem>>, vector<256x1152xbf16>
    %cst_11 = arith.constant dense<0.000000e+00> : vector<16x1152xf32>
    %20 = tpu.matmul %18, %19, %cst_11 {dimension_numbers = #tpu.dot_dimension_numbers<[1], [0], [0], [1], [0, 0, 1, 1], [], []>} : vector<16x256xbf16>, vector<256x1152xbf16>, vector<16x1152xf32> -> vector<16x1152xf32>
    %c0_12 = arith.constant 0 : index
    %c0_13 = arith.constant 0 : index
    %21 = vector.load %arg7[%c0_12, %c0_13] : memref<1x1152xf32, #tpu.memory_space<vmem>>, vector<1x1152xf32>
    %22 = vector.broadcast %21 : vector<1x1152xf32> to vector<16x1152xf32>
    %23 = arith.addf %20, %22 : vector<16x1152xf32>
    %cst_14 = arith.constant 0.000000e+00 : f32
    %24 = vector.broadcast %cst_14 : f32 to vector<16x1152xf32>
    %25 = arith.maximumf %23, %24 : vector<16x1152xf32>
    %c0_15 = arith.constant 0 : index
    %c0_16 = arith.constant 0 : index
    %26 = vector.load %arg2[%c0_15, %c0_16] : memref<16x2560xbf16, #tpu.memory_space<vmem>>, vector<16x2560xbf16>
    %27 = arith.extf %26 : vector<16x2560xbf16> to vector<16x2560xf32>
    %cst_17 = arith.constant dense<0.000000e+00> : vector<16xf32>
    %28 = vector.multi_reduction <add>, %27, %cst_17 [1] : vector<16x2560xf32> to vector<16xf32>
    %29 = vector.shape_cast %28 : vector<16xf32> to vector<16x1xf32>
    %cst_18 = arith.constant dense<0.000000e+00> : vector<16xf32>
    %30 = vector.multi_reduction <add>, %25, %cst_18 [1] : vector<16x1152xf32> to vector<16xf32>
    %31 = vector.shape_cast %30 : vector<16xf32> to vector<16x1xf32>
    %32 = arith.addf %29, %31 : vector<16x1xf32>
    %cst_19 = arith.constant 2.83929578E-4 : f32
    %33 = vector.broadcast %cst_19 : f32 to vector<16x1xf32>
    %34 = arith.mulf %32, %33 : vector<16x1xf32>
    %35 = arith.mulf %27, %27 : vector<16x2560xf32>
    %cst_20 = arith.constant dense<0.000000e+00> : vector<16xf32>
    %36 = vector.multi_reduction <add>, %35, %cst_20 [1] : vector<16x2560xf32> to vector<16xf32>
    %37 = vector.shape_cast %36 : vector<16xf32> to vector<16x1xf32>
    %38 = arith.mulf %25, %25 : vector<16x1152xf32>
    %cst_21 = arith.constant dense<0.000000e+00> : vector<16xf32>
    %39 = vector.multi_reduction <add>, %38, %cst_21 [1] : vector<16x1152xf32> to vector<16xf32>
    %40 = vector.shape_cast %39 : vector<16xf32> to vector<16x1xf32>
    %41 = arith.addf %37, %40 : vector<16x1xf32>
    %cst_22 = arith.constant 2.83929578E-4 : f32
    %42 = vector.broadcast %cst_22 : f32 to vector<16x1xf32>
    %43 = arith.mulf %41, %42 : vector<16x1xf32>
    %44 = arith.mulf %34, %34 : vector<16x1xf32>
    %45 = arith.subf %43, %44 : vector<16x1xf32>
    %cst_23 = arith.constant 9.99999974E-6 : f32
    %46 = vector.broadcast %cst_23 : f32 to vector<16x1xf32>
    %47 = arith.addf %45, %46 : vector<16x1xf32>
    %48 = math.rsqrt %47 : vector<16x1xf32>
    %49 = vector.broadcast %34 : vector<16x1xf32> to vector<16x2560xf32>
    %50 = arith.subf %27, %49 : vector<16x2560xf32>
    %51 = vector.broadcast %48 : vector<16x1xf32> to vector<16x2560xf32>
    %52 = arith.mulf %50, %51 : vector<16x2560xf32>
    %c0_24 = arith.constant 0 : index
    %c0_25 = arith.constant 0 : index
    %53 = vector.load %arg8[%c0_24, %c0_25] : memref<1x2560xf32, #tpu.memory_space<vmem>>, vector<1x2560xf32>
    %54 = vector.broadcast %53 : vector<1x2560xf32> to vector<16x2560xf32>
    %55 = arith.mulf %52, %54 : vector<16x2560xf32>
    %c0_26 = arith.constant 0 : index
    %c0_27 = arith.constant 0 : index
    %56 = vector.load %arg9[%c0_26, %c0_27] : memref<1x2560xf32, #tpu.memory_space<vmem>>, vector<1x2560xf32>
    %57 = vector.broadcast %56 : vector<1x2560xf32> to vector<16x2560xf32>
    %58 = arith.addf %55, %57 : vector<16x2560xf32>
    %59 = vector.broadcast %34 : vector<16x1xf32> to vector<16x1152xf32>
    %60 = arith.subf %25, %59 : vector<16x1152xf32>
    %61 = vector.broadcast %48 : vector<16x1xf32> to vector<16x1152xf32>
    %62 = arith.mulf %60, %61 : vector<16x1152xf32>
    %c0_28 = arith.constant 0 : index
    %c0_29 = arith.constant 0 : index
    %63 = vector.load %arg10[%c0_28, %c0_29] : memref<1x1152xf32, #tpu.memory_space<vmem>>, vector<1x1152xf32>
    %64 = vector.broadcast %63 : vector<1x1152xf32> to vector<16x1152xf32>
    %65 = arith.mulf %62, %64 : vector<16x1152xf32>
    %c0_30 = arith.constant 0 : index
    %c0_31 = arith.constant 0 : index
    %66 = vector.load %arg11[%c0_30, %c0_31] : memref<1x1152xf32, #tpu.memory_space<vmem>>, vector<1x1152xf32>
    %67 = vector.broadcast %66 : vector<1x1152xf32> to vector<16x1152xf32>
    %68 = arith.addf %65, %67 : vector<16x1152xf32>
    %69 = arith.truncf %58 : vector<16x2560xf32> to vector<16x2560xbf16>
    %c0_32 = arith.constant 0 : index
    %c0_33 = arith.constant 0 : index
    %70 = vector.load %arg12[%c0_32, %c0_33] : memref<2560x256xbf16, #tpu.memory_space<vmem>>, vector<2560x256xbf16>
    %cst_34 = arith.constant dense<0.000000e+00> : vector<16x256xf32>
    %71 = tpu.matmul %69, %70, %cst_34 {dimension_numbers = #tpu.dot_dimension_numbers<[1], [0], [0], [1], [0, 0, 1, 1], [], []>} : vector<16x2560xbf16>, vector<2560x256xbf16>, vector<16x256xf32> -> vector<16x256xf32>
    %72 = arith.truncf %68 : vector<16x1152xf32> to vector<16x1152xbf16>
    %c0_35 = arith.constant 0 : index
    %c0_36 = arith.constant 0 : index
    %73 = vector.load %arg13[%c0_35, %c0_36] : memref<1152x256xbf16, #tpu.memory_space<vmem>>, vector<1152x256xbf16>
    %cst_37 = arith.constant dense<0.000000e+00> : vector<16x256xf32>
    %74 = tpu.matmul %72, %73, %cst_37 {dimension_numbers = #tpu.dot_dimension_numbers<[1], [0], [0], [1], [0, 0, 1, 1], [], []>} : vector<16x1152xbf16>, vector<1152x256xbf16>, vector<16x256xf32> -> vector<16x256xf32>
    %75 = arith.addf %71, %74 : vector<16x256xf32>
    %c0_38 = arith.constant 0 : index
    %c0_39 = arith.constant 0 : index
    %76 = vector.load %arg14[%c0_38, %c0_39] : memref<1x256xf32, #tpu.memory_space<vmem>>, vector<1x256xf32>
    %77 = vector.broadcast %76 : vector<1x256xf32> to vector<16x256xf32>
    %78 = arith.addf %75, %77 : vector<16x256xf32>
    %cst_40 = arith.constant 5.000000e-01 : f32
    %79 = vector.broadcast %cst_40 : f32 to vector<16x256xf32>
    %80 = arith.mulf %79, %78 : vector<16x256xf32>
    %cst_41 = arith.constant 0.707106769 : f32
    %81 = vector.broadcast %cst_41 : f32 to vector<16x256xf32>
    %82 = arith.mulf %78, %81 : vector<16x256xf32>
    %83 = math.erf %82 : vector<16x256xf32>
    %cst_42 = arith.constant 1.000000e+00 : f32
    %84 = vector.broadcast %cst_42 : f32 to vector<16x256xf32>
    %85 = arith.addf %84, %83 : vector<16x256xf32>
    %86 = arith.mulf %80, %85 : vector<16x256xf32>
    %c0_43 = arith.constant 0 : index
    %c0_44 = arith.constant 0 : index
    %87 = vector.load %arg15[%c0_43, %c0_44] : memref<16x256xf32, #tpu.memory_space<vmem>>, vector<16x256xf32>
    tpu.vector_store %arg15[%c0_43, %c0_44], %86 {strides = array<i32>} : memref<16x256xf32, #tpu.memory_space<vmem>>, vector<16x256xf32>,
    return
  }
  func.func @transform_0(%arg0: i32) -> (i32, i32) {
    %c0_i32 = arith.constant 0 : i32
    %c0_i32_0 = arith.constant 0 : i32
    return %arg0, %c0_i32 : i32, i32
  }
  func.func @transform_1(%arg0: i32) -> (i32, i32) {
    %c0_i32 = arith.constant 0 : i32
    %c0_i32_0 = arith.constant 0 : i32
    return %arg0, %c0_i32 : i32, i32
  }
  func.func @transform_2(%arg0: i32) -> (i32, i32) {
    %c0_i32 = arith.constant 0 : i32
    %c0_i32_0 = arith.constant 0 : i32
    %c0_i32_1 = arith.constant 0 : i32
    return %c0_i32, %c0_i32_0 : i32, i32
  }
  func.func @transform_3(%arg0: i32) -> (i32, i32) {
    %c0_i32 = arith.constant 0 : i32
    %c0_i32_0 = arith.constant 0 : i32
    %c0_i32_1 = arith.constant 0 : i32
    return %c0_i32, %c0_i32_0 : i32, i32
  }
  func.func @transform_4(%arg0: i32) -> (i32, i32) {
    %c0_i32 = arith.constant 0 : i32
    %c0_i32_0 = arith.constant 0 : i32
    %c0_i32_1 = arith.constant 0 : i32
    return %c0_i32, %c0_i32_0 : i32, i32
  }
  func.func @transform_5(%arg0: i32) -> (i32, i32) {
    %c0_i32 = arith.constant 0 : i32
    %c0_i32_0 = arith.constant 0 : i32
    %c0_i32_1 = arith.constant 0 : i32
    return %c0_i32, %c0_i32_0 : i32, i32
  }
  func.func @transform_6(%arg0: i32) -> (i32, i32) {
    %c0_i32 = arith.constant 0 : i32
    %c0_i32_0 = arith.constant 0 : i32
    %c0_i32_1 = arith.constant 0 : i32
    return %c0_i32, %c0_i32_0 : i32, i32
  }
  func.func @transform_7(%arg0: i32) -> (i32, i32) {
    %c0_i32 = arith.constant 0 : i32
    %c0_i32_0 = arith.constant 0 : i32
    %c0_i32_1 = arith.constant 0 : i32
    return %c0_i32, %c0_i32_0 : i32, i32
  }
  func.func @transform_8(%arg0: i32) -> (i32, i32) {
    %c0_i32 = arith.constant 0 : i32
    %c0_i32_0 = arith.constant 0 : i32
    %c0_i32_1 = arith.constant 0 : i32
    return %c0_i32, %c0_i32_0 : i32, i32
  }
  func.func @transform_9(%arg0: i32) -> (i32, i32) {
    %c0_i32 = arith.constant 0 : i32
    %c0_i32_0 = arith.constant 0 : i32
    %c0_i32_1 = arith.constant 0 : i32
    return %c0_i32, %c0_i32_0 : i32, i32
  }
  func.func @transform_10(%arg0: i32) -> (i32, i32) {
    %c0_i32 = arith.constant 0 : i32
    %c0_i32_0 = arith.constant 0 : i32
    %c0_i32_1 = arith.constant 0 : i32
    return %c0_i32, %c0_i32_0 : i32, i32
  }
  func.func @transform_11(%arg0: i32) -> (i32, i32) {
    %c0_i32 = arith.constant 0 : i32
    %c0_i32_0 = arith.constant 0 : i32
    %c0_i32_1 = arith.constant 0 : i32
    return %c0_i32, %c0_i32_0 : i32, i32
  }
  func.func @transform_12(%arg0: i32) -> (i32, i32) {
    %c0_i32 = arith.constant 0 : i32
    %c0_i32_0 = arith.constant 0 : i32
    %c0_i32_1 = arith.constant 0 : i32
    return %c0_i32, %c0_i32_0 : i32, i32
  }
  func.func @transform_13(%arg0: i32) -> (i32, i32) {
    %c0_i32 = arith.constant 0 : i32
    %c0_i32_0 = arith.constant 0 : i32
    %c0_i32_1 = arith.constant 0 : i32
    return %c0_i32, %c0_i32_0 : i32, i32
  }
  func.func @transform_14(%arg0: i32) -> (i32, i32) {
    %c0_i32 = arith.constant 0 : i32
    %c0_i32_0 = arith.constant 0 : i32
    return %arg0, %c0_i32 : i32, i32
  }
}

</mosaic_0001>

<llo_original>
// kernel: tpu_custom_call.1
$region0: #{tpu_custom_call.1}
  #allocation0 [shape = 'u32[]', space=smem, size = 0x4, offset = 0x4, fixed_abs, tag = 'smem constant byte address 0x4 - core index']
  #allocation1 [shape = 'u32[144,128]{1,0:T(1,128)}', space=vmem, size = 0x12000, scoped, tag = 'internal scratch']
  %s0 = inlined_call_operand.hbm [shape: f32[16,256], index: 0, kind: input, shape index: {}]
  %s1 = inlined_call_operand.hbm [shape: bf16[16,2560], index: 1, kind: input, shape index: {}]
  %s2 = inlined_call_operand.hbm [shape: f32[256,256], index: 2, kind: input, shape index: {}]
  %s3 = inlined_call_operand.hbm [shape: f32[1,256], index: 3, kind: input, shape index: {}]
  %s4 = inlined_call_operand.hbm [shape: f32[1,256], index: 4, kind: input, shape index: {}]
  %s5 = inlined_call_operand.hbm [shape: bf16[256,1152], index: 5, kind: input, shape index: {}]
  %s6 = inlined_call_operand.hbm [shape: f32[1,1152], index: 6, kind: input, shape index: {}]
  %s7 = inlined_call_operand.hbm [shape: f32[1,2560], index: 7, kind: input, shape index: {}]
  %s8 = inlined_call_operand.hbm [shape: f32[1,2560], index: 8, kind: input, shape index: {}]
  %s9 = inlined_call_operand.hbm [shape: f32[1,1152], index: 9, kind: input, shape index: {}]
  %s10 = inlined_call_operand.hbm [shape: f32[1,1152], index: 10, kind: input, shape index: {}]
  %s11 = inlined_call_operand.hbm [shape: bf16[2560,256], index: 11, kind: input, shape index: {}]
  %s12 = inlined_call_operand.hbm [shape: bf16[1152,256], index: 12, kind: input, shape index: {}]
  %s13 = inlined_call_operand.hbm [shape: f32[1,256], index: 13, kind: input, shape index: {}]
  %s14 = inlined_call_operand.hbm [shape: f32[16,256], index: 14, kind: output, shape index: {}]
  %s15 = sld [smem:[#allocation0]]
  $region122: #{tpu_custom_call.1} parent=0
    _
  %s17 = ssub.s32 1, %s15
  %s18 = scalar_select 0, %s17, %s15
  $region1: #{tpu_custom_call.1} parent=0
    #allocation2 [shape = 'u8[16384]{0}', space=vmem, size = 0x4000, scoped, tag = 'input window, operand 0, single buffered']
    #allocation3 [shape = 's32[1]{0}', space=sflag, size = 0x4, scoped, tag = 'scoped memory for tpu_custom_call.1']
    #allocation4 [shape = 's32[1]{0}', space=sflag, size = 0x4, scoped, tag = 'scoped memory for tpu_custom_call.1']
    #allocation5 [shape = 'u8[81920]{0}', space=vmem, size = 0x14000, scoped, tag = 'input window, operand 1, single buffered']
    #allocation6 [shape = 's32[1]{0}', space=sflag, size = 0x4, scoped, tag = 'scoped memory for tpu_custom_call.1']
    #allocation7 [shape = 'u8[262144]{0}', space=vmem, size = 0x40000, scoped, tag = 'input window, operand 2, single buffered']
    #allocation8 [shape = 'u8[1024]{0}', space=vmem, size = 0x400, scoped, tag = 'input window, operand 3, single buffered']
    #allocation9 [shape = 's32[1]{0}', space=sflag, size = 0x4, scoped, tag = 'scoped memory for tpu_custom_call.1']
    #allocation10 [shape = 'u8[1024]{0}', space=vmem, size = 0x400, scoped, tag = 'input window, operand 4, single buffered']
    #allocation11 [shape = 'u8[589824]{0}', space=vmem, size = 0x90000, scoped, tag = 'input window, operand 5, single buffered']
    #allocation12 [shape = 's32[1]{0}', space=sflag, size = 0x4, scoped, tag = 'scoped memory for tpu_custom_call.1']
    #allocation13 [shape = 'u8[4608]{0}', space=vmem, size = 0x1400, scoped, tag = 'input window, operand 6, single buffered']
    #allocation14 [shape = 'u8[10240]{0}', space=vmem, size = 0x2800, scoped, tag = 'input window, operand 7, single buffered']
    #allocation15 [shape = 's32[1]{0}', space=sflag, size = 0x4, scoped, tag = 'scoped memory for tpu_custom_call.1']
    #allocation16 [shape = 'u8[10240]{0}', space=vmem, size = 0x2800, scoped, tag = 'input window, operand 8, single buffered']
    #allocation17 [shape = 'u8[4608]{0}', space=vmem, size = 0x1400, scoped, tag = 'input window, operand 9, single buffered']
    #allocation18 [shape = 's32[1]{0}', space=sflag, size = 0x4, scoped, tag = 'scoped memory for tpu_custom_call.1']
    #allocation19 [shape = 'u8[4608]{0}', space=vmem, size = 0x1400, scoped, tag = 'input window, operand 10, single buffered']
    #allocation20 [shape = 'u8[1310720]{0}', space=vmem, size = 0x140000, scoped, tag = 'input window, operand 11, single buffered']
    #allocation21 [shape = 's32[1]{0}', space=sflag, size = 0x4, scoped, tag = 'scoped memory for tpu_custom_call.1']
    #allocation22 [shape = 'u8[589824]{0}', space=vmem, size = 0x90000, scoped, tag = 'input window, operand 12, single buffered']
    #allocation23 [shape = 'u8[1024]{0}', space=vmem, size = 0x400, scoped, tag = 'input window, operand 13, single buffered']
    #allocation24 [shape = 's32[1]{0}', space=sflag, size = 0x4, scoped, tag = 'scoped memory for tpu_custom_call.1']
    #allocation25 [shape = 'u8[16384]{0}', space=vmem, size = 0x4000, scoped, tag = 'output window, operand 0, single buffered']
    %19 = vsyncpa [#allocation3], 0
    %20 = vsyncpa [#allocation6], 0
    %21 = vsyncpa [#allocation9], 0
    %22 = vsyncpa [#allocation12], 0
    %23 = vsyncpa [#allocation15], 0
    %24 = vsyncpa [#allocation18], 0
    %25 = vsyncpa [#allocation21], 0
    %26 = vsyncpa [#allocation24], 0
    %27 = vsyncpa [#allocation4], 0
    // Predicated region
    $region2: #{tpu_custom_call.1} parent=1 // pred_check
      _
    $region3: #{tpu_custom_call.1} parent=1 // pred_check_branch
      %29 = sbr.rel (0) target = $region5
    $region4: #{tpu_custom_call.1} parent=1 // pred_region
      %s31 = ssub.s32 512, 512
      %32 = vsyncadd [#allocation3], %s31
      %s33 = sshll.u32 [#allocation2], 4
      %s34 = int_to_ptr.vmem [resolvable:$true] %s33
      %39 = dma.hbm_to_vmem [thread:$0]  %s0, 512, %s34, [#allocation3], 256, 256, 16
    $region5: #{tpu_custom_call.1} parent=1 // pred_fallthru
      _
    // Predicated region
    $region6: #{tpu_custom_call.1} parent=1 // pred_check
      _
    $region7: #{tpu_custom_call.1} parent=1 // pred_check_branch
      %41 = sbr.rel (0) target = $region9
    $region8: #{tpu_custom_call.1} parent=1 // pred_region
      %s43 = ssub.s32 2560, 2560
      %44 = vsyncadd [#allocation6], %s43
      %s45 = sshll.u32 [#allocation5], 4
      %s46 = int_to_ptr.vmem [resolvable:$true] %s45
      %51 = dma.hbm_to_vmem [thread:$0]  %s1, 2560, %s46, [#allocation6], 1280, 1280, 80
    $region9: #{tpu_custom_call.1} parent=1 // pred_fallthru
      _
    // Predicated region
    $region10: #{tpu_custom_call.1} parent=1 // pred_check
      _
    $region11: #{tpu_custom_call.1} parent=1 // pred_check_branch
      %53 = sbr.rel (0) target = $region13
    $region12: #{tpu_custom_call.1} parent=1 // pred_region
      %s55 = ssub.s32 8192, 8192
      %56 = vsyncadd [#allocation6], %s55
      %s57 = sshll.u32 [#allocation7], 4
      %s58 = int_to_ptr.vmem [resolvable:$true] %s57
      %63 = dma.hbm_to_vmem [thread:$0]  %s2, 8192, %s58, [#allocation6], 256, 256, 16
    $region13: #{tpu_custom_call.1} parent=1 // pred_fallthru
      _
    // Predicated region
    $region14: #{tpu_custom_call.1} parent=1 // pred_check
      _
    $region15: #{tpu_custom_call.1} parent=1 // pred_check_branch
      %65 = sbr.rel (0) target = $region17
    $region16: #{tpu_custom_call.1} parent=1 // pred_region
      %s67 = ssub.s32 32, 32
      %68 = vsyncadd [#allocation9], %s67
      %s70 = sshll.u32 [#allocation8], 4
      %s71 = int_to_ptr.vmem [resolvable:$true] %s70
      %73 = dma.hbm_to_vmem [thread:$0]  %s3, 32, %s71, [#allocation9]
    $region17: #{tpu_custom_call.1} parent=1 // pred_fallthru
      _
    // Predicated region
    $region18: #{tpu_custom_call.1} parent=1 // pred_check
      _
    $region19: #{tpu_custom_call.1} parent=1 // pred_check_branch
      %75 = sbr.rel (0) target = $region21
    $region20: #{tpu_custom_call.1} parent=1 // pred_region
      %s77 = ssub.s32 32, 32
      %78 = vsyncadd [#allocation9], %s77
      %s80 = sshll.u32 [#allocation10], 4
      %s81 = int_to_ptr.vmem [resolvable:$true] %s80
      %83 = dma.hbm_to_vmem [thread:$0]  %s4, 32, %s81, [#allocation9]
    $region21: #{tpu_custom_call.1} parent=1 // pred_fallthru
      _
    // Predicated region
    $region22: #{tpu_custom_call.1} parent=1 // pred_check
      _
    $region23: #{tpu_custom_call.1} parent=1 // pred_check_branch
      %85 = sbr.rel (0) target = $region25
    $region24: #{tpu_custom_call.1} parent=1 // pred_region
      %s87 = ssub.s32 18432, 18432
      %88 = vsyncadd [#allocation12], %s87
      %s89 = sshll.u32 [#allocation11], 4
      %s90 = int_to_ptr.vmem [resolvable:$true] %s89
      %95 = dma.hbm_to_vmem [thread:$0]  %s5, 18432, %s90, [#allocation12], 576, 576, 36
    $region25: #{tpu_custom_call.1} parent=1 // pred_fallthru
      _
    // Predicated region
    $region26: #{tpu_custom_call.1} parent=1 // pred_check
      _
    $region27: #{tpu_custom_call.1} parent=1 // pred_check_branch
      %97 = sbr.rel (0) target = $region29
    $region28: #{tpu_custom_call.1} parent=1 // pred_region
      %s99 = ssub.s32 144, 144
      %100 = vsyncadd [#allocation12], %s99
      %s102 = sshll.u32 [#allocation13], 4
      %s103 = int_to_ptr.vmem [resolvable:$true] %s102
      %105 = dma.hbm_to_vmem [thread:$0]  %s6, 144, %s103, [#allocation12]
    $region29: #{tpu_custom_call.1} parent=1 // pred_fallthru
      _
    // Predicated region
    $region30: #{tpu_custom_call.1} parent=1 // pred_check
      _
    $region31: #{tpu_custom_call.1} parent=1 // pred_check_branch
      %107 = sbr.rel (0) target = $region33
    $region32: #{tpu_custom_call.1} parent=1 // pred_region
      %s109 = ssub.s32 320, 320
      %110 = vsyncadd [#allocation15], %s109
      %s112 = sshll.u32 [#allocation14], 4
      %s113 = int_to_ptr.vmem [resolvable:$true] %s112
      %115 = dma.hbm_to_vmem [thread:$0]  %s7, 320, %s113, [#allocation15]
    $region33: #{tpu_custom_call.1} parent=1 // pred_fallthru
      _
    // Predicated region
    $region34: #{tpu_custom_call.1} parent=1 // pred_check
      _
    $region35: #{tpu_custom_call.1} parent=1 // pred_check_branch
      %117 = sbr.rel (0) target = $region37
    $region36: #{tpu_custom_call.1} parent=1 // pred_region
      %s119 = ssub.s32 320, 320
      %120 = vsyncadd [#allocation15], %s119
      %s122 = sshll.u32 [#allocation16], 4
      %s123 = int_to_ptr.vmem [resolvable:$true] %s122
      %125 = dma.hbm_to_vmem [thread:$0]  %s8, 320, %s123, [#allocation15]
    $region37: #{tpu_custom_call.1} parent=1 // pred_fallthru
      _
    // Predicated region
    $region38: #{tpu_custom_call.1} parent=1 // pred_check
      _
    $region39: #{tpu_custom_call.1} parent=1 // pred_check_branch
      %127 = sbr.rel (0) target = $region41
    $region40: #{tpu_custom_call.1} parent=1 // pred_region
      %s129 = ssub.s32 144, 144
      %130 = vsyncadd [#allocation18], %s129
      %s132 = sshll.u32 [#allocation17], 4
      %s133 = int_to_ptr.vmem [resolvable:$true] %s132
      %135 = dma.hbm_to_vmem [thread:$0]  %s9, 144, %s133, [#allocation18]
    $region41: #{tpu_custom_call.1} parent=1 // pred_fallthru
      _
    // Predicated region
    $region42: #{tpu_custom_call.1} parent=1 // pred_check
      _
    $region43: #{tpu_custom_call.1} parent=1 // pred_check_branch
      %137 = sbr.rel (0) target = $region45
    $region44: #{tpu_custom_call.1} parent=1 // pred_region
      %s139 = ssub.s32 144, 144
      %140 = vsyncadd [#allocation18], %s139
      %s142 = sshll.u32 [#allocation19], 4
      %s143 = int_to_ptr.vmem [resolvable:$true] %s142
      %145 = dma.hbm_to_vmem [thread:$0]  %s10, 144, %s143, [#allocation18]
    $region45: #{tpu_custom_call.1} parent=1 // pred_fallthru
      _
    // Predicated region
    $region46: #{tpu_custom_call.1} parent=1 // pred_check
      _
    $region47: #{tpu_custom_call.1} parent=1 // pred_check_branch
      %147 = sbr.rel (0) target = $region49
    $region48: #{tpu_custom_call.1} parent=1 // pred_region
      %s149 = ssub.s32 40960, 40960
      %150 = vsyncadd [#allocation21], %s149
      %s151 = sshll.u32 [#allocation20], 4
      %s152 = int_to_ptr.vmem [resolvable:$true] %s151
      %157 = dma.hbm_to_vmem [thread:$0]  %s11, 40960, %s152, [#allocation21], 128, 128, 8
    $region49: #{tpu_custom_call.1} parent=1 // pred_fallthru
      _
    // Predicated region
    $region50: #{tpu_custom_call.1} parent=1 // pred_check
      _
    $region51: #{tpu_custom_call.1} parent=1 // pred_check_branch
      %159 = sbr.rel (0) target = $region53
    $region52: #{tpu_custom_call.1} parent=1 // pred_region
      %s161 = ssub.s32 18432, 18432
      %162 = vsyncadd [#allocation21], %s161
      %s163 = sshll.u32 [#allocation22], 4
      %s164 = int_to_ptr.vmem [resolvable:$true] %s163
      %169 = dma.hbm_to_vmem [thread:$0]  %s12, 18432, %s164, [#allocation21], 128, 128, 8
    $region53: #{tpu_custom_call.1} parent=1 // pred_fallthru
      _
    // Predicated region
    $region54: #{tpu_custom_call.1} parent=1 // pred_check
      _
    $region55: #{tpu_custom_call.1} parent=1 // pred_check_branch
      %171 = sbr.rel (0) target = $region57
    $region56: #{tpu_custom_call.1} parent=1 // pred_region
      %s173 = ssub.s32 32, 32
      %174 = vsyncadd [#allocation24], %s173
      %s176 = sshll.u32 [#allocation23], 4
      %s177 = int_to_ptr.vmem [resolvable:$true] %s176
      %179 = dma.hbm_to_vmem [thread:$0]  %s13, 32, %s177, [#allocation24]
    $region57: #{tpu_custom_call.1} parent=1 // pred_fallthru
      _
    // Predicated region
    $region58: #{tpu_custom_call.1} parent=1 // pred_check
      _
    $region59: #{tpu_custom_call.1} parent=1 // pred_check_branch
      %181 = sbr.rel (0) target = $region61
    $region60: #{tpu_custom_call.1} parent=1 // pred_region
      %182 = dma.done [#allocation3], 512
    $region61: #{tpu_custom_call.1} parent=1 // pred_fallthru
      _
    // Predicated region
    $region62: #{tpu_custom_call.1} parent=1 // pred_check
      _
    $region63: #{tpu_custom_call.1} parent=1 // pred_check_branch
      %184 = sbr.rel (0) target = $region65
    $region64: #{tpu_custom_call.1} parent=1 // pred_region
      %185 = dma.done [#allocation6], 2560
    $region65: #{tpu_custom_call.1} parent=1 // pred_fallthru
      _
    // Predicated region
    $region66: #{tpu_custom_call.1} parent=1 // pred_check
      _
    $region67: #{tpu_custom_call.1} parent=1 // pred_check_branch
      %187 = sbr.rel (0) target = $region69
    $region68: #{tpu_custom_call.1} parent=1 // pred_region
      %188 = dma.done [#allocation6], 8192
    $region69: #{tpu_custom_call.1} parent=1 // pred_fallthru
      _
    // Predicated region
    $region70: #{tpu_custom_call.1} parent=1 // pred_check
      _
    $region71: #{tpu_custom_call.1} parent=1 // pred_check_branch
      %190 = sbr.rel (0) target = $region73
    $region72: #{tpu_custom_call.1} parent=1 // pred_region
      %191 = dma.done [#allocation9], 32
    $region73: #{tpu_custom_call.1} parent=1 // pred_fallthru
      _
    // Predicated region
    $region74: #{tpu_custom_call.1} parent=1 // pred_check
      _
    $region75: #{tpu_custom_call.1} parent=1 // pred_check_branch
      %193 = sbr.rel (0) target = $region77
    $region76: #{tpu_custom_call.1} parent=1 // pred_region
      %194 = dma.done [#allocation9], 32
    $region77: #{tpu_custom_call.1} parent=1 // pred_fallthru
      _
    // Predicated region
    $region78: #{tpu_custom_call.1} parent=1 // pred_check
      _
    $region79: #{tpu_custom_call.1} parent=1 // pred_check_branch
      %196 = sbr.rel (0) target = $region81
    $region80: #{tpu_custom_call.1} parent=1 // pred_region
      %197 = dma.done [#allocation12], 18432
    $region81: #{tpu_custom_call.1} parent=1 // pred_fallthru
      _
    // Predicated region
    $region82: #{tpu_custom_call.1} parent=1 // pred_check
      _
    $region83: #{tpu_custom_call.1} parent=1 // pred_check_branch
      %199 = sbr.rel (0) target = $region85
    $region84: #{tpu_custom_call.1} parent=1 // pred_region
      %200 = dma.done [#allocation12], 144
    $region85: #{tpu_custom_call.1} parent=1 // pred_fallthru
      _
    // Predicated region
    $region86: #{tpu_custom_call.1} parent=1 // pred_check
      _
    $region87: #{tpu_custom_call.1} parent=1 // pred_check_branch
      %202 = sbr.rel (0) target = $region89
    $region88: #{tpu_custom_call.1} parent=1 // pred_region
      %203 = dma.done [#allocation15], 320
    $region89: #{tpu_custom_call.1} parent=1 // pred_fallthru
      _
    // Predicated region
    $region90: #{tpu_custom_call.1} parent=1 // pred_check
      _
    $region91: #{tpu_custom_call.1} parent=1 // pred_check_branch
      %205 = sbr.rel (0) target = $region93
    $region92: #{tpu_custom_call.1} parent=1 // pred_region
      %206 = dma.done [#allocation15], 320
    $region93: #{tpu_custom_call.1} parent=1 // pred_fallthru
      _
    // Predicated region
    $region94: #{tpu_custom_call.1} parent=1 // pred_check
      _
    $region95: #{tpu_custom_call.1} parent=1 // pred_check_branch
      %208 = sbr.rel (0) target = $region97
    $region96: #{tpu_custom_call.1} parent=1 // pred_region
      %209 = dma.done [#allocation18], 144
    $region97: #{tpu_custom_call.1} parent=1 // pred_fallthru
      _
    // Predicated region
    $region98: #{tpu_custom_call.1} parent=1 // pred_check
      _
    $region99: #{tpu_custom_call.1} parent=1 // pred_check_branch
      %211 = sbr.rel (0) target = $region101
    $region100: #{tpu_custom_call.1} parent=1 // pred_region
      %212 = dma.done [#allocation18], 144
    $region101: #{tpu_custom_call.1} parent=1 // pred_fallthru
      _
    // Predicated region
    $region102: #{tpu_custom_call.1} parent=1 // pred_check
      _
    $region103: #{tpu_custom_call.1} parent=1 // pred_check_branch
      %214 = sbr.rel (0) target = $region105
    $region104: #{tpu_custom_call.1} parent=1 // pred_region
      %215 = dma.done [#allocation21], 40960
    $region105: #{tpu_custom_call.1} parent=1 // pred_fallthru
      _
    // Predicated region
    $region106: #{tpu_custom_call.1} parent=1 // pred_check
      _
    $region107: #{tpu_custom_call.1} parent=1 // pred_check_branch
      %217 = sbr.rel (0) target = $region109
    $region108: #{tpu_custom_call.1} parent=1 // pred_region
      %218 = dma.done [#allocation21], 18432
    $region109: #{tpu_custom_call.1} parent=1 // pred_fallthru
      _
    // Predicated region
    $region110: #{tpu_custom_call.1} parent=1 // pred_check
      _
    $region111: #{tpu_custom_call.1} parent=1 // pred_check_branch
      %220 = sbr.rel (0) target = $region113
    $region112: #{tpu_custom_call.1} parent=1 // pred_region
      %221 = dma.done [#allocation24], 32
    $region113: #{tpu_custom_call.1} parent=1 // pred_fallthru
      _
    %v223 = vld [vmem:[#allocation2] sm:$0xff]
    %v224 = vld [vmem:[#allocation2 + $0x8] sm:$0xff]
    %v225 = vld [vmem:[#allocation2 + $0x10] sm:$0xff]
    %v226 = vld [vmem:[#allocation2 + $0x18] sm:$0xff]
    %v227 = vld [vmem:[#allocation7] sm:$0xff]
    %v228 = vld [vmem:[#allocation7 + $0x8] sm:$0xff]
    %v229 = vld [vmem:[#allocation7 + $0x10] sm:$0xff]
    %v230 = vld [vmem:[#allocation7 + $0x18] sm:$0xff]
    %v231 = vld [vmem:[#allocation7 + $0x20] sm:$0xff]
    %v232 = vld [vmem:[#allocation7 + $0x28] sm:$0xff]
    %v233 = vld [vmem:[#allocation7 + $0x30] sm:$0xff]
    %v234 = vld [vmem:[#allocation7 + $0x38] sm:$0xff]
    %v235 = vld [vmem:[#allocation7 + $0x40] sm:$0xff]
    %v236 = vld [vmem:[#allocation7 + $0x48] sm:$0xff]
    %v237 = vld [vmem:[#allocation7 + $0x50] sm:$0xff]
    %v238 = vld [vmem:[#allocation7 + $0x58] sm:$0xff]
    %v239 = vld [vmem:[#allocation7 + $0x60] sm:$0xff]
    %v240 = vld [vmem:[#allocation7 + $0x68] sm:$0xff]
    %v241 = vld [vmem:[#allocation7 + $0x70] sm:$0xff]
    %v242 = vld [vmem:[#allocation7 + $0x78] sm:$0xff]
    %v243 = vld [vmem:[#allocation7 + $0x80] sm:$0xff]
    %v244 = vld [vmem:[#allocation7 + $0x88] sm:$0xff]
    %v245 = vld [vmem:[#allocation7 + $0x90] sm:$0xff]
    %v246 = vld [vmem:[#allocation7 + $0x98] sm:$0xff]
    %v247 = vld [vmem:[#allocation7 + $0xa0] sm:$0xff]
    %v248 = vld [vmem:[#allocation7 + $0xa8] sm:$0xff]
    %v249 = vld [vmem:[#allocation7 + $0xb0] sm:$0xff]
    %v250 = vld [vmem:[#allocation7 + $0xb8] sm:$0xff]
    %v251 = vld [vmem:[#allocation7 + $0xc0] sm:$0xff]
    %v252 = vld [vmem:[#allocation7 + $0xc8] sm:$0xff]
    %v253 = vld [vmem:[#allocation7 + $0xd0] sm:$0xff]
    %v254 = vld [vmem:[#allocation7 + $0xd8] sm:$0xff]
    %v255 = vld [vmem:[#allocation7 + $0xe0] sm:$0xff]
    %v256 = vld [vmem:[#allocation7 + $0xe8] sm:$0xff]
    %v257 = vld [vmem:[#allocation7 + $0xf0] sm:$0xff]
    %v258 = vld [vmem:[#allocation7 + $0xf8] sm:$0xff]
    %v259 = vld [vmem:[#allocation7 + $0x100] sm:$0xff]
    %v260 = vld [vmem:[#allocation7 + $0x108] sm:$0xff]
    %v261 = vld [vmem:[#allocation7 + $0x110] sm:$0xff]
    %v262 = vld [vmem:[#allocation7 + $0x118] sm:$0xff]
    %v263 = vld [vmem:[#allocation7 + $0x120] sm:$0xff]
    %v264 = vld [vmem:[#allocation7 + $0x128] sm:$0xff]
    %v265 = vld [vmem:[#allocation7 + $0x130] sm:$0xff]
    %v266 = vld [vmem:[#allocation7 + $0x138] sm:$0xff]
    %v267 = vld [vmem:[#allocation7 + $0x140] sm:$0xff]
    %v268 = vld [vmem:[#allocation7 + $0x148] sm:$0xff]
    %v269 = vld [vmem:[#allocation7 + $0x150] sm:$0xff]
    %v270 = vld [vmem:[#allocation7 + $0x158] sm:$0xff]
    %v271 = vld [vmem:[#allocation7 + $0x160] sm:$0xff]
    %v272 = vld [vmem:[#allocation7 + $0x168] sm:$0xff]
    %v273 = vld [vmem:[#allocation7 + $0x170] sm:$0xff]
    %v274 = vld [vmem:[#allocation7 + $0x178] sm:$0xff]
    %v275 = vld [vmem:[#allocation7 + $0x180] sm:$0xff]
    %v276 = vld [vmem:[#allocation7 + $0x188] sm:$0xff]
    %v277 = vld [vmem:[#allocation7 + $0x190] sm:$0xff]
    %v278 = vld [vmem:[#allocation7 + $0x198] sm:$0xff]
    %v279 = vld [vmem:[#allocation7 + $0x1a0] sm:$0xff]
    %v280 = vld [vmem:[#allocation7 + $0x1a8] sm:$0xff]
    %v281 = vld [vmem:[#allocation7 + $0x1b0] sm:$0xff]
    %v282 = vld [vmem:[#allocation7 + $0x1b8] sm:$0xff]
    %v283 = vld [vmem:[#allocation7 + $0x1c0] sm:$0xff]
    %v284 = vld [vmem:[#allocation7 + $0x1c8] sm:$0xff]
    %v285 = vld [vmem:[#allocation7 + $0x1d0] sm:$0xff]
    %v286 = vld [vmem:[#allocation7 + $0x1d8] sm:$0xff]
    %v287 = vld [vmem:[#allocation7 + $0x1e0] sm:$0xff]
    %v288 = vld [vmem:[#allocation7 + $0x1e8] sm:$0xff]
    %v289 = vld [vmem:[#allocation7 + $0x1f0] sm:$0xff]
    %v290 = vld [vmem:[#allocation7 + $0x1f8] sm:$0xff]
    %291 = vmatprep.subr.mxu0 %v258
    %292 = vmatpush1.msra.mxu0 %v257
    %293 = vmatprep.subr.mxu0 %v256
    %294 = vmatpush1.msra.mxu0 %v255
    %295 = vmatprep.subr.mxu0 %v254
    %296 = vmatpush1.msra.mxu0 %v253
    %297 = vmatprep.subr.mxu0 %v252
    %298 = vmatpush1.msra.mxu0 %v251
    %299 = vmatprep.subr.mxu0 %v250
    %300 = vmatpush1.msra.mxu0 %v249
    %301 = vmatprep.subr.mxu0 %v248
    %302 = vmatpush1.msra.mxu0 %v247
    %303 = vmatprep.subr.mxu0 %v246
    %304 = vmatpush1.msra.mxu0 %v245
    %305 = vmatprep.subr.mxu0 %v244
    %306 = vmatpush1.msra.mxu0 %v243
    %307 = vmatprep.subr.mxu0 %v242
    %308 = vmatpush1.msra.mxu0 %v241
    %309 = vmatprep.subr.mxu0 %v240
    %310 = vmatpush1.msra.mxu0 %v239
    %311 = vmatprep.subr.mxu0 %v238
    %312 = vmatpush1.msra.mxu0 %v237
    %313 = vmatprep.subr.mxu0 %v236
    %314 = vmatpush1.msra.mxu0 %v235
    %315 = vmatprep.subr.mxu0 %v234
    %316 = vmatpush1.msra.mxu0 %v233
    %317 = vmatprep.subr.mxu0 %v232
    %318 = vmatpush1.msra.mxu0 %v231
    %319 = vmatprep.subr.mxu0 %v230
    %320 = vmatpush1.msra.mxu0 %v229
    %321 = vmatprep.subr.mxu0 %v228
    %322 = vmatpush1.msra.mxu0 %v227
    %323 = vmatprep.subr.mxu0 %v290
    %324 = vmatpush2.msra.mxu0 %v289
    %325 = vmatprep.subr.mxu0 %v288
    %326 = vmatpush2.msra.mxu0 %v287
    %327 = vmatprep.subr.mxu0 %v286
    %328 = vmatpush2.msra.mxu0 %v285
    %329 = vmatprep.subr.mxu0 %v284
    %330 = vmatpush2.msra.mxu0 %v283
    %331 = vmatprep.subr.mxu0 %v282
    %332 = vmatpush2.msra.mxu0 %v281
    %333 = vmatprep.subr.mxu0 %v280
    %334 = vmatpush2.msra.mxu0 %v279
    %335 = vmatprep.subr.mxu0 %v278
    %336 = vmatpush2.msra.mxu0 %v277
    %337 = vmatprep.subr.mxu0 %v276
    %338 = vmatpush2.msra.mxu0 %v275
    %339 = vmatprep.subr.mxu0 %v274
    %340 = vmatpush2.msra.mxu0 %v273
    %341 = vmatprep.subr.mxu0 %v272
    %342 = vmatpush2.msra.mxu0 %v271
    %343 = vmatprep.subr.mxu0 %v270
    %344 = vmatpush2.msra.mxu0 %v269
    %345 = vmatprep.subr.mxu0 %v268
    %346 = vmatpush2.msra.mxu0 %v267
    %347 = vmatprep.subr.mxu0 %v266
    %348 = vmatpush2.msra.mxu0 %v265
    %349 = vmatprep.subr.mxu0 %v264
    %350 = vmatpush2.msra.mxu0 %v263
    %351 = vmatprep.subr.mxu0 %v262
    %352 = vmatpush2.msra.mxu0 %v261
    %353 = vmatprep.subr.mxu0 %v260
    %354 = vmatpush2.msra.mxu0 %v259
    %355 = vmatprep.mubr.f32.mxu0 %v224
    %356 = vmatmul.mubr.f32.gmra.mxu0 %v223
    %v357 = vpop.f32.mrf.mxu0
    %v358 = vadd.f32 0.0, %v357
    %v359 = vpop.f32.mrf.mxu0
    %v360 = vadd.f32 0.0, %v359
    %361 = vmatprep.mubr.f32.mxu0 %v226
    %362 = vmatmul.mubr.f32.gmra.mxu0 %v225
    %v363 = vpop.f32.mrf.mxu0
    %v364 = vadd.f32 0.0, %v363
    %v365 = vpop.f32.mrf.mxu0
    %v366 = vadd.f32 0.0, %v365
    %367 = vdwg.mxu0
    %v368 = vmul.f32 %v223, %v223
    %v369 = vmul.f32 %v224, %v224
    %v370 = vmul.f32 %v225, %v225
    %v371 = vmul.f32 %v226, %v226
    %372 = vmatprep.subr.mxu0 %v258
    %373 = vmatpush1.msra.mxu0 %v257
    %374 = vmatprep.subr.mxu0 %v256
    %375 = vmatpush1.msra.mxu0 %v255
    %376 = vmatprep.subr.mxu0 %v254
    %377 = vmatpush1.msra.mxu0 %v253
    %378 = vmatprep.subr.mxu0 %v252
    %379 = vmatpush1.msra.mxu0 %v251
    %380 = vmatprep.subr.mxu0 %v250
    %381 = vmatpush1.msra.mxu0 %v249
    %382 = vmatprep.subr.mxu0 %v248
    %383 = vmatpush1.msra.mxu0 %v247
    %384 = vmatprep.subr.mxu0 %v246
    %385 = vmatpush1.msra.mxu0 %v245
    %386 = vmatprep.subr.mxu0 %v244
    %387 = vmatpush1.msra.mxu0 %v243
    %388 = vmatprep.subr.mxu0 %v242
    %389 = vmatpush1.msra.mxu0 %v241
    %390 = vmatprep.subr.mxu0 %v240
    %391 = vmatpush1.msra.mxu0 %v239
    %392 = vmatprep.subr.mxu0 %v238
    %393 = vmatpush1.msra.mxu0 %v237
    %394 = vmatprep.subr.mxu0 %v236
    %395 = vmatpush1.msra.mxu0 %v235
    %396 = vmatprep.subr.mxu0 %v234
    %397 = vmatpush1.msra.mxu0 %v233
    %398 = vmatprep.subr.mxu0 %v232
    %399 = vmatpush1.msra.mxu0 %v231
    %400 = vmatprep.subr.mxu0 %v230
    %401 = vmatpush1.msra.mxu0 %v229
    %402 = vmatprep.subr.mxu0 %v228
    %403 = vmatpush1.msra.mxu0 %v227
    %404 = vmatprep.subr.mxu0 %v290
    %405 = vmatpush2.msra.mxu0 %v289
    %406 = vmatprep.subr.mxu0 %v288
    %407 = vmatpush2.msra.mxu0 %v287
    %408 = vmatprep.subr.mxu0 %v286
    %409 = vmatpush2.msra.mxu0 %v285
    %410 = vmatprep.subr.mxu0 %v284
    %411 = vmatpush2.msra.mxu0 %v283
    %412 = vmatprep.subr.mxu0 %v282
    %413 = vmatpush2.msra.mxu0 %v281
    %414 = vmatprep.subr.mxu0 %v280
    %415 = vmatpush2.msra.mxu0 %v279
    %416 = vmatprep.subr.mxu0 %v278
    %417 = vmatpush2.msra.mxu0 %v277
    %418 = vmatprep.subr.mxu0 %v276
    %419 = vmatpush2.msra.mxu0 %v275
    %420 = vmatprep.subr.mxu0 %v274
    %421 = vmatpush2.msra.mxu0 %v273
    %422 = vmatprep.subr.mxu0 %v272
    %423 = vmatpush2.msra.mxu0 %v271
    %424 = vmatprep.subr.mxu0 %v270
    %425 = vmatpush2.msra.mxu0 %v269
    %426 = vmatprep.subr.mxu0 %v268
    %427 = vmatpush2.msra.mxu0 %v267
    %428 = vmatprep.subr.mxu0 %v266
    %429 = vmatpush2.msra.mxu0 %v265
    %430 = vmatprep.subr.mxu0 %v264
    %431 = vmatpush2.msra.mxu0 %v263
    %432 = vmatprep.subr.mxu0 %v262
    %433 = vmatpush2.msra.mxu0 %v261
    %434 = vmatprep.subr.mxu0 %v260
    %435 = vmatpush2.msra.mxu0 %v259
    %436 = vmatprep.mubr.f32.mxu0 %v369
    %437 = vmatmul.mubr.f32.gmra.mxu0 %v368
    %v438 = vpop.f32.mrf.mxu0
    %v439 = vadd.f32 0.0, %v438
    %v440 = vpop.f32.mrf.mxu0
    %v441 = vadd.f32 0.0, %v440
    %442 = vmatprep.mubr.f32.mxu0 %v371
    %443 = vmatmul.mubr.f32.gmra.mxu0 %v370
    %v444 = vpop.f32.mrf.mxu0
    %v445 = vadd.f32 0.0, %v444
    %v446 = vpop.f32.mrf.mxu0
    %v447 = vadd.f32 0.0, %v446
    %448 = vdwg.mxu0
    %v449 = vmul.f32 %v358, %v358
    %v450 = vmul.f32 %v360, %v360
    %v451 = vmul.f32 %v364, %v364
    %v452 = vmul.f32 %v366, %v366
    %v453 = vsub.f32 %v439, %v449
    %v454 = vsub.f32 %v441, %v450
    %v455 = vsub.f32 %v445, %v451
    %v456 = vsub.f32 %v447, %v452
    %v457 = vsub.f32 %v223, %v358
    %v458 = vsub.f32 %v224, %v360
    %v459 = vsub.f32 %v225, %v364
    %v460 = vsub.f32 %v226, %v366
    %v461 = vadd.f32 %v453, 1e-05
    %v462 = vadd.f32 %v454, 1e-05
    %v463 = vadd.f32 %v455, 1e-05
    %v464 = vadd.f32 %v456, 1e-05
    %v465 = vrsqrt.pop %v461
    %v466 = vrsqrt.pop %v462
    %v467 = vrsqrt.pop %v463
    %v468 = vrsqrt.pop %v464
    %v469 = vmul.f32 %v457, %v465
    %v470 = vmul.f32 %v458, %v466
    %v471 = vmul.f32 %v459, %v467
    %v472 = vmul.f32 %v460, %v468
    %v473 = vld [vmem:[#allocation8] sm:$0x3]
    %v475 = vlaneseq
    %v476 = vshrl.u32 %v475, 7
    %v477 = vsub.s32 0, %v476
    %v478 = vrot.slane %v473, %v477
    %v479 = vlaneseq
    %v480 = vshrl.u32 %v479, 7
    %v481 = vsub.s32 1, %v480
    %v482 = vrot.slane %v473, %v481
    %v485 = vmul.f32 %v469, %v478
    %v486 = vmul.f32 %v470, %v482
    %v487 = vmul.f32 %v471, %v478
    %v488 = vmul.f32 %v472, %v482
    %v489 = vld [vmem:[#allocation10] sm:$0x3]
    %v491 = vlaneseq
    %v492 = vshrl.u32 %v491, 7
    %v493 = vsub.s32 0, %v492
    %v494 = vrot.slane %v489, %v493
    %v495 = vlaneseq
    %v496 = vshrl.u32 %v495, 7
    %v497 = vsub.s32 1, %v496
    %v498 = vrot.slane %v489, %v497
    %v501 = vadd.f32 %v485, %v494
    %v502 = vadd.f32 %v486, %v498
    %v503 = vadd.f32 %v487, %v494
    %v504 = vadd.f32 %v488, %v498
    %v505 = vpack.c.bf16 %v503, %v501
    %v506 = vpack.c.bf16 %v504, %v502
    %v507 = vld [vmem:[#allocation11] sm:$0xff]
    %v508 = vld [vmem:[#allocation11 + $0x8] sm:$0xff]
    %v509 = vld [vmem:[#allocation11 + $0x10] sm:$0xff]
    %v510 = vld [vmem:[#allocation11 + $0x18] sm:$0xff]
    %v511 = vld [vmem:[#allocation11 + $0x20] sm:$0xf]
    %v512 = vld [vmem:[#allocation11 + $0x24] sm:$0xff]
    %v513 = vld [vmem:[#allocation11 + $0x2c] sm:$0xff]
    %v514 = vld [vmem:[#allocation11 + $0x34] sm:$0xff]
    %v515 = vld [vmem:[#allocation11 + $0x3c] sm:$0xff]
    %v516 = vld [vmem:[#allocation11 + $0x44] sm:$0xf]
    %v517 = vld [vmem:[#allocation11 + $0x48] sm:$0xff]
    %v518 = vld [vmem:[#allocation11 + $0x50] sm:$0xff]
    %v519 = vld [vmem:[#allocation11 + $0x58] sm:$0xff]
    %v520 = vld [vmem:[#allocation11 + $0x60] sm:$0xff]
    %v521 = vld [vmem:[#allocation11 + $0x68] sm:$0xf]
    %v522 = vld [vmem:[#allocation11 + $0x6c] sm:$0xff]
    %v523 = vld [vmem:[#allocation11 + $0x74] sm:$0xff]
    %v524 = vld [vmem:[#allocation11 + $0x7c] sm:$0xff]
    %v525 = vld [vmem:[#allocation11 + $0x84] sm:$0xff]
    %v526 = vld [vmem:[#allocation11 + $0x8c] sm:$0xf]
    %v527 = vld [vmem:[#allocation11 + $0x90] sm:$0xff]
    %v528 = vld [vmem:[#allocation11 + $0x98] sm:$0xff]
    %v529 = vld [vmem:[#allocation11 + $0xa0] sm:$0xff]
    %v530 = vld [vmem:[#allocation11 + $0xa8] sm:$0xff]
    %v531 = vld [vmem:[#allocation11 + $0xb0] sm:$0xf]
    %v532 = vld [vmem:[#allocation11 + $0xb4] sm:$0xff]
    %v533 = vld [vmem:[#allocation11 + $0xbc] sm:$0xff]
    %v534 = vld [vmem:[#allocation11 + $0xc4] sm:$0xff]
    %v535 = vld [vmem:[#allocation11 + $0xcc] sm:$0xff]
    %v536 = vld [vmem:[#allocation11 + $0xd4] sm:$0xf]
    %v537 = vld [vmem:[#allocation11 + $0xd8] sm:$0xff]
    %v538 = vld [vmem:[#allocation11 + $0xe0] sm:$0xff]
    %v539 = vld [vmem:[#allocation11 + $0xe8] sm:$0xff]
    %v540 = vld [vmem:[#allocation11 + $0xf0] sm:$0xff]
    %v541 = vld [vmem:[#allocation11 + $0xf8] sm:$0xf]
    %v542 = vld [vmem:[#allocation11 + $0xfc] sm:$0xff]
    %v543 = vld [vmem:[#allocation11 + $0x104] sm:$0xff]
    %v544 = vld [vmem:[#allocation11 + $0x10c] sm:$0xff]
    %v545 = vld [vmem:[#allocation11 + $0x114] sm:$0xff]
    %v546 = vld [vmem:[#allocation11 + $0x11c] sm:$0xf]
    %v547 = vld [vmem:[#allocation11 + $0x120] sm:$0xff]
    %v548 = vld [vmem:[#allocation11 + $0x128] sm:$0xff]
    %v549 = vld [vmem:[#allocation11 + $0x130] sm:$0xff]
    %v550 = vld [vmem:[#allocation11 + $0x138] sm:$0xff]
    %v551 = vld [vmem:[#allocation11 + $0x140] sm:$0xf]
    %v552 = vld [vmem:[#allocation11 + $0x144] sm:$0xff]
    %v553 = vld [vmem:[#allocation11 + $0x14c] sm:$0xff]
    %v554 = vld [vmem:[#allocation11 + $0x154] sm:$0xff]
    %v555 = vld [vmem:[#allocation11 + $0x15c] sm:$0xff]
    %v556 = vld [vmem:[#allocation11 + $0x164] sm:$0xf]
    %v557 = vld [vmem:[#allocation11 + $0x168] sm:$0xff]
    %v558 = vld [vmem:[#allocation11 + $0x170] sm:$0xff]
    %v559 = vld [vmem:[#allocation11 + $0x178] sm:$0xff]
    %v560 = vld [vmem:[#allocation11 + $0x180] sm:$0xff]
    %v561 = vld [vmem:[#allocation11 + $0x188] sm:$0xf]
    %v562 = vld [vmem:[#allocation11 + $0x18c] sm:$0xff]
    %v563 = vld [vmem:[#allocation11 + $0x194] sm:$0xff]
    %v564 = vld [vmem:[#allocation11 + $0x19c] sm:$0xff]
    %v565 = vld [vmem:[#allocation11 + $0x1a4] sm:$0xff]
    %v566 = vld [vmem:[#allocation11 + $0x1ac] sm:$0xf]
    %v567 = vld [vmem:[#allocation11 + $0x1b0] sm:$0xff]
    %v568 = vld [vmem:[#allocation11 + $0x1b8] sm:$0xff]
    %v569 = vld [vmem:[#allocation11 + $0x1c0] sm:$0xff]
    %v570 = vld [vmem:[#allocation11 + $0x1c8] sm:$0xff]
    %v571 = vld [vmem:[#allocation11 + $0x1d0] sm:$0xf]
    %v572 = vld [vmem:[#allocation11 + $0x1d4] sm:$0xff]
    %v573 = vld [vmem:[#allocation11 + $0x1dc] sm:$0xff]
    %v574 = vld [vmem:[#allocation11 + $0x1e4] sm:$0xff]
    %v575 = vld [vmem:[#allocation11 + $0x1ec] sm:$0xff]
    %v576 = vld [vmem:[#allocation11 + $0x1f4] sm:$0xf]
    %v577 = vld [vmem:[#allocation11 + $0x1f8] sm:$0xff]
    %v578 = vld [vmem:[#allocation11 + $0x200] sm:$0xff]
    %v579 = vld [vmem:[#allocation11 + $0x208] sm:$0xff]
    %v580 = vld [vmem:[#allocation11 + $0x210] sm:$0xff]
    %v581 = vld [vmem:[#allocation11 + $0x218] sm:$0xf]
    %v582 = vld [vmem:[#allocation11 + $0x21c] sm:$0xff]
    %v583 = vld [vmem:[#allocation11 + $0x224] sm:$0xff]
    %v584 = vld [vmem:[#allocation11 + $0x22c] sm:$0xff]
    %v585 = vld [vmem:[#allocation11 + $0x234] sm:$0xff]
    %v586 = vld [vmem:[#allocation11 + $0x23c] sm:$0xf]
    %v587 = vld [vmem:[#allocation11 + $0x240] sm:$0xff]
    %v588 = vld [vmem:[#allocation11 + $0x248] sm:$0xff]
    %v589 = vld [vmem:[#allocation11 + $0x250] sm:$0xff]
    %v590 = vld [vmem:[#allocation11 + $0x258] sm:$0xff]
    %v591 = vld [vmem:[#allocation11 + $0x260] sm:$0xf]
    %v592 = vld [vmem:[#allocation11 + $0x264] sm:$0xff]
    %v593 = vld [vmem:[#allocation11 + $0x26c] sm:$0xff]
    %v594 = vld [vmem:[#allocation11 + $0x274] sm:$0xff]
    %v595 = vld [vmem:[#allocation11 + $0x27c] sm:$0xff]
    %v596 = vld [vmem:[#allocation11 + $0x284] sm:$0xf]
    %v597 = vld [vmem:[#allocation11 + $0x288] sm:$0xff]
    %v598 = vld [vmem:[#allocation11 + $0x290] sm:$0xff]
    %v599 = vld [vmem:[#allocation11 + $0x298] sm:$0xff]
    %v600 = vld [vmem:[#allocation11 + $0x2a0] sm:$0xff]
    %v601 = vld [vmem:[#allocation11 + $0x2a8] sm:$0xf]
    %v602 = vld [vmem:[#allocation11 + $0x2ac] sm:$0xff]
    %v603 = vld [vmem:[#allocation11 + $0x2b4] sm:$0xff]
    %v604 = vld [vmem:[#allocation11 + $0x2bc] sm:$0xff]
    %v605 = vld [vmem:[#allocation11 + $0x2c4] sm:$0xff]
    %v606 = vld [vmem:[#allocation11 + $0x2cc] sm:$0xf]
    %v607 = vld [vmem:[#allocation11 + $0x2d0] sm:$0xff]
    %v608 = vld [vmem:[#allocation11 + $0x2d8] sm:$0xff]
    %v609 = vld [vmem:[#allocation11 + $0x2e0] sm:$0xff]
    %v610 = vld [vmem:[#allocation11 + $0x2e8] sm:$0xff]
    %v611 = vld [vmem:[#allocation11 + $0x2f0] sm:$0xf]
    %v612 = vld [vmem:[#allocation11 + $0x2f4] sm:$0xff]
    %v613 = vld [vmem:[#allocation11 + $0x2fc] sm:$0xff]
    %v614 = vld [vmem:[#allocation11 + $0x304] sm:$0xff]
    %v615 = vld [vmem:[#allocation11 + $0x30c] sm:$0xff]
    %v616 = vld [vmem:[#allocation11 + $0x314] sm:$0xf]
    %v617 = vld [vmem:[#allocation11 + $0x318] sm:$0xff]
    %v618 = vld [vmem:[#allocation11 + $0x320] sm:$0xff]
    %v619 = vld [vmem:[#allocation11 + $0x328] sm:$0xff]
    %v620 = vld [vmem:[#allocation11 + $0x330] sm:$0xff]
    %v621 = vld [vmem:[#allocation11 + $0x338] sm:$0xf]
    %v622 = vld [vmem:[#allocation11 + $0x33c] sm:$0xff]
    %v623 = vld [vmem:[#allocation11 + $0x344] sm:$0xff]
    %v624 = vld [vmem:[#allocation11 + $0x34c] sm:$0xff]
    %v625 = vld [vmem:[#allocation11 + $0x354] sm:$0xff]
    %v626 = vld [vmem:[#allocation11 + $0x35c] sm:$0xf]
    %v627 = vld [vmem:[#allocation11 + $0x360] sm:$0xff]
    %v628 = vld [vmem:[#allocation11 + $0x368] sm:$0xff]
    %v629 = vld [vmem:[#allocation11 + $0x370] sm:$0xff]
    %v630 = vld [vmem:[#allocation11 + $0x378] sm:$0xff]
    %v631 = vld [vmem:[#allocation11 + $0x380] sm:$0xf]
    %v632 = vld [vmem:[#allocation11 + $0x384] sm:$0xff]
    %v633 = vld [vmem:[#allocation11 + $0x38c] sm:$0xff]
    %v634 = vld [vmem:[#allocation11 + $0x394] sm:$0xff]
    %v635 = vld [vmem:[#allocation11 + $0x39c] sm:$0xff]
    %v636 = vld [vmem:[#allocation11 + $0x3a4] sm:$0xf]
    %v637 = vld [vmem:[#allocation11 + $0x3a8] sm:$0xff]
    %v638 = vld [vmem:[#allocation11 + $0x3b0] sm:$0xff]
    %v639 = vld [vmem:[#allocation11 + $0x3b8] sm:$0xff]
    %v640 = vld [vmem:[#allocation11 + $0x3c0] sm:$0xff]
    %v641 = vld [vmem:[#allocation11 + $0x3c8] sm:$0xf]
    %v642 = vld [vmem:[#allocation11 + $0x3cc] sm:$0xff]
    %v643 = vld [vmem:[#allocation11 + $0x3d4] sm:$0xff]
    %v644 = vld [vmem:[#allocation11 + $0x3dc] sm:$0xff]
    %v645 = vld [vmem:[#allocation11 + $0x3e4] sm:$0xff]
    %v646 = vld [vmem:[#allocation11 + $0x3ec] sm:$0xf]
    %v647 = vld [vmem:[#allocation11 + $0x3f0] sm:$0xff]
    %v648 = vld [vmem:[#allocation11 + $0x3f8] sm:$0xff]
    %v649 = vld [vmem:[#allocation11 + $0x400] sm:$0xff]
    %v650 = vld [vmem:[#allocation11 + $0x408] sm:$0xff]
    %v651 = vld [vmem:[#allocation11 + $0x410] sm:$0xf]
    %v652 = vld [vmem:[#allocation11 + $0x414] sm:$0xff]
    %v653 = vld [vmem:[#allocation11 + $0x41c] sm:$0xff]
    %v654 = vld [vmem:[#allocation11 + $0x424] sm:$0xff]
    %v655 = vld [vmem:[#allocation11 + $0x42c] sm:$0xff]
    %v656 = vld [vmem:[#allocation11 + $0x434] sm:$0xf]
    %v657 = vld [vmem:[#allocation11 + $0x438] sm:$0xff]
    %v658 = vld [vmem:[#allocation11 + $0x440] sm:$0xff]
    %v659 = vld [vmem:[#allocation11 + $0x448] sm:$0xff]
    %v660 = vld [vmem:[#allocation11 + $0x450] sm:$0xff]
    %v661 = vld [vmem:[#allocation11 + $0x458] sm:$0xf]
    %v662 = vld [vmem:[#allocation11 + $0x45c] sm:$0xff]
    %v663 = vld [vmem:[#allocation11 + $0x464] sm:$0xff]
    %v664 = vld [vmem:[#allocation11 + $0x46c] sm:$0xff]
    %v665 = vld [vmem:[#allocation11 + $0x474] sm:$0xff]
    %v666 = vld [vmem:[#allocation11 + $0x47c] sm:$0xf]
    %v667 = vld [vmem:[#allocation13] sm:$0xff]
    %v668 = vld [vmem:[#allocation13 + $0x8] sm:$0x1]
    %v671 = vlaneseq
    %v672 = vshrl.u32 %v671, 7
    %v673 = vsub.s32 0, %v672
    %v674 = vrot.slane %v667, %v673
    %v675 = vlaneseq
    %v676 = vshrl.u32 %v675, 7
    %v677 = vsub.s32 1, %v676
    %v678 = vrot.slane %v667, %v677
    %v679 = vlaneseq
    %v680 = vshrl.u32 %v679, 7
    %v681 = vsub.s32 2, %v680
    %v682 = vrot.slane %v667, %v681
    %v683 = vlaneseq
    %v684 = vshrl.u32 %v683, 7
    %v685 = vsub.s32 3, %v684
    %v686 = vrot.slane %v667, %v685
    %v687 = vlaneseq
    %v688 = vshrl.u32 %v687, 7
    %v689 = vsub.s32 4, %v688
    %v690 = vrot.slane %v667, %v689
    %v691 = vlaneseq
    %v692 = vshrl.u32 %v691, 7
    %v693 = vsub.s32 5, %v692
    %v694 = vrot.slane %v667, %v693
    %v695 = vlaneseq
    %v696 = vshrl.u32 %v695, 7
    %v697 = vsub.s32 6, %v696
    %v698 = vrot.slane %v667, %v697
    %v699 = vlaneseq
    %v700 = vshrl.u32 %v699, 7
    %v701 = vsub.s32 7, %v700
    %v702 = vrot.slane %v667, %v701
    %v703 = vlaneseq
    %v704 = vshrl.u32 %v703, 7
    %v705 = vsub.s32 0, %v704
    %v706 = vrot.slane %v668, %v705
    %v876 = vunpack.c.l.b16 %v507
    %v877 = vunpack.c.h.b16 %v507
    %v878 = vunpack.c.l.b16 %v508
    %v879 = vunpack.c.h.b16 %v508
    %v880 = vunpack.c.l.b16 %v509
    %v881 = vunpack.c.h.b16 %v509
    %v882 = vunpack.c.l.b16 %v510
    %v883 = vunpack.c.h.b16 %v510
    %v884 = vunpack.c.l.b16 %v511
    %v885 = vunpack.c.l.b16 %v512
    %v886 = vunpack.c.h.b16 %v512
    %v887 = vunpack.c.l.b16 %v513
    %v888 = vunpack.c.h.b16 %v513
    %v889 = vunpack.c.l.b16 %v514
    %v890 = vunpack.c.h.b16 %v514
    %v891 = vunpack.c.l.b16 %v515
    %v892 = vunpack.c.h.b16 %v515
    %v893 = vunpack.c.l.b16 %v516
    %v894 = vunpack.c.l.b16 %v517
    %v895 = vunpack.c.h.b16 %v517
    %v896 = vunpack.c.l.b16 %v518
    %v897 = vunpack.c.h.b16 %v518
    %v898 = vunpack.c.l.b16 %v519
    %v899 = vunpack.c.h.b16 %v519
    %v900 = vunpack.c.l.b16 %v520
    %v901 = vunpack.c.h.b16 %v520
    %v902 = vunpack.c.l.b16 %v521
    %v903 = vunpack.c.l.b16 %v522
    %v904 = vunpack.c.h.b16 %v522
    %v905 = vunpack.c.l.b16 %v523
    %v906 = vunpack.c.h.b16 %v523
    %v907 = vunpack.c.l.b16 %v524
    %v908 = vunpack.c.h.b16 %v524
    %v909 = vunpack.c.l.b16 %v525
    %v910 = vunpack.c.h.b16 %v525
    %v911 = vunpack.c.l.b16 %v526
    %v912 = vunpack.c.l.b16 %v527
    %v913 = vunpack.c.h.b16 %v527
    %v914 = vunpack.c.l.b16 %v528
    %v915 = vunpack.c.h.b16 %v528
    %v916 = vunpack.c.l.b16 %v529
    %v917 = vunpack.c.h.b16 %v529
    %v918 = vunpack.c.l.b16 %v530
    %v919 = vunpack.c.h.b16 %v530
    %v920 = vunpack.c.l.b16 %v531
    %v921 = vunpack.c.l.b16 %v532
    %v922 = vunpack.c.h.b16 %v532
    %v923 = vunpack.c.l.b16 %v533
    %v924 = vunpack.c.h.b16 %v533
    %v925 = vunpack.c.l.b16 %v534
    %v926 = vunpack.c.h.b16 %v534
    %v927 = vunpack.c.l.b16 %v535
    %v928 = vunpack.c.h.b16 %v535
    %v929 = vunpack.c.l.b16 %v536
    %v930 = vunpack.c.l.b16 %v537
    %v931 = vunpack.c.h.b16 %v537
    %v932 = vunpack.c.l.b16 %v538
    %v933 = vunpack.c.h.b16 %v538
    %v934 = vunpack.c.l.b16 %v539
    %v935 = vunpack.c.h.b16 %v539
    %v936 = vunpack.c.l.b16 %v540
    %v937 = vunpack.c.h.b16 %v540
    %v938 = vunpack.c.l.b16 %v541
    %v939 = vunpack.c.l.b16 %v542
    %v940 = vunpack.c.h.b16 %v542
    %v941 = vunpack.c.l.b16 %v543
    %v942 = vunpack.c.h.b16 %v543
    %v943 = vunpack.c.l.b16 %v544
    %v944 = vunpack.c.h.b16 %v544
    %v945 = vunpack.c.l.b16 %v545
    %v946 = vunpack.c.h.b16 %v545
    %v947 = vunpack.c.l.b16 %v546
    %v948 = vunpack.c.l.b16 %v547
    %v949 = vunpack.c.h.b16 %v547
    %v950 = vunpack.c.l.b16 %v548
    %v951 = vunpack.c.h.b16 %v548
    %v952 = vunpack.c.l.b16 %v549
    %v953 = vunpack.c.h.b16 %v549
    %v954 = vunpack.c.l.b16 %v550
    %v955 = vunpack.c.h.b16 %v550
    %v956 = vunpack.c.l.b16 %v551
    %v957 = vunpack.c.l.b16 %v552
    %v958 = vunpack.c.h.b16 %v552
    %v959 = vunpack.c.l.b16 %v553
    %v960 = vunpack.c.h.b16 %v553
    %v961 = vunpack.c.l.b16 %v554
    %v962 = vunpack.c.h.b16 %v554
    %v963 = vunpack.c.l.b16 %v555
    %v964 = vunpack.c.h.b16 %v555
    %v965 = vunpack.c.l.b16 %v556
    %v966 = vunpack.c.l.b16 %v557
    %v967 = vunpack.c.h.b16 %v557
    %v968 = vunpack.c.l.b16 %v558
    %v969 = vunpack.c.h.b16 %v558
    %v970 = vunpack.c.l.b16 %v559
    %v971 = vunpack.c.h.b16 %v559
    %v972 = vunpack.c.l.b16 %v560
    %v973 = vunpack.c.h.b16 %v560
    %v974 = vunpack.c.l.b16 %v561
    %v975 = vunpack.c.l.b16 %v562
    %v976 = vunpack.c.h.b16 %v562
    %v977 = vunpack.c.l.b16 %v563
    %v978 = vunpack.c.h.b16 %v563
    %v979 = vunpack.c.l.b16 %v564
    %v980 = vunpack.c.h.b16 %v564
    %v981 = vunpack.c.l.b16 %v565
    %v982 = vunpack.c.h.b16 %v565
    %v983 = vunpack.c.l.b16 %v566
    %v984 = vunpack.c.l.b16 %v567
    %v985 = vunpack.c.h.b16 %v567
    %v986 = vunpack.c.l.b16 %v568
    %v987 = vunpack.c.h.b16 %v568
    %v988 = vunpack.c.l.b16 %v569
    %v989 = vunpack.c.h.b16 %v569
    %v990 = vunpack.c.l.b16 %v570
    %v991 = vunpack.c.h.b16 %v570
    %v992 = vunpack.c.l.b16 %v571
    %v993 = vunpack.c.l.b16 %v572
    %v994 = vunpack.c.h.b16 %v572
    %v995 = vunpack.c.l.b16 %v573
    %v996 = vunpack.c.h.b16 %v573
    %v997 = vunpack.c.l.b16 %v574
    %v998 = vunpack.c.h.b16 %v574
    %v999 = vunpack.c.l.b16 %v575
    %v1000 = vunpack.c.h.b16 %v575
    %v1001 = vunpack.c.l.b16 %v576
    %v1002 = vunpack.c.l.b16 %v577
    %v1003 = vunpack.c.h.b16 %v577
    %v1004 = vunpack.c.l.b16 %v578
    %v1005 = vunpack.c.h.b16 %v578
    %v1006 = vunpack.c.l.b16 %v579
    %v1007 = vunpack.c.h.b16 %v579
    %v1008 = vunpack.c.l.b16 %v580
    %v1009 = vunpack.c.h.b16 %v580
    %v1010 = vunpack.c.l.b16 %v581
    %v1011 = vunpack.c.l.b16 %v582
    %v1012 = vunpack.c.h.b16 %v582
    %v1013 = vunpack.c.l.b16 %v583
    %v1014 = vunpack.c.h.b16 %v583
    %v1015 = vunpack.c.l.b16 %v584
    %v1016 = vunpack.c.h.b16 %v584
    %v1017 = vunpack.c.l.b16 %v585
    %v1018 = vunpack.c.h.b16 %v585
    %v1019 = vunpack.c.l.b16 %v586
    %v1020 = vunpack.c.l.b16 %v587
    %v1021 = vunpack.c.h.b16 %v587
    %v1022 = vunpack.c.l.b16 %v588
    %v1023 = vunpack.c.h.b16 %v588
    %v1024 = vunpack.c.l.b16 %v589
    %v1025 = vunpack.c.h.b16 %v589
    %v1026 = vunpack.c.l.b16 %v590
    %v1027 = vunpack.c.h.b16 %v590
    %v1028 = vunpack.c.l.b16 %v591
    %v1029 = vunpack.c.l.b16 %v592
    %v1030 = vunpack.c.h.b16 %v592
    %v1031 = vunpack.c.l.b16 %v593
    %v1032 = vunpack.c.h.b16 %v593
    %v1033 = vunpack.c.l.b16 %v594
    %v1034 = vunpack.c.h.b16 %v594
    %v1035 = vunpack.c.l.b16 %v595
    %v1036 = vunpack.c.h.b16 %v595
    %v1037 = vunpack.c.l.b16 %v596
    %v1038 = vunpack.c.l.b16 %v597
    %v1039 = vunpack.c.h.b16 %v597
    %v1040 = vunpack.c.l.b16 %v598
    %v1041 = vunpack.c.h.b16 %v598
    %v1042 = vunpack.c.l.b16 %v599
    %v1043 = vunpack.c.h.b16 %v599
    %v1044 = vunpack.c.l.b16 %v600
    %v1045 = vunpack.c.h.b16 %v600
    %v1046 = vunpack.c.l.b16 %v601
    %v1047 = vunpack.c.l.b16 %v602
    %v1048 = vunpack.c.h.b16 %v602
    %v1049 = vunpack.c.l.b16 %v603
    %v1050 = vunpack.c.h.b16 %v603
    %v1051 = vunpack.c.l.b16 %v604
    %v1052 = vunpack.c.h.b16 %v604
    %v1053 = vunpack.c.l.b16 %v605
    %v1054 = vunpack.c.h.b16 %v605
    %v1055 = vunpack.c.l.b16 %v606
    %v1056 = vunpack.c.l.b16 %v607
    %v1057 = vunpack.c.h.b16 %v607
    %v1058 = vunpack.c.l.b16 %v608
    %v1059 = vunpack.c.h.b16 %v608
    %v1060 = vunpack.c.l.b16 %v609
    %v1061 = vunpack.c.h.b16 %v609
    %v1062 = vunpack.c.l.b16 %v610
    %v1063 = vunpack.c.h.b16 %v610
    %v1064 = vunpack.c.l.b16 %v611
    %v1065 = vunpack.c.l.b16 %v612
    %v1066 = vunpack.c.h.b16 %v612
    %v1067 = vunpack.c.l.b16 %v613
    %v1068 = vunpack.c.h.b16 %v613
    %v1069 = vunpack.c.l.b16 %v614
    %v1070 = vunpack.c.h.b16 %v614
    %v1071 = vunpack.c.l.b16 %v615
    %v1072 = vunpack.c.h.b16 %v615
    %v1073 = vunpack.c.l.b16 %v616
    %v1074 = vunpack.c.l.b16 %v617
    %v1075 = vunpack.c.h.b16 %v617
    %v1076 = vunpack.c.l.b16 %v618
    %v1077 = vunpack.c.h.b16 %v618
    %v1078 = vunpack.c.l.b16 %v619
    %v1079 = vunpack.c.h.b16 %v619
    %v1080 = vunpack.c.l.b16 %v620
    %v1081 = vunpack.c.h.b16 %v620
    %v1082 = vunpack.c.l.b16 %v621
    %v1083 = vunpack.c.l.b16 %v622
    %v1084 = vunpack.c.h.b16 %v622
    %v1085 = vunpack.c.l.b16 %v623
    %v1086 = vunpack.c.h.b16 %v623
    %v1087 = vunpack.c.l.b16 %v624
    %v1088 = vunpack.c.h.b16 %v624
    %v1089 = vunpack.c.l.b16 %v625
    %v1090 = vunpack.c.h.b16 %v625
    %v1091 = vunpack.c.l.b16 %v626
    %v1092 = vunpack.c.l.b16 %v627
    %v1093 = vunpack.c.h.b16 %v627
    %v1094 = vunpack.c.l.b16 %v628
    %v1095 = vunpack.c.h.b16 %v628
    %v1096 = vunpack.c.l.b16 %v629
    %v1097 = vunpack.c.h.b16 %v629
    %v1098 = vunpack.c.l.b16 %v630
    %v1099 = vunpack.c.h.b16 %v630
    %v1100 = vunpack.c.l.b16 %v631
    %v1101 = vunpack.c.l.b16 %v632
    %v1102 = vunpack.c.h.b16 %v632
    %v1103 = vunpack.c.l.b16 %v633
    %v1104 = vunpack.c.h.b16 %v633
    %v1105 = vunpack.c.l.b16 %v634
    %v1106 = vunpack.c.h.b16 %v634
    %v1107 = vunpack.c.l.b16 %v635
    %v1108 = vunpack.c.h.b16 %v635
    %v1109 = vunpack.c.l.b16 %v636
    %v1110 = vunpack.c.l.b16 %v637
    %v1111 = vunpack.c.h.b16 %v637
    %v1112 = vunpack.c.l.b16 %v638
    %v1113 = vunpack.c.h.b16 %v638
    %v1114 = vunpack.c.l.b16 %v639
    %v1115 = vunpack.c.h.b16 %v639
    %v1116 = vunpack.c.l.b16 %v640
    %v1117 = vunpack.c.h.b16 %v640
    %v1118 = vunpack.c.l.b16 %v641
    %v1119 = vunpack.c.l.b16 %v642
    %v1120 = vunpack.c.h.b16 %v642
    %v1121 = vunpack.c.l.b16 %v643
    %v1122 = vunpack.c.h.b16 %v643
    %v1123 = vunpack.c.l.b16 %v644
    %v1124 = vunpack.c.h.b16 %v644
    %v1125 = vunpack.c.l.b16 %v645
    %v1126 = vunpack.c.h.b16 %v645
    %v1127 = vunpack.c.l.b16 %v646
    %v1128 = vunpack.c.l.b16 %v647
    %v1129 = vunpack.c.h.b16 %v647
    %v1130 = vunpack.c.l.b16 %v648
    %v1131 = vunpack.c.h.b16 %v648
    %v1132 = vunpack.c.l.b16 %v649
    %v1133 = vunpack.c.h.b16 %v649
    %v1134 = vunpack.c.l.b16 %v650
    %v1135 = vunpack.c.h.b16 %v650
    %v1136 = vunpack.c.l.b16 %v651
    %v1137 = vunpack.c.l.b16 %v652
    %v1138 = vunpack.c.h.b16 %v652
    %v1139 = vunpack.c.l.b16 %v653
    %v1140 = vunpack.c.h.b16 %v653
    %v1141 = vunpack.c.l.b16 %v654
    %v1142 = vunpack.c.h.b16 %v654
    %v1143 = vunpack.c.l.b16 %v655
    %v1144 = vunpack.c.h.b16 %v655
    %v1145 = vunpack.c.l.b16 %v656
    %v1146 = vunpack.c.l.b16 %v657
    %v1147 = vunpack.c.h.b16 %v657
    %v1148 = vunpack.c.l.b16 %v658
    %v1149 = vunpack.c.h.b16 %v658
    %v1150 = vunpack.c.l.b16 %v659
    %v1151 = vunpack.c.h.b16 %v659
    %v1152 = vunpack.c.l.b16 %v660
    %v1153 = vunpack.c.h.b16 %v660
    %v1154 = vunpack.c.l.b16 %v661
    %v1155 = vunpack.c.l.b16 %v662
    %v1156 = vunpack.c.h.b16 %v662
    %v1157 = vunpack.c.l.b16 %v663
    %v1158 = vunpack.c.h.b16 %v663
    %v1159 = vunpack.c.l.b16 %v664
    %v1160 = vunpack.c.h.b16 %v664
    %v1161 = vunpack.c.l.b16 %v665
    %v1162 = vunpack.c.h.b16 %v665
    %v1163 = vunpack.c.l.b16 %v666
    %v1164 = vpack.c.b16 %v885, %v876
    %v1165 = vpack.c.b16 %v886, %v877
    %v1166 = vpack.c.b16 %v887, %v878
    %v1167 = vpack.c.b16 %v888, %v879
    %v1168 = vpack.c.b16 %v889, %v880
    %v1169 = vpack.c.b16 %v890, %v881
    %v1170 = vpack.c.b16 %v891, %v882
    %v1171 = vpack.c.b16 %v892, %v883
    %v1172 = vpack.c.b16 %v893, %v884
    %v1173 = vpack.c.b16 %v903, %v894
    %v1174 = vpack.c.b16 %v904, %v895
    %v1175 = vpack.c.b16 %v905, %v896
    %v1176 = vpack.c.b16 %v906, %v897
    %v1177 = vpack.c.b16 %v907, %v898
    %v1178 = vpack.c.b16 %v908, %v899
    %v1179 = vpack.c.b16 %v909, %v900
    %v1180 = vpack.c.b16 %v910, %v901
    %v1181 = vpack.c.b16 %v911, %v902
    %v1182 = vpack.c.b16 %v921, %v912
    %v1183 = vpack.c.b16 %v922, %v913
    %v1184 = vpack.c.b16 %v923, %v914
    %v1185 = vpack.c.b16 %v924, %v915
    %v1186 = vpack.c.b16 %v925, %v916
    %v1187 = vpack.c.b16 %v926, %v917
    %v1188 = vpack.c.b16 %v927, %v918
    %v1189 = vpack.c.b16 %v928, %v919
    %v1190 = vpack.c.b16 %v929, %v920
    %v1191 = vpack.c.b16 %v939, %v930
    %v1192 = vpack.c.b16 %v940, %v931
    %v1193 = vpack.c.b16 %v941, %v932
    %v1194 = vpack.c.b16 %v942, %v933
    %v1195 = vpack.c.b16 %v943, %v934
    %v1196 = vpack.c.b16 %v944, %v935
    %v1197 = vpack.c.b16 %v945, %v936
    %v1198 = vpack.c.b16 %v946, %v937
    %v1199 = vpack.c.b16 %v947, %v938
    %v1200 = vpack.c.b16 %v957, %v948
    %v1201 = vpack.c.b16 %v958, %v949
    %v1202 = vpack.c.b16 %v959, %v950
    %v1203 = vpack.c.b16 %v960, %v951
    %v1204 = vpack.c.b16 %v961, %v952
    %v1205 = vpack.c.b16 %v962, %v953
    %v1206 = vpack.c.b16 %v963, %v954
    %v1207 = vpack.c.b16 %v964, %v955
    %v1208 = vpack.c.b16 %v965, %v956
    %v1209 = vpack.c.b16 %v975, %v966
    %v1210 = vpack.c.b16 %v976, %v967
    %v1211 = vpack.c.b16 %v977, %v968
    %v1212 = vpack.c.b16 %v978, %v969
    %v1213 = vpack.c.b16 %v979, %v970
    %v1214 = vpack.c.b16 %v980, %v971
    %v1215 = vpack.c.b16 %v981, %v972
    %v1216 = vpack.c.b16 %v982, %v973
    %v1217 = vpack.c.b16 %v983, %v974
    %v1218 = vpack.c.b16 %v993, %v984
    %v1219 = vpack.c.b16 %v994, %v985
    %v1220 = vpack.c.b16 %v995, %v986
    %v1221 = vpack.c.b16 %v996, %v987
    %v1222 = vpack.c.b16 %v997, %v988
    %v1223 = vpack.c.b16 %v998, %v989
    %v1224 = vpack.c.b16 %v999, %v990
    %v1225 = vpack.c.b16 %v1000, %v991
    %v1226 = vpack.c.b16 %v1001, %v992
    %v1227 = vpack.c.b16 %v1011, %v1002
    %v1228 = vpack.c.b16 %v1012, %v1003
    %v1229 = vpack.c.b16 %v1013, %v1004
    %v1230 = vpack.c.b16 %v1014, %v1005
    %v1231 = vpack.c.b16 %v1015, %v1006
    %v1232 = vpack.c.b16 %v1016, %v1007
    %v1233 = vpack.c.b16 %v1017, %v1008
    %v1234 = vpack.c.b16 %v1018, %v1009
    %v1235 = vpack.c.b16 %v1019, %v1010
    %v1236 = vpack.c.b16 %v1029, %v1020
    %v1237 = vpack.c.b16 %v1030, %v1021
    %v1238 = vpack.c.b16 %v1031, %v1022
    %v1239 = vpack.c.b16 %v1032, %v1023
    %v1240 = vpack.c.b16 %v1033, %v1024
    %v1241 = vpack.c.b16 %v1034, %v1025
    %v1242 = vpack.c.b16 %v1035, %v1026
    %v1243 = vpack.c.b16 %v1036, %v1027
    %v1244 = vpack.c.b16 %v1037, %v1028
    %v1245 = vpack.c.b16 %v1047, %v1038
    %v1246 = vpack.c.b16 %v1048, %v1039
    %v1247 = vpack.c.b16 %v1049, %v1040
    %v1248 = vpack.c.b16 %v1050, %v1041
    %v1249 = vpack.c.b16 %v1051, %v1042
    %v1250 = vpack.c.b16 %v1052, %v1043
    %v1251 = vpack.c.b16 %v1053, %v1044
    %v1252 = vpack.c.b16 %v1054, %v1045
    %v1253 = vpack.c.b16 %v1055, %v1046
    %v1254 = vpack.c.b16 %v1065, %v1056
    %v1255 = vpack.c.b16 %v1066, %v1057
    %v1256 = vpack.c.b16 %v1067, %v1058
    %v1257 = vpack.c.b16 %v1068, %v1059
    %v1258 = vpack.c.b16 %v1069, %v1060
    %v1259 = vpack.c.b16 %v1070, %v1061
    %v1260 = vpack.c.b16 %v1071, %v1062
    %v1261 = vpack.c.b16 %v1072, %v1063
    %v1262 = vpack.c.b16 %v1073, %v1064
    %v1263 = vpack.c.b16 %v1083, %v1074
    %v1264 = vpack.c.b16 %v1084, %v1075
    %v1265 = vpack.c.b16 %v1085, %v1076
    %v1266 = vpack.c.b16 %v1086, %v1077
    %v1267 = vpack.c.b16 %v1087, %v1078
    %v1268 = vpack.c.b16 %v1088, %v1079
    %v1269 = vpack.c.b16 %v1089, %v1080
    %v1270 = vpack.c.b16 %v1090, %v1081
    %v1271 = vpack.c.b16 %v1091, %v1082
    %v1272 = vpack.c.b16 %v1101, %v1092
    %v1273 = vpack.c.b16 %v1102, %v1093
    %v1274 = vpack.c.b16 %v1103, %v1094
    %v1275 = vpack.c.b16 %v1104, %v1095
    %v1276 = vpack.c.b16 %v1105, %v1096
    %v1277 = vpack.c.b16 %v1106, %v1097
    %v1278 = vpack.c.b16 %v1107, %v1098
    %v1279 = vpack.c.b16 %v1108, %v1099
    %v1280 = vpack.c.b16 %v1109, %v1100
    %v1281 = vpack.c.b16 %v1119, %v1110
    %v1282 = vpack.c.b16 %v1120, %v1111
    %v1283 = vpack.c.b16 %v1121, %v1112
    %v1284 = vpack.c.b16 %v1122, %v1113
    %v1285 = vpack.c.b16 %v1123, %v1114
    %v1286 = vpack.c.b16 %v1124, %v1115
    %v1287 = vpack.c.b16 %v1125, %v1116
    %v1288 = vpack.c.b16 %v1126, %v1117
    %v1289 = vpack.c.b16 %v1127, %v1118
    %v1290 = vpack.c.b16 %v1137, %v1128
    %v1291 = vpack.c.b16 %v1138, %v1129
    %v1292 = vpack.c.b16 %v1139, %v1130
    %v1293 = vpack.c.b16 %v1140, %v1131
    %v1294 = vpack.c.b16 %v1141, %v1132
    %v1295 = vpack.c.b16 %v1142, %v1133
    %v1296 = vpack.c.b16 %v1143, %v1134
    %v1297 = vpack.c.b16 %v1144, %v1135
    %v1298 = vpack.c.b16 %v1145, %v1136
    %v1299 = vpack.c.b16 %v1155, %v1146
    %v1300 = vpack.c.b16 %v1156, %v1147
    %v1301 = vpack.c.b16 %v1157, %v1148
    %v1302 = vpack.c.b16 %v1158, %v1149
    %v1303 = vpack.c.b16 %v1159, %v1150
    %v1304 = vpack.c.b16 %v1160, %v1151
    %v1305 = vpack.c.b16 %v1161, %v1152
    %v1306 = vpack.c.b16 %v1162, %v1153
    %v1307 = vpack.c.b16 %v1163, %v1154
    %1452 = vmatprep.subr.bf16.mxu0 %v1228
    %1453 = vmatpush1.bf16.msra.mxu0 %v1227
    %1454 = vmatprep.subr.bf16.mxu0 %v1219
    %1455 = vmatpush1.bf16.msra.mxu0 %v1218
    %1456 = vmatprep.subr.bf16.mxu0 %v1210
    %1457 = vmatpush1.bf16.msra.mxu0 %v1209
    %1458 = vmatprep.subr.bf16.mxu0 %v1201
    %1459 = vmatpush1.bf16.msra.mxu0 %v1200
    %1460 = vmatprep.subr.bf16.mxu0 %v1192
    %1461 = vmatpush1.bf16.msra.mxu0 %v1191
    %1462 = vmatprep.subr.bf16.mxu0 %v1183
    %1463 = vmatpush1.bf16.msra.mxu0 %v1182
    %1464 = vmatprep.subr.bf16.mxu0 %v1174
    %1465 = vmatpush1.bf16.msra.mxu0 %v1173
    %1466 = vmatprep.subr.bf16.mxu0 %v1165
    %1467 = vmatpush1.bf16.msra.mxu0 %v1164
    %1468 = vmatprep.subr.bf16.mxu0 %v1300
    %1469 = vmatpush2.bf16.msra.mxu0 %v1299
    %1470 = vmatprep.subr.bf16.mxu0 %v1291
    %1471 = vmatpush2.bf16.msra.mxu0 %v1290
    %1472 = vmatprep.subr.bf16.mxu0 %v1282
    %1473 = vmatpush2.bf16.msra.mxu0 %v1281
    %1474 = vmatprep.subr.bf16.mxu0 %v1273
    %1475 = vmatpush2.bf16.msra.mxu0 %v1272
    %1476 = vmatprep.subr.bf16.mxu0 %v1264
    %1477 = vmatpush2.bf16.msra.mxu0 %v1263
    %1478 = vmatprep.subr.bf16.mxu0 %v1255
    %1479 = vmatpush2.bf16.msra.mxu0 %v1254
    %1480 = vmatprep.subr.bf16.mxu0 %v1246
    %1481 = vmatpush2.bf16.msra.mxu0 %v1245
    %1482 = vmatprep.subr.bf16.mxu0 %v1237
    %1483 = vmatpush2.bf16.msra.mxu0 %v1236
    %1484 = vmatprep.mubr.bf16.mxu0 %v506
    %1485 = vmatmul.mubr.bf16.gmra.mxu0 %v505
    %v1486 = vpop.f32.mrf.mxu0
    %v1487 = vadd.f32 %v674, %v1486
    %v1488 = vpop.f32.mrf.mxu0
    %v1489 = vadd.f32 %v678, %v1488
    %v1490 = vpop.f32.mrf.mxu0
    %v1491 = vadd.f32 %v674, %v1490
    %v1492 = vpop.f32.mrf.mxu0
    %v1493 = vadd.f32 %v678, %v1492
    %1494 = vdwg.mxu0
    %1495 = vmatprep.subr.bf16.mxu0 %v1230
    %1496 = vmatpush1.bf16.msra.mxu0 %v1229
    %1497 = vmatprep.subr.bf16.mxu0 %v1221
    %1498 = vmatpush1.bf16.msra.mxu0 %v1220
    %1499 = vmatprep.subr.bf16.mxu0 %v1212
    %1500 = vmatpush1.bf16.msra.mxu0 %v1211
    %1501 = vmatprep.subr.bf16.mxu0 %v1203
    %1502 = vmatpush1.bf16.msra.mxu0 %v1202
    %1503 = vmatprep.subr.bf16.mxu0 %v1194
    %1504 = vmatpush1.bf16.msra.mxu0 %v1193
    %1505 = vmatprep.subr.bf16.mxu0 %v1185
    %1506 = vmatpush1.bf16.msra.mxu0 %v1184
    %1507 = vmatprep.subr.bf16.mxu0 %v1176
    %1508 = vmatpush1.bf16.msra.mxu0 %v1175
    %1509 = vmatprep.subr.bf16.mxu0 %v1167
    %1510 = vmatpush1.bf16.msra.mxu0 %v1166
    %1511 = vmatprep.subr.bf16.mxu0 %v1302
    %1512 = vmatpush2.bf16.msra.mxu0 %v1301
    %1513 = vmatprep.subr.bf16.mxu0 %v1293
    %1514 = vmatpush2.bf16.msra.mxu0 %v1292
    %1515 = vmatprep.subr.bf16.mxu0 %v1284
    %1516 = vmatpush2.bf16.msra.mxu0 %v1283
    %1517 = vmatprep.subr.bf16.mxu0 %v1275
    %1518 = vmatpush2.bf16.msra.mxu0 %v1274
    %1519 = vmatprep.subr.bf16.mxu0 %v1266
    %1520 = vmatpush2.bf16.msra.mxu0 %v1265
    %1521 = vmatprep.subr.bf16.mxu0 %v1257
    %1522 = vmatpush2.bf16.msra.mxu0 %v1256
    %1523 = vmatprep.subr.bf16.mxu0 %v1248
    %1524 = vmatpush2.bf16.msra.mxu0 %v1247
    %1525 = vmatprep.subr.bf16.mxu0 %v1239
    %1526 = vmatpush2.bf16.msra.mxu0 %v1238
    %1527 = vmatprep.mubr.bf16.mxu0 %v506
    %1528 = vmatmul.mubr.bf16.gmra.mxu0 %v505
    %v1529 = vpop.f32.mrf.mxu0
    %v1530 = vadd.f32 %v682, %v1529
    %v1531 = vpop.f32.mrf.mxu0
    %v1532 = vadd.f32 %v686, %v1531
    %v1533 = vpop.f32.mrf.mxu0
    %v1534 = vadd.f32 %v682, %v1533
    %v1535 = vpop.f32.mrf.mxu0
    %v1536 = vadd.f32 %v686, %v1535
    %1537 = vdwg.mxu0
    %1538 = vmatprep.subr.bf16.mxu0 %v1232
    %1539 = vmatpush1.bf16.msra.mxu0 %v1231
    %1540 = vmatprep.subr.bf16.mxu0 %v1223
    %1541 = vmatpush1.bf16.msra.mxu0 %v1222
    %1542 = vmatprep.subr.bf16.mxu0 %v1214
    %1543 = vmatpush1.bf16.msra.mxu0 %v1213
    %1544 = vmatprep.subr.bf16.mxu0 %v1205
    %1545 = vmatpush1.bf16.msra.mxu0 %v1204
    %1546 = vmatprep.subr.bf16.mxu0 %v1196
    %1547 = vmatpush1.bf16.msra.mxu0 %v1195
    %1548 = vmatprep.subr.bf16.mxu0 %v1187
    %1549 = vmatpush1.bf16.msra.mxu0 %v1186
    %1550 = vmatprep.subr.bf16.mxu0 %v1178
    %1551 = vmatpush1.bf16.msra.mxu0 %v1177
    %1552 = vmatprep.subr.bf16.mxu0 %v1169
    %1553 = vmatpush1.bf16.msra.mxu0 %v1168
    %1554 = vmatprep.subr.bf16.mxu0 %v1304
    %1555 = vmatpush2.bf16.msra.mxu0 %v1303
    %1556 = vmatprep.subr.bf16.mxu0 %v1295
    %1557 = vmatpush2.bf16.msra.mxu0 %v1294
    %1558 = vmatprep.subr.bf16.mxu0 %v1286
    %1559 = vmatpush2.bf16.msra.mxu0 %v1285
    %1560 = vmatprep.subr.bf16.mxu0 %v1277
    %1561 = vmatpush2.bf16.msra.mxu0 %v1276
    %1562 = vmatprep.subr.bf16.mxu0 %v1268
    %1563 = vmatpush2.bf16.msra.mxu0 %v1267
    %1564 = vmatprep.subr.bf16.mxu0 %v1259
    %1565 = vmatpush2.bf16.msra.mxu0 %v1258
    %1566 = vmatprep.subr.bf16.mxu0 %v1250
    %1567 = vmatpush2.bf16.msra.mxu0 %v1249
    %1568 = vmatprep.subr.bf16.mxu0 %v1241
    %1569 = vmatpush2.bf16.msra.mxu0 %v1240
    %1570 = vmatprep.mubr.bf16.mxu0 %v506
    %1571 = vmatmul.mubr.bf16.gmra.mxu0 %v505
    %v1572 = vpop.f32.mrf.mxu0
    %v1573 = vadd.f32 %v690, %v1572
    %v1574 = vpop.f32.mrf.mxu0
    %v1575 = vadd.f32 %v694, %v1574
    %v1576 = vpop.f32.mrf.mxu0
    %v1577 = vadd.f32 %v690, %v1576
    %v1578 = vpop.f32.mrf.mxu0
    %v1579 = vadd.f32 %v694, %v1578
    %1580 = vdwg.mxu0
    %1581 = vmatprep.subr.bf16.mxu0 %v1234
    %1582 = vmatpush1.bf16.msra.mxu0 %v1233
    %1583 = vmatprep.subr.bf16.mxu0 %v1225
    %1584 = vmatpush1.bf16.msra.mxu0 %v1224
    %1585 = vmatprep.subr.bf16.mxu0 %v1216
    %1586 = vmatpush1.bf16.msra.mxu0 %v1215
    %1587 = vmatprep.subr.bf16.mxu0 %v1207
    %1588 = vmatpush1.bf16.msra.mxu0 %v1206
    %1589 = vmatprep.subr.bf16.mxu0 %v1198
    %1590 = vmatpush1.bf16.msra.mxu0 %v1197
    %1591 = vmatprep.subr.bf16.mxu0 %v1189
    %1592 = vmatpush1.bf16.msra.mxu0 %v1188
    %1593 = vmatprep.subr.bf16.mxu0 %v1180
    %1594 = vmatpush1.bf16.msra.mxu0 %v1179
    %1595 = vmatprep.subr.bf16.mxu0 %v1171
    %1596 = vmatpush1.bf16.msra.mxu0 %v1170
    %1597 = vmatprep.subr.bf16.mxu0 %v1306
    %1598 = vmatpush2.bf16.msra.mxu0 %v1305
    %1599 = vmatprep.subr.bf16.mxu0 %v1297
    %1600 = vmatpush2.bf16.msra.mxu0 %v1296
    %1601 = vmatprep.subr.bf16.mxu0 %v1288
    %1602 = vmatpush2.bf16.msra.mxu0 %v1287
    %1603 = vmatprep.subr.bf16.mxu0 %v1279
    %1604 = vmatpush2.bf16.msra.mxu0 %v1278
    %1605 = vmatprep.subr.bf16.mxu0 %v1270
    %1606 = vmatpush2.bf16.msra.mxu0 %v1269
    %1607 = vmatprep.subr.bf16.mxu0 %v1261
    %1608 = vmatpush2.bf16.msra.mxu0 %v1260
    %1609 = vmatprep.subr.bf16.mxu0 %v1252
    %1610 = vmatpush2.bf16.msra.mxu0 %v1251
    %1611 = vmatprep.subr.bf16.mxu0 %v1243
    %1612 = vmatpush2.bf16.msra.mxu0 %v1242
    %1613 = vmatprep.mubr.bf16.mxu0 %v506
    %1614 = vmatmul.mubr.bf16.gmra.mxu0 %v505
    %v1615 = vpop.f32.mrf.mxu0
    %v1616 = vadd.f32 %v698, %v1615
    %v1617 = vpop.f32.mrf.mxu0
    %v1618 = vadd.f32 %v702, %v1617
    %v1619 = vpop.f32.mrf.mxu0
    %v1620 = vadd.f32 %v698, %v1619
    %v1621 = vpop.f32.mrf.mxu0
    %v1622 = vadd.f32 %v702, %v1621
    %1623 = vdwg.mxu0
    %1624 = vmatprep.subr.bf16.mxu0 0
    %1625 = vmatpush1.bf16.msra.mxu0 %v1235
    %1626 = vmatprep.subr.bf16.mxu0 0
    %1627 = vmatpush1.bf16.msra.mxu0 %v1226
    %1628 = vmatprep.subr.bf16.mxu0 0
    %1629 = vmatpush1.bf16.msra.mxu0 %v1217
    %1630 = vmatprep.subr.bf16.mxu0 0
    %1631 = vmatpush1.bf16.msra.mxu0 %v1208
    %1632 = vmatprep.subr.bf16.mxu0 0
    %1633 = vmatpush1.bf16.msra.mxu0 %v1199
    %1634 = vmatprep.subr.bf16.mxu0 0
    %1635 = vmatpush1.bf16.msra.mxu0 %v1190
    %1636 = vmatprep.subr.bf16.mxu0 0
    %1637 = vmatpush1.bf16.msra.mxu0 %v1181
    %1638 = vmatprep.subr.bf16.mxu0 0
    %1639 = vmatpush1.bf16.msra.mxu0 %v1172
    %1640 = vmatprep.subr.bf16.mxu0 0
    %1641 = vmatpush2.bf16.msra.mxu0 %v1307
    %1642 = vmatprep.subr.bf16.mxu0 0
    %1643 = vmatpush2.bf16.msra.mxu0 %v1298
    %1644 = vmatprep.subr.bf16.mxu0 0
    %1645 = vmatpush2.bf16.msra.mxu0 %v1289
    %1646 = vmatprep.subr.bf16.mxu0 0
    %1647 = vmatpush2.bf16.msra.mxu0 %v1280
    %1648 = vmatprep.subr.bf16.mxu0 0
    %1649 = vmatpush2.bf16.msra.mxu0 %v1271
    %1650 = vmatprep.subr.bf16.mxu0 0
    %1651 = vmatpush2.bf16.msra.mxu0 %v1262
    %1652 = vmatprep.subr.bf16.mxu0 0
    %1653 = vmatpush2.bf16.msra.mxu0 %v1253
    %1654 = vmatprep.subr.bf16.mxu0 0
    %1655 = vmatpush2.bf16.msra.mxu0 %v1244
    %1656 = vmatprep.mubr.bf16.mxu0 %v506
    %1657 = vmatmul.mubr.bf16.gmra.mxu0 %v505
    %v1658 = vpop.f32.mrf.mxu0
    %v1659 = vadd.f32 %v706, %v1658
    %v1660 = vpop.f32.mrf.mxu0
    %v1661 = vpop.f32.mrf.mxu0
    %v1662 = vadd.f32 %v706, %v1661
    %v1663 = vpop.f32.mrf.mxu0
    %1664 = vdwg.mxu0
    %v1665 = vmax.f32 %v1487, 0.0
    %v1666 = vmax.f32 %v1489, 0.0
    %v1667 = vmax.f32 %v1530, 0.0
    %v1668 = vmax.f32 %v1532, 0.0
    %v1669 = vmax.f32 %v1573, 0.0
    %v1670 = vmax.f32 %v1575, 0.0
    %v1671 = vmax.f32 %v1616, 0.0
    %v1672 = vmax.f32 %v1618, 0.0
    %v1673 = vmax.f32 %v1659, 0.0
    %v1674 = vmax.f32 %v1491, 0.0
    %v1675 = vmax.f32 %v1493, 0.0
    %v1676 = vmax.f32 %v1534, 0.0
    %v1677 = vmax.f32 %v1536, 0.0
    %v1678 = vmax.f32 %v1577, 0.0
    %v1679 = vmax.f32 %v1579, 0.0
    %v1680 = vmax.f32 %v1620, 0.0
    %v1681 = vmax.f32 %v1622, 0.0
    %v1682 = vmax.f32 %v1662, 0.0
    %v1683 = vld [vmem:[#allocation5] sm:$0xff]
    %v1684 = vld [vmem:[#allocation5 + $0x8] sm:$0xff]
    %v1685 = vld [vmem:[#allocation5 + $0x10] sm:$0xff]
    %v1686 = vld [vmem:[#allocation5 + $0x18] sm:$0xff]
    %v1687 = vld [vmem:[#allocation5 + $0x20] sm:$0xff]
    %v1688 = vld [vmem:[#allocation5 + $0x28] sm:$0xff]
    %v1689 = vld [vmem:[#allocation5 + $0x30] sm:$0xff]
    %v1690 = vld [vmem:[#allocation5 + $0x38] sm:$0xff]
    %v1691 = vld [vmem:[#allocation5 + $0x40] sm:$0xff]
    %v1692 = vld [vmem:[#allocation5 + $0x48] sm:$0xff]
    %v1693 = vld [vmem:[#allocation5 + $0x50] sm:$0xff]
    %v1694 = vld [vmem:[#allocation5 + $0x58] sm:$0xff]
    %v1695 = vld [vmem:[#allocation5 + $0x60] sm:$0xff]
    %v1696 = vld [vmem:[#allocation5 + $0x68] sm:$0xff]
    %v1697 = vld [vmem:[#allocation5 + $0x70] sm:$0xff]
    %v1698 = vld [vmem:[#allocation5 + $0x78] sm:$0xff]
    %v1699 = vld [vmem:[#allocation5 + $0x80] sm:$0xff]
    %v1700 = vld [vmem:[#allocation5 + $0x88] sm:$0xff]
    %v1701 = vld [vmem:[#allocation5 + $0x90] sm:$0xff]
    %v1702 = vld [vmem:[#allocation5 + $0x98] sm:$0xff]
    %v1703 = vunpack.c.l.bf16 %v1683
    %v1704 = vunpack.c.h.bf16 %v1683
    %v1705 = vunpack.c.l.bf16 %v1684
    %v1706 = vunpack.c.h.bf16 %v1684
    %v1707 = vunpack.c.l.bf16 %v1685
    %v1708 = vunpack.c.h.bf16 %v1685
    %v1709 = vunpack.c.l.bf16 %v1686
    %v1710 = vunpack.c.h.bf16 %v1686
    %v1711 = vunpack.c.l.bf16 %v1687
    %v1712 = vunpack.c.h.bf16 %v1687
    %v1713 = vunpack.c.l.bf16 %v1688
    %v1714 = vunpack.c.h.bf16 %v1688
    %v1715 = vunpack.c.l.bf16 %v1689
    %v1716 = vunpack.c.h.bf16 %v1689
    %v1717 = vunpack.c.l.bf16 %v1690
    %v1718 = vunpack.c.h.bf16 %v1690
    %v1719 = vunpack.c.l.bf16 %v1691
    %v1720 = vunpack.c.h.bf16 %v1691
    %v1721 = vunpack.c.l.bf16 %v1692
    %v1722 = vunpack.c.h.bf16 %v1692
    %v1723 = vunpack.c.l.bf16 %v1693
    %v1724 = vunpack.c.h.bf16 %v1693
    %v1725 = vunpack.c.l.bf16 %v1694
    %v1726 = vunpack.c.h.bf16 %v1694
    %v1727 = vunpack.c.l.bf16 %v1695
    %v1728 = vunpack.c.h.bf16 %v1695
    %v1729 = vunpack.c.l.bf16 %v1696
    %v1730 = vunpack.c.h.bf16 %v1696
    %v1731 = vunpack.c.l.bf16 %v1697
    %v1732 = vunpack.c.h.bf16 %v1697
    %v1733 = vunpack.c.l.bf16 %v1698
    %v1734 = vunpack.c.h.bf16 %v1698
    %v1735 = vunpack.c.l.bf16 %v1699
    %v1736 = vunpack.c.h.bf16 %v1699
    %v1737 = vunpack.c.l.bf16 %v1700
    %v1738 = vunpack.c.h.bf16 %v1700
    %v1739 = vunpack.c.l.bf16 %v1701
    %v1740 = vunpack.c.h.bf16 %v1701
    %v1741 = vunpack.c.l.bf16 %v1702
    %v1742 = vunpack.c.h.bf16 %v1702
    %v1743 = vadd.f32 %v1703, %v1704
    %v1744 = vadd.f32 %v1743, %v1705
    %v1745 = vadd.f32 %v1744, %v1706
    %v1746 = vadd.f32 %v1745, %v1707
    %v1747 = vadd.f32 %v1746, %v1708
    %v1748 = vadd.f32 %v1747, %v1709
    %v1749 = vadd.f32 %v1748, %v1710
    %v1750 = vadd.f32 %v1749, %v1711
    %v1751 = vadd.f32 %v1750, %v1712
    %v1752 = vadd.f32 %v1751, %v1713
    %v1753 = vadd.f32 %v1752, %v1714
    %v1754 = vadd.f32 %v1753, %v1715
    %v1755 = vadd.f32 %v1754, %v1716
    %v1756 = vadd.f32 %v1755, %v1717
    %v1757 = vadd.f32 %v1756, %v1718
    %v1758 = vadd.f32 %v1757, %v1719
    %v1759 = vadd.f32 %v1758, %v1720
    %v1760 = vadd.f32 %v1759, %v1721
    %v1761 = vadd.f32 %v1760, %v1722
    %1762 = vadd.xlane.f32.xlu0 %v1761
    %v1763 = vpop.xlane.xlu0 %1762
    %v1764 = vadd.f32 %v1723, %v1724
    %v1765 = vadd.f32 %v1764, %v1725
    %v1766 = vadd.f32 %v1765, %v1726
    %v1767 = vadd.f32 %v1766, %v1727
    %v1768 = vadd.f32 %v1767, %v1728
    %v1769 = vadd.f32 %v1768, %v1729
    %v1770 = vadd.f32 %v1769, %v1730
    %v1771 = vadd.f32 %v1770, %v1731
    %v1772 = vadd.f32 %v1771, %v1732
    %v1773 = vadd.f32 %v1772, %v1733
    %v1774 = vadd.f32 %v1773, %v1734
    %v1775 = vadd.f32 %v1774, %v1735
    %v1776 = vadd.f32 %v1775, %v1736
    %v1777 = vadd.f32 %v1776, %v1737
    %v1778 = vadd.f32 %v1777, %v1738
    %v1779 = vadd.f32 %v1778, %v1739
    %v1780 = vadd.f32 %v1779, %v1740
    %v1781 = vadd.f32 %v1780, %v1741
    %v1782 = vadd.f32 %v1781, %v1742
    %1783 = vadd.xlane.f32.xlu0 %v1782
    %v1784 = vpop.xlane.xlu0 %1783
    %v1785 = vadd.f32 %v1665, %v1666
    %v1786 = vadd.f32 %v1785, %v1667
    %v1787 = vadd.f32 %v1786, %v1668
    %v1788 = vadd.f32 %v1787, %v1669
    %v1789 = vadd.f32 %v1788, %v1670
    %v1790 = vadd.f32 %v1789, %v1671
    %v1791 = vadd.f32 %v1790, %v1672
    %v1792 = vadd.f32 %v1791, %v1673
    %1793 = vadd.xlane.f32.xlu0 %v1792
    %v1794 = vpop.xlane.xlu0 %1793
    %v1795 = vadd.f32 %v1674, %v1675
    %v1796 = vadd.f32 %v1795, %v1676
    %v1797 = vadd.f32 %v1796, %v1677
    %v1798 = vadd.f32 %v1797, %v1678
    %v1799 = vadd.f32 %v1798, %v1679
    %v1800 = vadd.f32 %v1799, %v1680
    %v1801 = vadd.f32 %v1800, %v1681
    %v1802 = vadd.f32 %v1801, %v1682
    %1803 = vadd.xlane.f32.xlu0 %v1802
    %v1804 = vpop.xlane.xlu0 %1803
    %v1805 = vadd.f32 %v1763, %v1794
    %v1806 = vadd.f32 %v1784, %v1804
    %v1807 = vmul.f32 %v1805, 0.00028392958
    %v1808 = vmul.f32 %v1806, 0.00028392958
    %v1809 = vmul.f32 %v1703, %v1703
    %v1810 = vmul.f32 %v1704, %v1704
    %v1811 = vmul.f32 %v1705, %v1705
    %v1812 = vmul.f32 %v1706, %v1706
    %v1813 = vmul.f32 %v1707, %v1707
    %v1814 = vmul.f32 %v1708, %v1708
    %v1815 = vmul.f32 %v1709, %v1709
    %v1816 = vmul.f32 %v1710, %v1710
    %v1817 = vmul.f32 %v1711, %v1711
    %v1818 = vmul.f32 %v1712, %v1712
    %v1819 = vmul.f32 %v1713, %v1713
    %v1820 = vmul.f32 %v1714, %v1714
    %v1821 = vmul.f32 %v1715, %v1715
    %v1822 = vmul.f32 %v1716, %v1716
    %v1823 = vmul.f32 %v1717, %v1717
    %v1824 = vmul.f32 %v1718, %v1718
    %v1825 = vmul.f32 %v1719, %v1719
    %v1826 = vmul.f32 %v1720, %v1720
    %v1827 = vmul.f32 %v1721, %v1721
    %v1828 = vmul.f32 %v1722, %v1722
    %v1829 = vmul.f32 %v1723, %v1723
    %v1830 = vmul.f32 %v1724, %v1724
    %v1831 = vmul.f32 %v1725, %v1725
    %v1832 = vmul.f32 %v1726, %v1726
    %v1833 = vmul.f32 %v1727, %v1727
    %v1834 = vmul.f32 %v1728, %v1728
    %v1835 = vmul.f32 %v1729, %v1729
    %v1836 = vmul.f32 %v1730, %v1730
    %v1837 = vmul.f32 %v1731, %v1731
    %v1838 = vmul.f32 %v1732, %v1732
    %v1839 = vmul.f32 %v1733, %v1733
    %v1840 = vmul.f32 %v1734, %v1734
    %v1841 = vmul.f32 %v1735, %v1735
    %v1842 = vmul.f32 %v1736, %v1736
    %v1843 = vmul.f32 %v1737, %v1737
    %v1844 = vmul.f32 %v1738, %v1738
    %v1845 = vmul.f32 %v1739, %v1739
    %v1846 = vmul.f32 %v1740, %v1740
    %v1847 = vmul.f32 %v1741, %v1741
    %v1848 = vmul.f32 %v1742, %v1742
    %v1849 = vadd.f32 %v1809, %v1810
    %v1850 = vadd.f32 %v1849, %v1811
    %v1851 = vadd.f32 %v1850, %v1812
    %v1852 = vadd.f32 %v1851, %v1813
    %v1853 = vadd.f32 %v1852, %v1814
    %v1854 = vadd.f32 %v1853, %v1815
    %v1855 = vadd.f32 %v1854, %v1816
    %v1856 = vadd.f32 %v1855, %v1817
    %v1857 = vadd.f32 %v1856, %v1818
    %v1858 = vadd.f32 %v1857, %v1819
    %v1859 = vadd.f32 %v1858, %v1820
    %v1860 = vadd.f32 %v1859, %v1821
    %v1861 = vadd.f32 %v1860, %v1822
    %v1862 = vadd.f32 %v1861, %v1823
    %v1863 = vadd.f32 %v1862, %v1824
    %v1864 = vadd.f32 %v1863, %v1825
    %v1865 = vadd.f32 %v1864, %v1826
    %v1866 = vadd.f32 %v1865, %v1827
    %v1867 = vadd.f32 %v1866, %v1828
    %1868 = vadd.xlane.f32.xlu0 %v1867
    %v1869 = vpop.xlane.xlu0 %1868
    %v1870 = vadd.f32 %v1829, %v1830
    %v1871 = vadd.f32 %v1870, %v1831
    %v1872 = vadd.f32 %v1871, %v1832
    %v1873 = vadd.f32 %v1872, %v1833
    %v1874 = vadd.f32 %v1873, %v1834
    %v1875 = vadd.f32 %v1874, %v1835
    %v1876 = vadd.f32 %v1875, %v1836
    %v1877 = vadd.f32 %v1876, %v1837
    %v1878 = vadd.f32 %v1877, %v1838
    %v1879 = vadd.f32 %v1878, %v1839
    %v1880 = vadd.f32 %v1879, %v1840
    %v1881 = vadd.f32 %v1880, %v1841
    %v1882 = vadd.f32 %v1881, %v1842
    %v1883 = vadd.f32 %v1882, %v1843
    %v1884 = vadd.f32 %v1883, %v1844
    %v1885 = vadd.f32 %v1884, %v1845
    %v1886 = vadd.f32 %v1885, %v1846
    %v1887 = vadd.f32 %v1886, %v1847
    %v1888 = vadd.f32 %v1887, %v1848
    %1889 = vadd.xlane.f32.xlu0 %v1888
    %v1890 = vpop.xlane.xlu0 %1889
    %v1891 = vmul.f32 %v1665, %v1665
    %v1892 = vmul.f32 %v1666, %v1666
    %v1893 = vmul.f32 %v1667, %v1667
    %v1894 = vmul.f32 %v1668, %v1668
    %v1895 = vmul.f32 %v1669, %v1669
    %v1896 = vmul.f32 %v1670, %v1670
    %v1897 = vmul.f32 %v1671, %v1671
    %v1898 = vmul.f32 %v1672, %v1672
    %v1899 = vmul.f32 %v1673, %v1673
    %v1900 = vmul.f32 %v1674, %v1674
    %v1901 = vmul.f32 %v1675, %v1675
    %v1902 = vmul.f32 %v1676, %v1676
    %v1903 = vmul.f32 %v1677, %v1677
    %v1904 = vmul.f32 %v1678, %v1678
    %v1905 = vmul.f32 %v1679, %v1679
    %v1906 = vmul.f32 %v1680, %v1680
    %v1907 = vmul.f32 %v1681, %v1681
    %v1908 = vmul.f32 %v1682, %v1682
    %v1909 = vadd.f32 %v1891, %v1892
    %v1910 = vadd.f32 %v1909, %v1893
    %v1911 = vadd.f32 %v1910, %v1894
    %v1912 = vadd.f32 %v1911, %v1895
    %v1913 = vadd.f32 %v1912, %v1896
    %v1914 = vadd.f32 %v1913, %v1897
    %v1915 = vadd.f32 %v1914, %v1898
    %v1916 = vadd.f32 %v1915, %v1899
    %1917 = vadd.xlane.f32.xlu0 %v1916
    %v1918 = vpop.xlane.xlu0 %1917
    %v1919 = vadd.f32 %v1900, %v1901
    %v1920 = vadd.f32 %v1919, %v1902
    %v1921 = vadd.f32 %v1920, %v1903
    %v1922 = vadd.f32 %v1921, %v1904
    %v1923 = vadd.f32 %v1922, %v1905
    %v1924 = vadd.f32 %v1923, %v1906
    %v1925 = vadd.f32 %v1924, %v1907
    %v1926 = vadd.f32 %v1925, %v1908
    %1927 = vadd.xlane.f32.xlu0 %v1926
    %v1928 = vpop.xlane.xlu0 %1927
    %v1929 = vadd.f32 %v1869, %v1918
    %v1930 = vadd.f32 %v1890, %v1928
    %v1931 = vmul.f32 %v1929, 0.00028392958
    %v1932 = vmul.f32 %v1930, 0.00028392958
    %v1933 = vmul.f32 %v1807, %v1807
    %v1934 = vmul.f32 %v1808, %v1808
    %v1935 = vsub.f32 %v1931, %v1933
    %v1936 = vsub.f32 %v1932, %v1934
    %v1937 = vadd.f32 %v1935, 1e-05
    %v1938 = vadd.f32 %v1936, 1e-05
    %v1939 = vrsqrt.pop %v1937
    %v1940 = vrsqrt.pop %v1938
    %v1941 = vsub.f32 %v1703, %v1807
    %v1942 = vsub.f32 %v1704, %v1807
    %v1943 = vsub.f32 %v1705, %v1807
    %v1944 = vsub.f32 %v1706, %v1807
    %v1945 = vsub.f32 %v1707, %v1807
    %v1946 = vsub.f32 %v1708, %v1807
    %v1947 = vsub.f32 %v1709, %v1807
    %v1948 = vsub.f32 %v1710, %v1807
    %v1949 = vsub.f32 %v1711, %v1807
    %v1950 = vsub.f32 %v1712, %v1807
    %v1951 = vsub.f32 %v1713, %v1807
    %v1952 = vsub.f32 %v1714, %v1807
    %v1953 = vsub.f32 %v1715, %v1807
    %v1954 = vsub.f32 %v1716, %v1807
    %v1955 = vsub.f32 %v1717, %v1807
    %v1956 = vsub.f32 %v1718, %v1807
    %v1957 = vsub.f32 %v1719, %v1807
    %v1958 = vsub.f32 %v1720, %v1807
    %v1959 = vsub.f32 %v1721, %v1807
    %v1960 = vsub.f32 %v1722, %v1807
    %v1961 = vsub.f32 %v1723, %v1808
    %v1962 = vsub.f32 %v1724, %v1808
    %v1963 = vsub.f32 %v1725, %v1808
    %v1964 = vsub.f32 %v1726, %v1808
    %v1965 = vsub.f32 %v1727, %v1808
    %v1966 = vsub.f32 %v1728, %v1808
    %v1967 = vsub.f32 %v1729, %v1808
    %v1968 = vsub.f32 %v1730, %v1808
    %v1969 = vsub.f32 %v1731, %v1808
    %v1970 = vsub.f32 %v1732, %v1808
    %v1971 = vsub.f32 %v1733, %v1808
    %v1972 = vsub.f32 %v1734, %v1808
    %v1973 = vsub.f32 %v1735, %v1808
    %v1974 = vsub.f32 %v1736, %v1808
    %v1975 = vsub.f32 %v1737, %v1808
    %v1976 = vsub.f32 %v1738, %v1808
    %v1977 = vsub.f32 %v1739, %v1808
    %v1978 = vsub.f32 %v1740, %v1808
    %v1979 = vsub.f32 %v1741, %v1808
    %v1980 = vsub.f32 %v1742, %v1808
    %v1981 = vmul.f32 %v1941, %v1939
    %v1982 = vmul.f32 %v1942, %v1939
    %v1983 = vmul.f32 %v1943, %v1939
    %v1984 = vmul.f32 %v1944, %v1939
    %v1985 = vmul.f32 %v1945, %v1939
    %v1986 = vmul.f32 %v1946, %v1939
    %v1987 = vmul.f32 %v1947, %v1939
    %v1988 = vmul.f32 %v1948, %v1939
    %v1989 = vmul.f32 %v1949, %v1939
    %v1990 = vmul.f32 %v1950, %v1939
    %v1991 = vmul.f32 %v1951, %v1939
    %v1992 = vmul.f32 %v1952, %v1939
    %v1993 = vmul.f32 %v1953, %v1939
    %v1994 = vmul.f32 %v1954, %v1939
    %v1995 = vmul.f32 %v1955, %v1939
    %v1996 = vmul.f32 %v1956, %v1939
    %v1997 = vmul.f32 %v1957, %v1939
    %v1998 = vmul.f32 %v1958, %v1939
    %v1999 = vmul.f32 %v1959, %v1939
    %v2000 = vmul.f32 %v1960, %v1939
    %v2001 = vmul.f32 %v1961, %v1940
    %v2002 = vmul.f32 %v1962, %v1940
    %v2003 = vmul.f32 %v1963, %v1940
    %v2004 = vmul.f32 %v1964, %v1940
    %v2005 = vmul.f32 %v1965, %v1940
    %v2006 = vmul.f32 %v1966, %v1940
    %v2007 = vmul.f32 %v1967, %v1940
    %v2008 = vmul.f32 %v1968, %v1940
    %v2009 = vmul.f32 %v1969, %v1940
    %v2010 = vmul.f32 %v1970, %v1940
    %v2011 = vmul.f32 %v1971, %v1940
    %v2012 = vmul.f32 %v1972, %v1940
    %v2013 = vmul.f32 %v1973, %v1940
    %v2014 = vmul.f32 %v1974, %v1940
    %v2015 = vmul.f32 %v1975, %v1940
    %v2016 = vmul.f32 %v1976, %v1940
    %v2017 = vmul.f32 %v1977, %v1940
    %v2018 = vmul.f32 %v1978, %v1940
    %v2019 = vmul.f32 %v1979, %v1940
    %v2020 = vmul.f32 %v1980, %v1940
    %v2021 = vld [vmem:[#allocation14] sm:$0xff]
    %v2022 = vld [vmem:[#allocation14 + $0x8] sm:$0xff]
    %v2023 = vld [vmem:[#allocation14 + $0x10] sm:$0xf]
    %v2027 = vlaneseq
    %v2028 = vshrl.u32 %v2027, 7
    %v2029 = vsub.s32 0, %v2028
    %v2030 = vrot.slane %v2021, %v2029
    %v2031 = vlaneseq
    %v2032 = vshrl.u32 %v2031, 7
    %v2033 = vsub.s32 1, %v2032
    %v2034 = vrot.slane %v2021, %v2033
    %v2035 = vlaneseq
    %v2036 = vshrl.u32 %v2035, 7
    %v2037 = vsub.s32 2, %v2036
    %v2038 = vrot.slane %v2021, %v2037
    %v2039 = vlaneseq
    %v2040 = vshrl.u32 %v2039, 7
    %v2041 = vsub.s32 3, %v2040
    %v2042 = vrot.slane %v2021, %v2041
    %v2043 = vlaneseq
    %v2044 = vshrl.u32 %v2043, 7
    %v2045 = vsub.s32 4, %v2044
    %v2046 = vrot.slane %v2021, %v2045
    %v2047 = vlaneseq
    %v2048 = vshrl.u32 %v2047, 7
    %v2049 = vsub.s32 5, %v2048
    %v2050 = vrot.slane %v2021, %v2049
    %v2051 = vlaneseq
    %v2052 = vshrl.u32 %v2051, 7
    %v2053 = vsub.s32 6, %v2052
    %v2054 = vrot.slane %v2021, %v2053
    %v2055 = vlaneseq
    %v2056 = vshrl.u32 %v2055, 7
    %v2057 = vsub.s32 7, %v2056
    %v2058 = vrot.slane %v2021, %v2057
    %v2059 = vlaneseq
    %v2060 = vshrl.u32 %v2059, 7
    %v2061 = vsub.s32 0, %v2060
    %v2062 = vrot.slane %v2022, %v2061
    %v2063 = vlaneseq
    %v2064 = vshrl.u32 %v2063, 7
    %v2065 = vsub.s32 1, %v2064
    %v2066 = vrot.slane %v2022, %v2065
    %v2067 = vlaneseq
    %v2068 = vshrl.u32 %v2067, 7
    %v2069 = vsub.s32 2, %v2068
    %v2070 = vrot.slane %v2022, %v2069
    %v2071 = vlaneseq
    %v2072 = vshrl.u32 %v2071, 7
    %v2073 = vsub.s32 3, %v2072
    %v2074 = vrot.slane %v2022, %v2073
    %v2075 = vlaneseq
    %v2076 = vshrl.u32 %v2075, 7
    %v2077 = vsub.s32 4, %v2076
    %v2078 = vrot.slane %v2022, %v2077
    %v2079 = vlaneseq
    %v2080 = vshrl.u32 %v2079, 7
    %v2081 = vsub.s32 5, %v2080
    %v2082 = vrot.slane %v2022, %v2081
    %v2083 = vlaneseq
    %v2084 = vshrl.u32 %v2083, 7
    %v2085 = vsub.s32 6, %v2084
    %v2086 = vrot.slane %v2022, %v2085
    %v2087 = vlaneseq
    %v2088 = vshrl.u32 %v2087, 7
    %v2089 = vsub.s32 7, %v2088
    %v2090 = vrot.slane %v2022, %v2089
    %v2091 = vlaneseq
    %v2092 = vshrl.u32 %v2091, 7
    %v2093 = vsub.s32 0, %v2092
    %v2094 = vrot.slane %v2023, %v2093
    %v2095 = vlaneseq
    %v2096 = vshrl.u32 %v2095, 7
    %v2097 = vsub.s32 1, %v2096
    %v2098 = vrot.slane %v2023, %v2097
    %v2099 = vlaneseq
    %v2100 = vshrl.u32 %v2099, 7
    %v2101 = vsub.s32 2, %v2100
    %v2102 = vrot.slane %v2023, %v2101
    %v2103 = vlaneseq
    %v2104 = vshrl.u32 %v2103, 7
    %v2105 = vsub.s32 3, %v2104
    %v2106 = vrot.slane %v2023, %v2105
    %v2127 = vmul.f32 %v1981, %v2030
    %v2128 = vmul.f32 %v1982, %v2034
    %v2129 = vmul.f32 %v1983, %v2038
    %v2130 = vmul.f32 %v1984, %v2042
    %v2131 = vmul.f32 %v1985, %v2046
    %v2132 = vmul.f32 %v1986, %v2050
    %v2133 = vmul.f32 %v1987, %v2054
    %v2134 = vmul.f32 %v1988, %v2058
    %v2135 = vmul.f32 %v1989, %v2062
    %v2136 = vmul.f32 %v1990, %v2066
    %v2137 = vmul.f32 %v1991, %v2070
    %v2138 = vmul.f32 %v1992, %v2074
    %v2139 = vmul.f32 %v1993, %v2078
    %v2140 = vmul.f32 %v1994, %v2082
    %v2141 = vmul.f32 %v1995, %v2086
    %v2142 = vmul.f32 %v1996, %v2090
    %v2143 = vmul.f32 %v1997, %v2094
    %v2144 = vmul.f32 %v1998, %v2098
    %v2145 = vmul.f32 %v1999, %v2102
    %v2146 = vmul.f32 %v2000, %v2106
    %v2147 = vmul.f32 %v2001, %v2030
    %v2148 = vmul.f32 %v2002, %v2034
    %v2149 = vmul.f32 %v2003, %v2038
    %v2150 = vmul.f32 %v2004, %v2042
    %v2151 = vmul.f32 %v2005, %v2046
    %v2152 = vmul.f32 %v2006, %v2050
    %v2153 = vmul.f32 %v2007, %v2054
    %v2154 = vmul.f32 %v2008, %v2058
    %v2155 = vmul.f32 %v2009, %v2062
    %v2156 = vmul.f32 %v2010, %v2066
    %v2157 = vmul.f32 %v2011, %v2070
    %v2158 = vmul.f32 %v2012, %v2074
    %v2159 = vmul.f32 %v2013, %v2078
    %v2160 = vmul.f32 %v2014, %v2082
    %v2161 = vmul.f32 %v2015, %v2086
    %v2162 = vmul.f32 %v2016, %v2090
    %v2163 = vmul.f32 %v2017, %v2094
    %v2164 = vmul.f32 %v2018, %v2098
    %v2165 = vmul.f32 %v2019, %v2102
    %v2166 = vmul.f32 %v2020, %v2106
    %v2167 = vld [vmem:[#allocation16] sm:$0xff]
    %v2168 = vld [vmem:[#allocation16 + $0x8] sm:$0xff]
    %v2169 = vld [vmem:[#allocation16 + $0x10] sm:$0xf]
    %v2173 = vlaneseq
    %v2174 = vshrl.u32 %v2173, 7
    %v2175 = vsub.s32 0, %v2174
    %v2176 = vrot.slane %v2167, %v2175
    %v2177 = vlaneseq
    %v2178 = vshrl.u32 %v2177, 7
    %v2179 = vsub.s32 1, %v2178
    %v2180 = vrot.slane %v2167, %v2179
    %v2181 = vlaneseq
    %v2182 = vshrl.u32 %v2181, 7
    %v2183 = vsub.s32 2, %v2182
    %v2184 = vrot.slane %v2167, %v2183
    %v2185 = vlaneseq
    %v2186 = vshrl.u32 %v2185, 7
    %v2187 = vsub.s32 3, %v2186
    %v2188 = vrot.slane %v2167, %v2187
    %v2189 = vlaneseq
    %v2190 = vshrl.u32 %v2189, 7
    %v2191 = vsub.s32 4, %v2190
    %v2192 = vrot.slane %v2167, %v2191
    %v2193 = vlaneseq
    %v2194 = vshrl.u32 %v2193, 7
    %v2195 = vsub.s32 5, %v2194
    %v2196 = vrot.slane %v2167, %v2195
    %v2197 = vlaneseq
    %v2198 = vshrl.u32 %v2197, 7
    %v2199 = vsub.s32 6, %v2198
    %v2200 = vrot.slane %v2167, %v2199
    %v2201 = vlaneseq
    %v2202 = vshrl.u32 %v2201, 7
    %v2203 = vsub.s32 7, %v2202
    %v2204 = vrot.slane %v2167, %v2203
    %v2205 = vlaneseq
    %v2206 = vshrl.u32 %v2205, 7
    %v2207 = vsub.s32 0, %v2206
    %v2208 = vrot.slane %v2168, %v2207
    %v2209 = vlaneseq
    %v2210 = vshrl.u32 %v2209, 7
    %v2211 = vsub.s32 1, %v2210
    %v2212 = vrot.slane %v2168, %v2211
    %v2213 = vlaneseq
    %v2214 = vshrl.u32 %v2213, 7
    %v2215 = vsub.s32 2, %v2214
    %v2216 = vrot.slane %v2168, %v2215
    %v2217 = vlaneseq
    %v2218 = vshrl.u32 %v2217, 7
    %v2219 = vsub.s32 3, %v2218
    %v2220 = vrot.slane %v2168, %v2219
    %v2221 = vlaneseq
    %v2222 = vshrl.u32 %v2221, 7
    %v2223 = vsub.s32 4, %v2222
    %v2224 = vrot.slane %v2168, %v2223
    %v2225 = vlaneseq
    %v2226 = vshrl.u32 %v2225, 7
    %v2227 = vsub.s32 5, %v2226
    %v2228 = vrot.slane %v2168, %v2227
    %v2229 = vlaneseq
    %v2230 = vshrl.u32 %v2229, 7
    %v2231 = vsub.s32 6, %v2230
    %v2232 = vrot.slane %v2168, %v2231
    %v2233 = vlaneseq
    %v2234 = vshrl.u32 %v2233, 7
    %v2235 = vsub.s32 7, %v2234
    %v2236 = vrot.slane %v2168, %v2235
    %v2237 = vlaneseq
    %v2238 = vshrl.u32 %v2237, 7
    %v2239 = vsub.s32 0, %v2238
    %v2240 = vrot.slane %v2169, %v2239
    %v2241 = vlaneseq
    %v2242 = vshrl.u32 %v2241, 7
    %v2243 = vsub.s32 1, %v2242
    %v2244 = vrot.slane %v2169, %v2243
    %v2245 = vlaneseq
    %v2246 = vshrl.u32 %v2245, 7
    %v2247 = vsub.s32 2, %v2246
    %v2248 = vrot.slane %v2169, %v2247
    %v2249 = vlaneseq
    %v2250 = vshrl.u32 %v2249, 7
    %v2251 = vsub.s32 3, %v2250
    %v2252 = vrot.slane %v2169, %v2251
    %v2273 = vadd.f32 %v2127, %v2176
    %v2274 = vadd.f32 %v2128, %v2180
    %v2275 = vadd.f32 %v2129, %v2184
    %v2276 = vadd.f32 %v2130, %v2188
    %v2277 = vadd.f32 %v2131, %v2192
    %v2278 = vadd.f32 %v2132, %v2196
    %v2279 = vadd.f32 %v2133, %v2200
    %v2280 = vadd.f32 %v2134, %v2204
    %v2281 = vadd.f32 %v2135, %v2208
    %v2282 = vadd.f32 %v2136, %v2212
    %v2283 = vadd.f32 %v2137, %v2216
    %v2284 = vadd.f32 %v2138, %v2220
    %v2285 = vadd.f32 %v2139, %v2224
    %v2286 = vadd.f32 %v2140, %v2228
    %v2287 = vadd.f32 %v2141, %v2232
    %v2288 = vadd.f32 %v2142, %v2236
    %v2289 = vadd.f32 %v2143, %v2240
    %v2290 = vadd.f32 %v2144, %v2244
    %v2291 = vadd.f32 %v2145, %v2248
    %v2292 = vadd.f32 %v2146, %v2252
    %v2293 = vadd.f32 %v2147, %v2176
    %v2294 = vadd.f32 %v2148, %v2180
    %v2295 = vadd.f32 %v2149, %v2184
    %v2296 = vadd.f32 %v2150, %v2188
    %v2297 = vadd.f32 %v2151, %v2192
    %v2298 = vadd.f32 %v2152, %v2196
    %v2299 = vadd.f32 %v2153, %v2200
    %v2300 = vadd.f32 %v2154, %v2204
    %v2301 = vadd.f32 %v2155, %v2208
    %v2302 = vadd.f32 %v2156, %v2212
    %v2303 = vadd.f32 %v2157, %v2216
    %v2304 = vadd.f32 %v2158, %v2220
    %v2305 = vadd.f32 %v2159, %v2224
    %v2306 = vadd.f32 %v2160, %v2228
    %v2307 = vadd.f32 %v2161, %v2232
    %v2308 = vadd.f32 %v2162, %v2236
    %v2309 = vadd.f32 %v2163, %v2240
    %v2310 = vadd.f32 %v2164, %v2244
    %v2311 = vadd.f32 %v2165, %v2248
    %v2312 = vadd.f32 %v2166, %v2252
    %v2313 = vsub.f32 %v1665, %v1807
    %v2314 = vsub.f32 %v1666, %v1807
    %v2315 = vsub.f32 %v1667, %v1807
    %v2316 = vsub.f32 %v1668, %v1807
    %v2317 = vsub.f32 %v1669, %v1807
    %v2318 = vsub.f32 %v1670, %v1807
    %v2319 = vsub.f32 %v1671, %v1807
    %v2320 = vsub.f32 %v1672, %v1807
    %v2321 = vsub.f32 %v1673, %v1807
    %v2322 = vsub.f32 %v1674, %v1808
    %v2323 = vsub.f32 %v1675, %v1808
    %v2324 = vsub.f32 %v1676, %v1808
    %v2325 = vsub.f32 %v1677, %v1808
    %v2326 = vsub.f32 %v1678, %v1808
    %v2327 = vsub.f32 %v1679, %v1808
    %v2328 = vsub.f32 %v1680, %v1808
    %v2329 = vsub.f32 %v1681, %v1808
    %v2330 = vsub.f32 %v1682, %v1808
    %v2331 = vmul.f32 %v2313, %v1939
    %v2332 = vmul.f32 %v2314, %v1939
    %v2333 = vmul.f32 %v2315, %v1939
    %v2334 = vmul.f32 %v2316, %v1939
    %v2335 = vmul.f32 %v2317, %v1939
    %v2336 = vmul.f32 %v2318, %v1939
    %v2337 = vmul.f32 %v2319, %v1939
    %v2338 = vmul.f32 %v2320, %v1939
    %v2339 = vmul.f32 %v2321, %v1939
    %v2340 = vmul.f32 %v2322, %v1940
    %v2341 = vmul.f32 %v2323, %v1940
    %v2342 = vmul.f32 %v2324, %v1940
    %v2343 = vmul.f32 %v2325, %v1940
    %v2344 = vmul.f32 %v2326, %v1940
    %v2345 = vmul.f32 %v2327, %v1940
    %v2346 = vmul.f32 %v2328, %v1940
    %v2347 = vmul.f32 %v2329, %v1940
    %v2348 = vmul.f32 %v2330, %v1940
    %v2349 = vld [vmem:[#allocation17] sm:$0xff]
    %v2350 = vld [vmem:[#allocation17 + $0x8] sm:$0x1]
    %v2353 = vlaneseq
    %v2354 = vshrl.u32 %v2353, 7
    %v2355 = vsub.s32 0, %v2354
    %v2356 = vrot.slane %v2349, %v2355
    %v2357 = vlaneseq
    %v2358 = vshrl.u32 %v2357, 7
    %v2359 = vsub.s32 1, %v2358
    %v2360 = vrot.slane %v2349, %v2359
    %v2361 = vlaneseq
    %v2362 = vshrl.u32 %v2361, 7
    %v2363 = vsub.s32 2, %v2362
    %v2364 = vrot.slane %v2349, %v2363
    %v2365 = vlaneseq
    %v2366 = vshrl.u32 %v2365, 7
    %v2367 = vsub.s32 3, %v2366
    %v2368 = vrot.slane %v2349, %v2367
    %v2369 = vlaneseq
    %v2370 = vshrl.u32 %v2369, 7
    %v2371 = vsub.s32 4, %v2370
    %v2372 = vrot.slane %v2349, %v2371
    %v2373 = vlaneseq
    %v2374 = vshrl.u32 %v2373, 7
    %v2375 = vsub.s32 5, %v2374
    %v2376 = vrot.slane %v2349, %v2375
    %v2377 = vlaneseq
    %v2378 = vshrl.u32 %v2377, 7
    %v2379 = vsub.s32 6, %v2378
    %v2380 = vrot.slane %v2349, %v2379
    %v2381 = vlaneseq
    %v2382 = vshrl.u32 %v2381, 7
    %v2383 = vsub.s32 7, %v2382
    %v2384 = vrot.slane %v2349, %v2383
    %v2385 = vlaneseq
    %v2386 = vshrl.u32 %v2385, 7
    %v2387 = vsub.s32 0, %v2386
    %v2388 = vrot.slane %v2350, %v2387
    %v2398 = vmul.f32 %v2331, %v2356
    %v2399 = vmul.f32 %v2332, %v2360
    %v2400 = vmul.f32 %v2333, %v2364
    %v2401 = vmul.f32 %v2334, %v2368
    %v2402 = vmul.f32 %v2335, %v2372
    %v2403 = vmul.f32 %v2336, %v2376
    %v2404 = vmul.f32 %v2337, %v2380
    %v2405 = vmul.f32 %v2338, %v2384
    %v2406 = vmul.f32 %v2339, %v2388
    %v2407 = vmul.f32 %v2340, %v2356
    %v2408 = vmul.f32 %v2341, %v2360
    %v2409 = vmul.f32 %v2342, %v2364
    %v2410 = vmul.f32 %v2343, %v2368
    %v2411 = vmul.f32 %v2344, %v2372
    %v2412 = vmul.f32 %v2345, %v2376
    %v2413 = vmul.f32 %v2346, %v2380
    %v2414 = vmul.f32 %v2347, %v2384
    %v2415 = vmul.f32 %v2348, %v2388
    %v2416 = vld [vmem:[#allocation19] sm:$0xff]
    %v2417 = vld [vmem:[#allocation19 + $0x8] sm:$0x1]
    %v2420 = vlaneseq
    %v2421 = vshrl.u32 %v2420, 7
    %v2422 = vsub.s32 0, %v2421
    %v2423 = vrot.slane %v2416, %v2422
    %v2424 = vlaneseq
    %v2425 = vshrl.u32 %v2424, 7
    %v2426 = vsub.s32 1, %v2425
    %v2427 = vrot.slane %v2416, %v2426
    %v2428 = vlaneseq
    %v2429 = vshrl.u32 %v2428, 7
    %v2430 = vsub.s32 2, %v2429
    %v2431 = vrot.slane %v2416, %v2430
    %v2432 = vlaneseq
    %v2433 = vshrl.u32 %v2432, 7
    %v2434 = vsub.s32 3, %v2433
    %v2435 = vrot.slane %v2416, %v2434
    %v2436 = vlaneseq
    %v2437 = vshrl.u32 %v2436, 7
    %v2438 = vsub.s32 4, %v2437
    %v2439 = vrot.slane %v2416, %v2438
    %v2440 = vlaneseq
    %v2441 = vshrl.u32 %v2440, 7
    %v2442 = vsub.s32 5, %v2441
    %v2443 = vrot.slane %v2416, %v2442
    %v2444 = vlaneseq
    %v2445 = vshrl.u32 %v2444, 7
    %v2446 = vsub.s32 6, %v2445
    %v2447 = vrot.slane %v2416, %v2446
    %v2448 = vlaneseq
    %v2449 = vshrl.u32 %v2448, 7
    %v2450 = vsub.s32 7, %v2449
    %v2451 = vrot.slane %v2416, %v2450
    %v2452 = vlaneseq
    %v2453 = vshrl.u32 %v2452, 7
    %v2454 = vsub.s32 0, %v2453
    %v2455 = vrot.slane %v2417, %v2454
    %v2465 = vadd.f32 %v2398, %v2423
    %v2466 = vadd.f32 %v2399, %v2427
    %v2467 = vadd.f32 %v2400, %v2431
    %v2468 = vadd.f32 %v2401, %v2435
    %v2469 = vadd.f32 %v2402, %v2439
    %v2470 = vadd.f32 %v2403, %v2443
    %v2471 = vadd.f32 %v2404, %v2447
    %v2472 = vadd.f32 %v2405, %v2451
    %v2473 = vadd.f32 %v2406, %v2455
    %v2474 = vadd.f32 %v2407, %v2423
    %v2475 = vadd.f32 %v2408, %v2427
    %v2476 = vadd.f32 %v2409, %v2431
    %v2477 = vadd.f32 %v2410, %v2435
    %v2478 = vadd.f32 %v2411, %v2439
    %v2479 = vadd.f32 %v2412, %v2443
    %v2480 = vadd.f32 %v2413, %v2447
    %v2481 = vadd.f32 %v2414, %v2451
    %v2482 = vadd.f32 %v2415, %v2455
    %v2483 = vpack.c.bf16 %v2293, %v2273
    %v2484 = vpack.c.bf16 %v2294, %v2274
    %v2485 = vpack.c.bf16 %v2295, %v2275
    %v2486 = vpack.c.bf16 %v2296, %v2276
    %v2487 = vpack.c.bf16 %v2297, %v2277
    %v2488 = vpack.c.bf16 %v2298, %v2278
    %v2489 = vpack.c.bf16 %v2299, %v2279
    %v2490 = vpack.c.bf16 %v2300, %v2280
    %v2491 = vpack.c.bf16 %v2301, %v2281
    %v2492 = vpack.c.bf16 %v2302, %v2282
    %v2493 = vpack.c.bf16 %v2303, %v2283
    %v2494 = vpack.c.bf16 %v2304, %v2284
    %v2495 = vpack.c.bf16 %v2305, %v2285
    %v2496 = vpack.c.bf16 %v2306, %v2286
    %v2497 = vpack.c.bf16 %v2307, %v2287
    %v2498 = vpack.c.bf16 %v2308, %v2288
    %v2499 = vpack.c.bf16 %v2309, %v2289
    %v2500 = vpack.c.bf16 %v2310, %v2290
    %v2501 = vpack.c.bf16 %v2311, %v2291
    %v2502 = vpack.c.bf16 %v2312, %v2292
    %v2503 = vld [vmem:[#allocation20] sm:$0xff]
    %v2504 = vld [vmem:[#allocation20 + $0x8] sm:$0xff]
    %v2505 = vld [vmem:[#allocation20 + $0x10] sm:$0xff]
    %v2506 = vld [vmem:[#allocation20 + $0x18] sm:$0xff]
    %v2507 = vld [vmem:[#allocation20 + $0x20] sm:$0xff]
    %v2508 = vld [vmem:[#allocation20 + $0x28] sm:$0xff]
    %v2509 = vld [vmem:[#allocation20 + $0x30] sm:$0xff]
    %v2510 = vld [vmem:[#allocation20 + $0x38] sm:$0xff]
    %v2511 = vld [vmem:[#allocation20 + $0x40] sm:$0xff]
    %v2512 = vld [vmem:[#allocation20 + $0x48] sm:$0xff]
    %v2513 = vld [vmem:[#allocation20 + $0x50] sm:$0xff]
    %v2514 = vld [vmem:[#allocation20 + $0x58] sm:$0xff]
    %v2515 = vld [vmem:[#allocation20 + $0x60] sm:$0xff]
    %v2516 = vld [vmem:[#allocation20 + $0x68] sm:$0xff]
    %v2517 = vld [vmem:[#allocation20 + $0x70] sm:$0xff]
    %v2518 = vld [vmem:[#allocation20 + $0x78] sm:$0xff]
    %v2519 = vld [vmem:[#allocation20 + $0x80] sm:$0xff]
    %v2520 = vld [vmem:[#allocation20 + $0x88] sm:$0xff]
    %v2521 = vld [vmem:[#allocation20 + $0x90] sm:$0xff]
    %v2522 = vld [vmem:[#allocation20 + $0x98] sm:$0xff]
    %v2523 = vld [vmem:[#allocation20 + $0xa0] sm:$0xff]
    %v2524 = vld [vmem:[#allocation20 + $0xa8] sm:$0xff]
    %v2525 = vld [vmem:[#allocation20 + $0xb0] sm:$0xff]
    %v2526 = vld [vmem:[#allocation20 + $0xb8] sm:$0xff]
    %v2527 = vld [vmem:[#allocation20 + $0xc0] sm:$0xff]
    %v2528 = vld [vmem:[#allocation20 + $0xc8] sm:$0xff]
    %v2529 = vld [vmem:[#allocation20 + $0xd0] sm:$0xff]
    %v2530 = vld [vmem:[#allocation20 + $0xd8] sm:$0xff]
    %v2531 = vld [vmem:[#allocation20 + $0xe0] sm:$0xff]
    %v2532 = vld [vmem:[#allocation20 + $0xe8] sm:$0xff]
    %v2533 = vld [vmem:[#allocation20 + $0xf0] sm:$0xff]
    %v2534 = vld [vmem:[#allocation20 + $0xf8] sm:$0xff]
    %v2535 = vld [vmem:[#allocation20 + $0x100] sm:$0xff]
    %v2536 = vld [vmem:[#allocation20 + $0x108] sm:$0xff]
    %v2537 = vld [vmem:[#allocation20 + $0x110] sm:$0xff]
    %v2538 = vld [vmem:[#allocation20 + $0x118] sm:$0xff]
    %v2539 = vld [vmem:[#allocation20 + $0x120] sm:$0xff]
    %v2540 = vld [vmem:[#allocation20 + $0x128] sm:$0xff]
    %v2541 = vld [vmem:[#allocation20 + $0x130] sm:$0xff]
    %v2542 = vld [vmem:[#allocation20 + $0x138] sm:$0xff]
    %v2543 = vld [vmem:[#allocation20 + $0x140] sm:$0xff]
    %v2544 = vld [vmem:[#allocation20 + $0x148] sm:$0xff]
    %v2545 = vld [vmem:[#allocation20 + $0x150] sm:$0xff]
    %v2546 = vld [vmem:[#allocation20 + $0x158] sm:$0xff]
    %v2547 = vld [vmem:[#allocation20 + $0x160] sm:$0xff]
    %v2548 = vld [vmem:[#allocation20 + $0x168] sm:$0xff]
    %v2549 = vld [vmem:[#allocation20 + $0x170] sm:$0xff]
    %v2550 = vld [vmem:[#allocation20 + $0x178] sm:$0xff]
    %v2551 = vld [vmem:[#allocation20 + $0x180] sm:$0xff]
    %v2552 = vld [vmem:[#allocation20 + $0x188] sm:$0xff]
    %v2553 = vld [vmem:[#allocation20 + $0x190] sm:$0xff]
    %v2554 = vld [vmem:[#allocation20 + $0x198] sm:$0xff]
    %v2555 = vld [vmem:[#allocation20 + $0x1a0] sm:$0xff]
    %v2556 = vld [vmem:[#allocation20 + $0x1a8] sm:$0xff]
    %v2557 = vld [vmem:[#allocation20 + $0x1b0] sm:$0xff]
    %v2558 = vld [vmem:[#allocation20 + $0x1b8] sm:$0xff]
    %v2559 = vld [vmem:[#allocation20 + $0x1c0] sm:$0xff]
    %v2560 = vld [vmem:[#allocation20 + $0x1c8] sm:$0xff]
    %v2561 = vld [vmem:[#allocation20 + $0x1d0] sm:$0xff]
    %v2562 = vld [vmem:[#allocation20 + $0x1d8] sm:$0xff]
    %v2563 = vld [vmem:[#allocation20 + $0x1e0] sm:$0xff]
    %v2564 = vld [vmem:[#allocation20 + $0x1e8] sm:$0xff]
    %v2565 = vld [vmem:[#allocation20 + $0x1f0] sm:$0xff]
    %v2566 = vld [vmem:[#allocation20 + $0x1f8] sm:$0xff]
    %v2567 = vld [vmem:[#allocation20 + $0x200] sm:$0xff]
    %v2568 = vld [vmem:[#allocation20 + $0x208] sm:$0xff]
    %v2569 = vld [vmem:[#allocation20 + $0x210] sm:$0xff]
    %v2570 = vld [vmem:[#allocation20 + $0x218] sm:$0xff]
    %v2571 = vld [vmem:[#allocation20 + $0x220] sm:$0xff]
    %v2572 = vld [vmem:[#allocation20 + $0x228] sm:$0xff]
    %v2573 = vld [vmem:[#allocation20 + $0x230] sm:$0xff]
    %v2574 = vld [vmem:[#allocation20 + $0x238] sm:$0xff]
    %v2575 = vld [vmem:[#allocation20 + $0x240] sm:$0xff]
    %v2576 = vld [vmem:[#allocation20 + $0x248] sm:$0xff]
    %v2577 = vld [vmem:[#allocation20 + $0x250] sm:$0xff]
    %v2578 = vld [vmem:[#allocation20 + $0x258] sm:$0xff]
    %v2579 = vld [vmem:[#allocation20 + $0x260] sm:$0xff]
    %v2580 = vld [vmem:[#allocation20 + $0x268] sm:$0xff]
    %v2581 = vld [vmem:[#allocation20 + $0x270] sm:$0xff]
    %v2582 = vld [vmem:[#allocation20 + $0x278] sm:$0xff]
    %v2583 = vld [vmem:[#allocation20 + $0x280] sm:$0xff]
    %v2584 = vld [vmem:[#allocation20 + $0x288] sm:$0xff]
    %v2585 = vld [vmem:[#allocation20 + $0x290] sm:$0xff]
    %v2586 = vld [vmem:[#allocation20 + $0x298] sm:$0xff]
    %v2587 = vld [vmem:[#allocation20 + $0x2a0] sm:$0xff]
    %v2588 = vld [vmem:[#allocation20 + $0x2a8] sm:$0xff]
    %v2589 = vld [vmem:[#allocation20 + $0x2b0] sm:$0xff]
    %v2590 = vld [vmem:[#allocation20 + $0x2b8] sm:$0xff]
    %v2591 = vld [vmem:[#allocation20 + $0x2c0] sm:$0xff]
    %v2592 = vld [vmem:[#allocation20 + $0x2c8] sm:$0xff]
    %v2593 = vld [vmem:[#allocation20 + $0x2d0] sm:$0xff]
    %v2594 = vld [vmem:[#allocation20 + $0x2d8] sm:$0xff]
    %v2595 = vld [vmem:[#allocation20 + $0x2e0] sm:$0xff]
    %v2596 = vld [vmem:[#allocation20 + $0x2e8] sm:$0xff]
    %v2597 = vld [vmem:[#allocation20 + $0x2f0] sm:$0xff]
    %v2598 = vld [vmem:[#allocation20 + $0x2f8] sm:$0xff]
    %v2599 = vld [vmem:[#allocation20 + $0x300] sm:$0xff]
    %v2600 = vld [vmem:[#allocation20 + $0x308] sm:$0xff]
    %v2601 = vld [vmem:[#allocation20 + $0x310] sm:$0xff]
    %v2602 = vld [vmem:[#allocation20 + $0x318] sm:$0xff]
    %v2603 = vld [vmem:[#allocation20 + $0x320] sm:$0xff]
    %v2604 = vld [vmem:[#allocation20 + $0x328] sm:$0xff]
    %v2605 = vld [vmem:[#allocation20 + $0x330] sm:$0xff]
    %v2606 = vld [vmem:[#allocation20 + $0x338] sm:$0xff]
    %v2607 = vld [vmem:[#allocation20 + $0x340] sm:$0xff]
    %v2608 = vld [vmem:[#allocation20 + $0x348] sm:$0xff]
    %v2609 = vld [vmem:[#allocation20 + $0x350] sm:$0xff]
    %v2610 = vld [vmem:[#allocation20 + $0x358] sm:$0xff]
    %v2611 = vld [vmem:[#allocation20 + $0x360] sm:$0xff]
    %v2612 = vld [vmem:[#allocation20 + $0x368] sm:$0xff]
    %v2613 = vld [vmem:[#allocation20 + $0x370] sm:$0xff]
    %v2614 = vld [vmem:[#allocation20 + $0x378] sm:$0xff]
    %v2615 = vld [vmem:[#allocation20 + $0x380] sm:$0xff]
    %v2616 = vld [vmem:[#allocation20 + $0x388] sm:$0xff]
    %v2617 = vld [vmem:[#allocation20 + $0x390] sm:$0xff]
    %v2618 = vld [vmem:[#allocation20 + $0x398] sm:$0xff]
    %v2619 = vld [vmem:[#allocation20 + $0x3a0] sm:$0xff]
    %v2620 = vld [vmem:[#allocation20 + $0x3a8] sm:$0xff]
    %v2621 = vld [vmem:[#allocation20 + $0x3b0] sm:$0xff]
    %v2622 = vld [vmem:[#allocation20 + $0x3b8] sm:$0xff]
    %v2623 = vld [vmem:[#allocation20 + $0x3c0] sm:$0xff]
    %v2624 = vld [vmem:[#allocation20 + $0x3c8] sm:$0xff]
    %v2625 = vld [vmem:[#allocation20 + $0x3d0] sm:$0xff]
    %v2626 = vld [vmem:[#allocation20 + $0x3d8] sm:$0xff]
    %v2627 = vld [vmem:[#allocation20 + $0x3e0] sm:$0xff]
    %v2628 = vld [vmem:[#allocation20 + $0x3e8] sm:$0xff]
    %v2629 = vld [vmem:[#allocation20 + $0x3f0] sm:$0xff]
    %v2630 = vld [vmem:[#allocation20 + $0x3f8] sm:$0xff]
    %v2631 = vld [vmem:[#allocation20 + $0x400] sm:$0xff]
    %v2632 = vld [vmem:[#allocation20 + $0x408] sm:$0xff]
    %v2633 = vld [vmem:[#allocation20 + $0x410] sm:$0xff]
    %v2634 = vld [vmem:[#allocation20 + $0x418] sm:$0xff]
    %v2635 = vld [vmem:[#allocation20 + $0x420] sm:$0xff]
    %v2636 = vld [vmem:[#allocation20 + $0x428] sm:$0xff]
    %v2637 = vld [vmem:[#allocation20 + $0x430] sm:$0xff]
    %v2638 = vld [vmem:[#allocation20 + $0x438] sm:$0xff]
    %v2639 = vld [vmem:[#allocation20 + $0x440] sm:$0xff]
    %v2640 = vld [vmem:[#allocation20 + $0x448] sm:$0xff]
    %v2641 = vld [vmem:[#allocation20 + $0x450] sm:$0xff]
    %v2642 = vld [vmem:[#allocation20 + $0x458] sm:$0xff]
    %v2643 = vld [vmem:[#allocation20 + $0x460] sm:$0xff]
    %v2644 = vld [vmem:[#allocation20 + $0x468] sm:$0xff]
    %v2645 = vld [vmem:[#allocation20 + $0x470] sm:$0xff]
    %v2646 = vld [vmem:[#allocation20 + $0x478] sm:$0xff]
    %v2647 = vld [vmem:[#allocation20 + $0x480] sm:$0xff]
    %v2648 = vld [vmem:[#allocation20 + $0x488] sm:$0xff]
    %v2649 = vld [vmem:[#allocation20 + $0x490] sm:$0xff]
    %v2650 = vld [vmem:[#allocation20 + $0x498] sm:$0xff]
    %v2651 = vld [vmem:[#allocation20 + $0x4a0] sm:$0xff]
    %v2652 = vld [vmem:[#allocation20 + $0x4a8] sm:$0xff]
    %v2653 = vld [vmem:[#allocation20 + $0x4b0] sm:$0xff]
    %v2654 = vld [vmem:[#allocation20 + $0x4b8] sm:$0xff]
    %v2655 = vld [vmem:[#allocation20 + $0x4c0] sm:$0xff]
    %v2656 = vld [vmem:[#allocation20 + $0x4c8] sm:$0xff]
    %v2657 = vld [vmem:[#allocation20 + $0x4d0] sm:$0xff]
    %v2658 = vld [vmem:[#allocation20 + $0x4d8] sm:$0xff]
    %v2659 = vld [vmem:[#allocation20 + $0x4e0] sm:$0xff]
    %v2660 = vld [vmem:[#allocation20 + $0x4e8] sm:$0xff]
    %v2661 = vld [vmem:[#allocation20 + $0x4f0] sm:$0xff]
    %v2662 = vld [vmem:[#allocation20 + $0x4f8] sm:$0xff]
    %v2663 = vld [vmem:[#allocation20 + $0x500] sm:$0xff]
    %v2664 = vld [vmem:[#allocation20 + $0x508] sm:$0xff]
    %v2665 = vld [vmem:[#allocation20 + $0x510] sm:$0xff]
    %v2666 = vld [vmem:[#allocation20 + $0x518] sm:$0xff]
    %v2667 = vld [vmem:[#allocation20 + $0x520] sm:$0xff]
    %v2668 = vld [vmem:[#allocation20 + $0x528] sm:$0xff]
    %v2669 = vld [vmem:[#allocation20 + $0x530] sm:$0xff]
    %v2670 = vld [vmem:[#allocation20 + $0x538] sm:$0xff]
    %v2671 = vld [vmem:[#allocation20 + $0x540] sm:$0xff]
    %v2672 = vld [vmem:[#allocation20 + $0x548] sm:$0xff]
    %v2673 = vld [vmem:[#allocation20 + $0x550] sm:$0xff]
    %v2674 = vld [vmem:[#allocation20 + $0x558] sm:$0xff]
    %v2675 = vld [vmem:[#allocation20 + $0x560] sm:$0xff]
    %v2676 = vld [vmem:[#allocation20 + $0x568] sm:$0xff]
    %v2677 = vld [vmem:[#allocation20 + $0x570] sm:$0xff]
    %v2678 = vld [vmem:[#allocation20 + $0x578] sm:$0xff]
    %v2679 = vld [vmem:[#allocation20 + $0x580] sm:$0xff]
    %v2680 = vld [vmem:[#allocation20 + $0x588] sm:$0xff]
    %v2681 = vld [vmem:[#allocation20 + $0x590] sm:$0xff]
    %v2682 = vld [vmem:[#allocation20 + $0x598] sm:$0xff]
    %v2683 = vld [vmem:[#allocation20 + $0x5a0] sm:$0xff]
    %v2684 = vld [vmem:[#allocation20 + $0x5a8] sm:$0xff]
    %v2685 = vld [vmem:[#allocation20 + $0x5b0] sm:$0xff]
    %v2686 = vld [vmem:[#allocation20 + $0x5b8] sm:$0xff]
    %v2687 = vld [vmem:[#allocation20 + $0x5c0] sm:$0xff]
    %v2688 = vld [vmem:[#allocation20 + $0x5c8] sm:$0xff]
    %v2689 = vld [vmem:[#allocation20 + $0x5d0] sm:$0xff]
    %v2690 = vld [vmem:[#allocation20 + $0x5d8] sm:$0xff]
    %v2691 = vld [vmem:[#allocation20 + $0x5e0] sm:$0xff]
    %v2692 = vld [vmem:[#allocation20 + $0x5e8] sm:$0xff]
    %v2693 = vld [vmem:[#allocation20 + $0x5f0] sm:$0xff]
    %v2694 = vld [vmem:[#allocation20 + $0x5f8] sm:$0xff]
    %v2695 = vld [vmem:[#allocation20 + $0x600] sm:$0xff]
    %v2696 = vld [vmem:[#allocation20 + $0x608] sm:$0xff]
    %v2697 = vld [vmem:[#allocation20 + $0x610] sm:$0xff]
    %v2698 = vld [vmem:[#allocation20 + $0x618] sm:$0xff]
    %v2699 = vld [vmem:[#allocation20 + $0x620] sm:$0xff]
    %v2700 = vld [vmem:[#allocation20 + $0x628] sm:$0xff]
    %v2701 = vld [vmem:[#allocation20 + $0x630] sm:$0xff]
    %v2702 = vld [vmem:[#allocation20 + $0x638] sm:$0xff]
    %v2703 = vld [vmem:[#allocation20 + $0x640] sm:$0xff]
    %v2704 = vld [vmem:[#allocation20 + $0x648] sm:$0xff]
    %v2705 = vld [vmem:[#allocation20 + $0x650] sm:$0xff]
    %v2706 = vld [vmem:[#allocation20 + $0x658] sm:$0xff]
    %v2707 = vld [vmem:[#allocation20 + $0x660] sm:$0xff]
    %v2708 = vld [vmem:[#allocation20 + $0x668] sm:$0xff]
    %v2709 = vld [vmem:[#allocation20 + $0x670] sm:$0xff]
    %v2710 = vld [vmem:[#allocation20 + $0x678] sm:$0xff]
    %v2711 = vld [vmem:[#allocation20 + $0x680] sm:$0xff]
    %v2712 = vld [vmem:[#allocation20 + $0x688] sm:$0xff]
    %v2713 = vld [vmem:[#allocation20 + $0x690] sm:$0xff]
    %v2714 = vld [vmem:[#allocation20 + $0x698] sm:$0xff]
    %v2715 = vld [vmem:[#allocation20 + $0x6a0] sm:$0xff]
    %v2716 = vld [vmem:[#allocation20 + $0x6a8] sm:$0xff]
    %v2717 = vld [vmem:[#allocation20 + $0x6b0] sm:$0xff]
    %v2718 = vld [vmem:[#allocation20 + $0x6b8] sm:$0xff]
    %v2719 = vld [vmem:[#allocation20 + $0x6c0] sm:$0xff]
    %v2720 = vld [vmem:[#allocation20 + $0x6c8] sm:$0xff]
    %v2721 = vld [vmem:[#allocation20 + $0x6d0] sm:$0xff]
    %v2722 = vld [vmem:[#allocation20 + $0x6d8] sm:$0xff]
    %v2723 = vld [vmem:[#allocation20 + $0x6e0] sm:$0xff]
    %v2724 = vld [vmem:[#allocation20 + $0x6e8] sm:$0xff]
    %v2725 = vld [vmem:[#allocation20 + $0x6f0] sm:$0xff]
    %v2726 = vld [vmem:[#allocation20 + $0x6f8] sm:$0xff]
    %v2727 = vld [vmem:[#allocation20 + $0x700] sm:$0xff]
    %v2728 = vld [vmem:[#allocation20 + $0x708] sm:$0xff]
    %v2729 = vld [vmem:[#allocation20 + $0x710] sm:$0xff]
    %v2730 = vld [vmem:[#allocation20 + $0x718] sm:$0xff]
    %v2731 = vld [vmem:[#allocation20 + $0x720] sm:$0xff]
    %v2732 = vld [vmem:[#allocation20 + $0x728] sm:$0xff]
    %v2733 = vld [vmem:[#allocation20 + $0x730] sm:$0xff]
    %v2734 = vld [vmem:[#allocation20 + $0x738] sm:$0xff]
    %v2735 = vld [vmem:[#allocation20 + $0x740] sm:$0xff]
    %v2736 = vld [vmem:[#allocation20 + $0x748] sm:$0xff]
    %v2737 = vld [vmem:[#allocation20 + $0x750] sm:$0xff]
    %v2738 = vld [vmem:[#allocation20 + $0x758] sm:$0xff]
    %v2739 = vld [vmem:[#allocation20 + $0x760] sm:$0xff]
    %v2740 = vld [vmem:[#allocation20 + $0x768] sm:$0xff]
    %v2741 = vld [vmem:[#allocation20 + $0x770] sm:$0xff]
    %v2742 = vld [vmem:[#allocation20 + $0x778] sm:$0xff]
    %v2743 = vld [vmem:[#allocation20 + $0x780] sm:$0xff]
    %v2744 = vld [vmem:[#allocation20 + $0x788] sm:$0xff]
    %v2745 = vld [vmem:[#allocation20 + $0x790] sm:$0xff]
    %v2746 = vld [vmem:[#allocation20 + $0x798] sm:$0xff]
    %v2747 = vld [vmem:[#allocation20 + $0x7a0] sm:$0xff]
    %v2748 = vld [vmem:[#allocation20 + $0x7a8] sm:$0xff]
    %v2749 = vld [vmem:[#allocation20 + $0x7b0] sm:$0xff]
    %v2750 = vld [vmem:[#allocation20 + $0x7b8] sm:$0xff]
    %v2751 = vld [vmem:[#allocation20 + $0x7c0] sm:$0xff]
    %v2752 = vld [vmem:[#allocation20 + $0x7c8] sm:$0xff]
    %v2753 = vld [vmem:[#allocation20 + $0x7d0] sm:$0xff]
    %v2754 = vld [vmem:[#allocation20 + $0x7d8] sm:$0xff]
    %v2755 = vld [vmem:[#allocation20 + $0x7e0] sm:$0xff]
    %v2756 = vld [vmem:[#allocation20 + $0x7e8] sm:$0xff]
    %v2757 = vld [vmem:[#allocation20 + $0x7f0] sm:$0xff]
    %v2758 = vld [vmem:[#allocation20 + $0x7f8] sm:$0xff]
    %v2759 = vld [vmem:[#allocation20 + $0x800] sm:$0xff]
    %v2760 = vld [vmem:[#allocation20 + $0x808] sm:$0xff]
    %v2761 = vld [vmem:[#allocation20 + $0x810] sm:$0xff]
    %v2762 = vld [vmem:[#allocation20 + $0x818] sm:$0xff]
    %v2763 = vld [vmem:[#allocation20 + $0x820] sm:$0xff]
    %v2764 = vld [vmem:[#allocation20 + $0x828] sm:$0xff]
    %v2765 = vld [vmem:[#allocation20 + $0x830] sm:$0xff]
    %v2766 = vld [vmem:[#allocation20 + $0x838] sm:$0xff]
    %v2767 = vld [vmem:[#allocation20 + $0x840] sm:$0xff]
    %v2768 = vld [vmem:[#allocation20 + $0x848] sm:$0xff]
    %v2769 = vld [vmem:[#allocation20 + $0x850] sm:$0xff]
    %v2770 = vld [vmem:[#allocation20 + $0x858] sm:$0xff]
    %v2771 = vld [vmem:[#allocation20 + $0x860] sm:$0xff]
    %v2772 = vld [vmem:[#allocation20 + $0x868] sm:$0xff]
    %v2773 = vld [vmem:[#allocation20 + $0x870] sm:$0xff]
    %v2774 = vld [vmem:[#allocation20 + $0x878] sm:$0xff]
    %v2775 = vld [vmem:[#allocation20 + $0x880] sm:$0xff]
    %v2776 = vld [vmem:[#allocation20 + $0x888] sm:$0xff]
    %v2777 = vld [vmem:[#allocation20 + $0x890] sm:$0xff]
    %v2778 = vld [vmem:[#allocation20 + $0x898] sm:$0xff]
    %v2779 = vld [vmem:[#allocation20 + $0x8a0] sm:$0xff]
    %v2780 = vld [vmem:[#allocation20 + $0x8a8] sm:$0xff]
    %v2781 = vld [vmem:[#allocation20 + $0x8b0] sm:$0xff]
    %v2782 = vld [vmem:[#allocation20 + $0x8b8] sm:$0xff]
    %v2783 = vld [vmem:[#allocation20 + $0x8c0] sm:$0xff]
    %v2784 = vld [vmem:[#allocation20 + $0x8c8] sm:$0xff]
    %v2785 = vld [vmem:[#allocation20 + $0x8d0] sm:$0xff]
    %v2786 = vld [vmem:[#allocation20 + $0x8d8] sm:$0xff]
    %v2787 = vld [vmem:[#allocation20 + $0x8e0] sm:$0xff]
    %v2788 = vld [vmem:[#allocation20 + $0x8e8] sm:$0xff]
    %v2789 = vld [vmem:[#allocation20 + $0x8f0] sm:$0xff]
    %v2790 = vld [vmem:[#allocation20 + $0x8f8] sm:$0xff]
    %v2791 = vld [vmem:[#allocation20 + $0x900] sm:$0xff]
    %v2792 = vld [vmem:[#allocation20 + $0x908] sm:$0xff]
    %v2793 = vld [vmem:[#allocation20 + $0x910] sm:$0xff]
    %v2794 = vld [vmem:[#allocation20 + $0x918] sm:$0xff]
    %v2795 = vld [vmem:[#allocation20 + $0x920] sm:$0xff]
    %v2796 = vld [vmem:[#allocation20 + $0x928] sm:$0xff]
    %v2797 = vld [vmem:[#allocation20 + $0x930] sm:$0xff]
    %v2798 = vld [vmem:[#allocation20 + $0x938] sm:$0xff]
    %v2799 = vld [vmem:[#allocation20 + $0x940] sm:$0xff]
    %v2800 = vld [vmem:[#allocation20 + $0x948] sm:$0xff]
    %v2801 = vld [vmem:[#allocation20 + $0x950] sm:$0xff]
    %v2802 = vld [vmem:[#allocation20 + $0x958] sm:$0xff]
    %v2803 = vld [vmem:[#allocation20 + $0x960] sm:$0xff]
    %v2804 = vld [vmem:[#allocation20 + $0x968] sm:$0xff]
    %v2805 = vld [vmem:[#allocation20 + $0x970] sm:$0xff]
    %v2806 = vld [vmem:[#allocation20 + $0x978] sm:$0xff]
    %v2807 = vld [vmem:[#allocation20 + $0x980] sm:$0xff]
    %v2808 = vld [vmem:[#allocation20 + $0x988] sm:$0xff]
    %v2809 = vld [vmem:[#allocation20 + $0x990] sm:$0xff]
    %v2810 = vld [vmem:[#allocation20 + $0x998] sm:$0xff]
    %v2811 = vld [vmem:[#allocation20 + $0x9a0] sm:$0xff]
    %v2812 = vld [vmem:[#allocation20 + $0x9a8] sm:$0xff]
    %v2813 = vld [vmem:[#allocation20 + $0x9b0] sm:$0xff]
    %v2814 = vld [vmem:[#allocation20 + $0x9b8] sm:$0xff]
    %v2815 = vld [vmem:[#allocation20 + $0x9c0] sm:$0xff]
    %v2816 = vld [vmem:[#allocation20 + $0x9c8] sm:$0xff]
    %v2817 = vld [vmem:[#allocation20 + $0x9d0] sm:$0xff]
    %v2818 = vld [vmem:[#allocation20 + $0x9d8] sm:$0xff]
    %v2819 = vld [vmem:[#allocation20 + $0x9e0] sm:$0xff]
    %v2820 = vld [vmem:[#allocation20 + $0x9e8] sm:$0xff]
    %v2821 = vld [vmem:[#allocation20 + $0x9f0] sm:$0xff]
    %v2822 = vld [vmem:[#allocation20 + $0x9f8] sm:$0xff]
    %v2823 = vpack.c.bf16 %v2474, %v2465
    %v2824 = vpack.c.bf16 %v2475, %v2466
    %v2825 = vpack.c.bf16 %v2476, %v2467
    %v2826 = vpack.c.bf16 %v2477, %v2468
    %v2827 = vpack.c.bf16 %v2478, %v2469
    %v2828 = vpack.c.bf16 %v2479, %v2470
    %v2829 = vpack.c.bf16 %v2480, %v2471
    %v2830 = vpack.c.bf16 %v2481, %v2472
    %v2831 = vpack.c.bf16 %v2482, %v2473
    %v2832 = vld [vmem:[#allocation22] sm:$0xff]
    %v2833 = vld [vmem:[#allocation22 + $0x8] sm:$0xff]
    %v2834 = vld [vmem:[#allocation22 + $0x10] sm:$0xff]
    %v2835 = vld [vmem:[#allocation22 + $0x18] sm:$0xff]
    %v2836 = vld [vmem:[#allocation22 + $0x20] sm:$0xff]
    %v2837 = vld [vmem:[#allocation22 + $0x28] sm:$0xff]
    %v2838 = vld [vmem:[#allocation22 + $0x30] sm:$0xff]
    %v2839 = vld [vmem:[#allocation22 + $0x38] sm:$0xff]
    %v2840 = vld [vmem:[#allocation22 + $0x40] sm:$0xff]
    %v2841 = vld [vmem:[#allocation22 + $0x48] sm:$0xff]
    %v2842 = vld [vmem:[#allocation22 + $0x50] sm:$0xff]
    %v2843 = vld [vmem:[#allocation22 + $0x58] sm:$0xff]
    %v2844 = vld [vmem:[#allocation22 + $0x60] sm:$0xff]
    %v2845 = vld [vmem:[#allocation22 + $0x68] sm:$0xff]
    %v2846 = vld [vmem:[#allocation22 + $0x70] sm:$0xff]
    %v2847 = vld [vmem:[#allocation22 + $0x78] sm:$0xff]
    %v2848 = vld [vmem:[#allocation22 + $0x80] sm:$0xff]
    %v2849 = vld [vmem:[#allocation22 + $0x88] sm:$0xff]
    %v2850 = vld [vmem:[#allocation22 + $0x90] sm:$0xff]
    %v2851 = vld [vmem:[#allocation22 + $0x98] sm:$0xff]
    %v2852 = vld [vmem:[#allocation22 + $0xa0] sm:$0xff]
    %v2853 = vld [vmem:[#allocation22 + $0xa8] sm:$0xff]
    %v2854 = vld [vmem:[#allocation22 + $0xb0] sm:$0xff]
    %v2855 = vld [vmem:[#allocation22 + $0xb8] sm:$0xff]
    %v2856 = vld [vmem:[#allocation22 + $0xc0] sm:$0xff]
    %v2857 = vld [vmem:[#allocation22 + $0xc8] sm:$0xff]
    %v2858 = vld [vmem:[#allocation22 + $0xd0] sm:$0xff]
    %v2859 = vld [vmem:[#allocation22 + $0xd8] sm:$0xff]
    %v2860 = vld [vmem:[#allocation22 + $0xe0] sm:$0xff]
    %v2861 = vld [vmem:[#allocation22 + $0xe8] sm:$0xff]
    %v2862 = vld [vmem:[#allocation22 + $0xf0] sm:$0xff]
    %v2863 = vld [vmem:[#allocation22 + $0xf8] sm:$0xff]
    %v2864 = vld [vmem:[#allocation22 + $0x100] sm:$0xff]
    %v2865 = vld [vmem:[#allocation22 + $0x108] sm:$0xff]
    %v2866 = vld [vmem:[#allocation22 + $0x110] sm:$0xff]
    %v2867 = vld [vmem:[#allocation22 + $0x118] sm:$0xff]
    %v2868 = vld [vmem:[#allocation22 + $0x120] sm:$0xff]
    %v2869 = vld [vmem:[#allocation22 + $0x128] sm:$0xff]
    %v2870 = vld [vmem:[#allocation22 + $0x130] sm:$0xff]
    %v2871 = vld [vmem:[#allocation22 + $0x138] sm:$0xff]
    %v2872 = vld [vmem:[#allocation22 + $0x140] sm:$0xff]
    %v2873 = vld [vmem:[#allocation22 + $0x148] sm:$0xff]
    %v2874 = vld [vmem:[#allocation22 + $0x150] sm:$0xff]
    %v2875 = vld [vmem:[#allocation22 + $0x158] sm:$0xff]
    %v2876 = vld [vmem:[#allocation22 + $0x160] sm:$0xff]
    %v2877 = vld [vmem:[#allocation22 + $0x168] sm:$0xff]
    %v2878 = vld [vmem:[#allocation22 + $0x170] sm:$0xff]
    %v2879 = vld [vmem:[#allocation22 + $0x178] sm:$0xff]
    %v2880 = vld [vmem:[#allocation22 + $0x180] sm:$0xff]
    %v2881 = vld [vmem:[#allocation22 + $0x188] sm:$0xff]
    %v2882 = vld [vmem:[#allocation22 + $0x190] sm:$0xff]
    %v2883 = vld [vmem:[#allocation22 + $0x198] sm:$0xff]
    %v2884 = vld [vmem:[#allocation22 + $0x1a0] sm:$0xff]
    %v2885 = vld [vmem:[#allocation22 + $0x1a8] sm:$0xff]
    %v2886 = vld [vmem:[#allocation22 + $0x1b0] sm:$0xff]
    %v2887 = vld [vmem:[#allocation22 + $0x1b8] sm:$0xff]
    %v2888 = vld [vmem:[#allocation22 + $0x1c0] sm:$0xff]
    %v2889 = vld [vmem:[#allocation22 + $0x1c8] sm:$0xff]
    %v2890 = vld [vmem:[#allocation22 + $0x1d0] sm:$0xff]
    %v2891 = vld [vmem:[#allocation22 + $0x1d8] sm:$0xff]
    %v2892 = vld [vmem:[#allocation22 + $0x1e0] sm:$0xff]
    %v2893 = vld [vmem:[#allocation22 + $0x1e8] sm:$0xff]
    %v2894 = vld [vmem:[#allocation22 + $0x1f0] sm:$0xff]
    %v2895 = vld [vmem:[#allocation22 + $0x1f8] sm:$0xff]
    %v2896 = vld [vmem:[#allocation22 + $0x200] sm:$0xff]
    %v2897 = vld [vmem:[#allocation22 + $0x208] sm:$0xff]
    %v2898 = vld [vmem:[#allocation22 + $0x210] sm:$0xff]
    %v2899 = vld [vmem:[#allocation22 + $0x218] sm:$0xff]
    %v2900 = vld [vmem:[#allocation22 + $0x220] sm:$0xff]
    %v2901 = vld [vmem:[#allocation22 + $0x228] sm:$0xff]
    %v2902 = vld [vmem:[#allocation22 + $0x230] sm:$0xff]
    %v2903 = vld [vmem:[#allocation22 + $0x238] sm:$0xff]
    %v2904 = vld [vmem:[#allocation22 + $0x240] sm:$0xff]
    %v2905 = vld [vmem:[#allocation22 + $0x248] sm:$0xff]
    %v2906 = vld [vmem:[#allocation22 + $0x250] sm:$0xff]
    %v2907 = vld [vmem:[#allocation22 + $0x258] sm:$0xff]
    %v2908 = vld [vmem:[#allocation22 + $0x260] sm:$0xff]
    %v2909 = vld [vmem:[#allocation22 + $0x268] sm:$0xff]
    %v2910 = vld [vmem:[#allocation22 + $0x270] sm:$0xff]
    %v2911 = vld [vmem:[#allocation22 + $0x278] sm:$0xff]
    %v2912 = vld [vmem:[#allocation22 + $0x280] sm:$0xff]
    %v2913 = vld [vmem:[#allocation22 + $0x288] sm:$0xff]
    %v2914 = vld [vmem:[#allocation22 + $0x290] sm:$0xff]
    %v2915 = vld [vmem:[#allocation22 + $0x298] sm:$0xff]
    %v2916 = vld [vmem:[#allocation22 + $0x2a0] sm:$0xff]
    %v2917 = vld [vmem:[#allocation22 + $0x2a8] sm:$0xff]
    %v2918 = vld [vmem:[#allocation22 + $0x2b0] sm:$0xff]
    %v2919 = vld [vmem:[#allocation22 + $0x2b8] sm:$0xff]
    %v2920 = vld [vmem:[#allocation22 + $0x2c0] sm:$0xff]
    %v2921 = vld [vmem:[#allocation22 + $0x2c8] sm:$0xff]
    %v2922 = vld [vmem:[#allocation22 + $0x2d0] sm:$0xff]
    %v2923 = vld [vmem:[#allocation22 + $0x2d8] sm:$0xff]
    %v2924 = vld [vmem:[#allocation22 + $0x2e0] sm:$0xff]
    %v2925 = vld [vmem:[#allocation22 + $0x2e8] sm:$0xff]
    %v2926 = vld [vmem:[#allocation22 + $0x2f0] sm:$0xff]
    %v2927 = vld [vmem:[#allocation22 + $0x2f8] sm:$0xff]
    %v2928 = vld [vmem:[#allocation22 + $0x300] sm:$0xff]
    %v2929 = vld [vmem:[#allocation22 + $0x308] sm:$0xff]
    %v2930 = vld [vmem:[#allocation22 + $0x310] sm:$0xff]
    %v2931 = vld [vmem:[#allocation22 + $0x318] sm:$0xff]
    %v2932 = vld [vmem:[#allocation22 + $0x320] sm:$0xff]
    %v2933 = vld [vmem:[#allocation22 + $0x328] sm:$0xff]
    %v2934 = vld [vmem:[#allocation22 + $0x330] sm:$0xff]
    %v2935 = vld [vmem:[#allocation22 + $0x338] sm:$0xff]
    %v2936 = vld [vmem:[#allocation22 + $0x340] sm:$0xff]
    %v2937 = vld [vmem:[#allocation22 + $0x348] sm:$0xff]
    %v2938 = vld [vmem:[#allocation22 + $0x350] sm:$0xff]
    %v2939 = vld [vmem:[#allocation22 + $0x358] sm:$0xff]
    %v2940 = vld [vmem:[#allocation22 + $0x360] sm:$0xff]
    %v2941 = vld [vmem:[#allocation22 + $0x368] sm:$0xff]
    %v2942 = vld [vmem:[#allocation22 + $0x370] sm:$0xff]
    %v2943 = vld [vmem:[#allocation22 + $0x378] sm:$0xff]
    %v2944 = vld [vmem:[#allocation22 + $0x380] sm:$0xff]
    %v2945 = vld [vmem:[#allocation22 + $0x388] sm:$0xff]
    %v2946 = vld [vmem:[#allocation22 + $0x390] sm:$0xff]
    %v2947 = vld [vmem:[#allocation22 + $0x398] sm:$0xff]
    %v2948 = vld [vmem:[#allocation22 + $0x3a0] sm:$0xff]
    %v2949 = vld [vmem:[#allocation22 + $0x3a8] sm:$0xff]
    %v2950 = vld [vmem:[#allocation22 + $0x3b0] sm:$0xff]
    %v2951 = vld [vmem:[#allocation22 + $0x3b8] sm:$0xff]
    %v2952 = vld [vmem:[#allocation22 + $0x3c0] sm:$0xff]
    %v2953 = vld [vmem:[#allocation22 + $0x3c8] sm:$0xff]
    %v2954 = vld [vmem:[#allocation22 + $0x3d0] sm:$0xff]
    %v2955 = vld [vmem:[#allocation22 + $0x3d8] sm:$0xff]
    %v2956 = vld [vmem:[#allocation22 + $0x3e0] sm:$0xff]
    %v2957 = vld [vmem:[#allocation22 + $0x3e8] sm:$0xff]
    %v2958 = vld [vmem:[#allocation22 + $0x3f0] sm:$0xff]
    %v2959 = vld [vmem:[#allocation22 + $0x3f8] sm:$0xff]
    %v2960 = vld [vmem:[#allocation22 + $0x400] sm:$0xff]
    %v2961 = vld [vmem:[#allocation22 + $0x408] sm:$0xff]
    %v2962 = vld [vmem:[#allocation22 + $0x410] sm:$0xff]
    %v2963 = vld [vmem:[#allocation22 + $0x418] sm:$0xff]
    %v2964 = vld [vmem:[#allocation22 + $0x420] sm:$0xff]
    %v2965 = vld [vmem:[#allocation22 + $0x428] sm:$0xff]
    %v2966 = vld [vmem:[#allocation22 + $0x430] sm:$0xff]
    %v2967 = vld [vmem:[#allocation22 + $0x438] sm:$0xff]
    %v2968 = vld [vmem:[#allocation22 + $0x440] sm:$0xff]
    %v2969 = vld [vmem:[#allocation22 + $0x448] sm:$0xff]
    %v2970 = vld [vmem:[#allocation22 + $0x450] sm:$0xff]
    %v2971 = vld [vmem:[#allocation22 + $0x458] sm:$0xff]
    %v2972 = vld [vmem:[#allocation22 + $0x460] sm:$0xff]
    %v2973 = vld [vmem:[#allocation22 + $0x468] sm:$0xff]
    %v2974 = vld [vmem:[#allocation22 + $0x470] sm:$0xff]
    %v2975 = vld [vmem:[#allocation22 + $0x478] sm:$0xff]
    %v3120 = vunpack.c.l.b16 %v2832
    %v3121 = vunpack.c.h.b16 %v2832
    %v3122 = vunpack.c.l.b16 %v2833
    %v3123 = vunpack.c.h.b16 %v2833
    %v3124 = vunpack.c.l.b16 %v2834
    %v3125 = vunpack.c.h.b16 %v2834
    %v3126 = vunpack.c.l.b16 %v2835
    %v3127 = vunpack.c.h.b16 %v2835
    %v3128 = vunpack.c.l.b16 %v2836
    %v3129 = vunpack.c.h.b16 %v2836
    %v3130 = vunpack.c.l.b16 %v2837
    %v3131 = vunpack.c.h.b16 %v2837
    %v3132 = vunpack.c.l.b16 %v2838
    %v3133 = vunpack.c.h.b16 %v2838
    %v3134 = vunpack.c.l.b16 %v2839
    %v3135 = vunpack.c.h.b16 %v2839
    %v3136 = vunpack.c.l.b16 %v2840
    %v3137 = vunpack.c.h.b16 %v2840
    %v3138 = vunpack.c.l.b16 %v2841
    %v3139 = vunpack.c.h.b16 %v2841
    %v3140 = vunpack.c.l.b16 %v2842
    %v3141 = vunpack.c.h.b16 %v2842
    %v3142 = vunpack.c.l.b16 %v2843
    %v3143 = vunpack.c.h.b16 %v2843
    %v3144 = vunpack.c.l.b16 %v2844
    %v3145 = vunpack.c.h.b16 %v2844
    %v3146 = vunpack.c.l.b16 %v2845
    %v3147 = vunpack.c.h.b16 %v2845
    %v3148 = vunpack.c.l.b16 %v2846
    %v3149 = vunpack.c.h.b16 %v2846
    %v3150 = vunpack.c.l.b16 %v2847
    %v3151 = vunpack.c.h.b16 %v2847
    %v3152 = vunpack.c.l.b16 %v2848
    %v3153 = vunpack.c.h.b16 %v2848
    %v3154 = vunpack.c.l.b16 %v2849
    %v3155 = vunpack.c.h.b16 %v2849
    %v3156 = vunpack.c.l.b16 %v2850
    %v3157 = vunpack.c.h.b16 %v2850
    %v3158 = vunpack.c.l.b16 %v2851
    %v3159 = vunpack.c.h.b16 %v2851
    %v3160 = vunpack.c.l.b16 %v2852
    %v3161 = vunpack.c.h.b16 %v2852
    %v3162 = vunpack.c.l.b16 %v2853
    %v3163 = vunpack.c.h.b16 %v2853
    %v3164 = vunpack.c.l.b16 %v2854
    %v3165 = vunpack.c.h.b16 %v2854
    %v3166 = vunpack.c.l.b16 %v2855
    %v3167 = vunpack.c.h.b16 %v2855
    %v3168 = vunpack.c.l.b16 %v2856
    %v3169 = vunpack.c.h.b16 %v2856
    %v3170 = vunpack.c.l.b16 %v2857
    %v3171 = vunpack.c.h.b16 %v2857
    %v3172 = vunpack.c.l.b16 %v2858
    %v3173 = vunpack.c.h.b16 %v2858
    %v3174 = vunpack.c.l.b16 %v2859
    %v3175 = vunpack.c.h.b16 %v2859
    %v3176 = vunpack.c.l.b16 %v2860
    %v3177 = vunpack.c.h.b16 %v2860
    %v3178 = vunpack.c.l.b16 %v2861
    %v3179 = vunpack.c.h.b16 %v2861
    %v3180 = vunpack.c.l.b16 %v2862
    %v3181 = vunpack.c.h.b16 %v2862
    %v3182 = vunpack.c.l.b16 %v2863
    %v3183 = vunpack.c.h.b16 %v2863
    %v3184 = vunpack.c.l.b16 %v2864
    %v3185 = vunpack.c.h.b16 %v2864
    %v3186 = vunpack.c.l.b16 %v2865
    %v3187 = vunpack.c.h.b16 %v2865
    %v3188 = vunpack.c.l.b16 %v2866
    %v3189 = vunpack.c.h.b16 %v2866
    %v3190 = vunpack.c.l.b16 %v2867
    %v3191 = vunpack.c.h.b16 %v2867
    %v3192 = vunpack.c.l.b16 %v2868
    %v3193 = vunpack.c.h.b16 %v2868
    %v3194 = vunpack.c.l.b16 %v2869
    %v3195 = vunpack.c.h.b16 %v2869
    %v3196 = vunpack.c.l.b16 %v2870
    %v3197 = vunpack.c.h.b16 %v2870
    %v3198 = vunpack.c.l.b16 %v2871
    %v3199 = vunpack.c.h.b16 %v2871
    %v3200 = vunpack.c.l.b16 %v2872
    %v3201 = vunpack.c.h.b16 %v2872
    %v3202 = vunpack.c.l.b16 %v2873
    %v3203 = vunpack.c.h.b16 %v2873
    %v3204 = vunpack.c.l.b16 %v2874
    %v3205 = vunpack.c.h.b16 %v2874
    %v3206 = vunpack.c.l.b16 %v2875
    %v3207 = vunpack.c.h.b16 %v2875
    %v3208 = vunpack.c.l.b16 %v2876
    %v3209 = vunpack.c.h.b16 %v2876
    %v3210 = vunpack.c.l.b16 %v2877
    %v3211 = vunpack.c.h.b16 %v2877
    %v3212 = vunpack.c.l.b16 %v2878
    %v3213 = vunpack.c.h.b16 %v2878
    %v3214 = vunpack.c.l.b16 %v2879
    %v3215 = vunpack.c.h.b16 %v2879
    %v3216 = vunpack.c.l.b16 %v2880
    %v3217 = vunpack.c.h.b16 %v2880
    %v3218 = vunpack.c.l.b16 %v2881
    %v3219 = vunpack.c.h.b16 %v2881
    %v3220 = vunpack.c.l.b16 %v2882
    %v3221 = vunpack.c.h.b16 %v2882
    %v3222 = vunpack.c.l.b16 %v2883
    %v3223 = vunpack.c.h.b16 %v2883
    %v3224 = vunpack.c.l.b16 %v2884
    %v3225 = vunpack.c.h.b16 %v2884
    %v3226 = vunpack.c.l.b16 %v2885
    %v3227 = vunpack.c.h.b16 %v2885
    %v3228 = vunpack.c.l.b16 %v2886
    %v3229 = vunpack.c.h.b16 %v2886
    %v3230 = vunpack.c.l.b16 %v2887
    %v3231 = vunpack.c.h.b16 %v2887
    %v3232 = vunpack.c.l.b16 %v2888
    %v3233 = vunpack.c.h.b16 %v2888
    %v3234 = vunpack.c.l.b16 %v2889
    %v3235 = vunpack.c.h.b16 %v2889
    %v3236 = vunpack.c.l.b16 %v2890
    %v3237 = vunpack.c.h.b16 %v2890
    %v3238 = vunpack.c.l.b16 %v2891
    %v3239 = vunpack.c.h.b16 %v2891
    %v3240 = vunpack.c.l.b16 %v2892
    %v3241 = vunpack.c.h.b16 %v2892
    %v3242 = vunpack.c.l.b16 %v2893
    %v3243 = vunpack.c.h.b16 %v2893
    %v3244 = vunpack.c.l.b16 %v2894
    %v3245 = vunpack.c.h.b16 %v2894
    %v3246 = vunpack.c.l.b16 %v2895
    %v3247 = vunpack.c.h.b16 %v2895
    %v3248 = vunpack.c.l.b16 %v2896
    %v3249 = vunpack.c.h.b16 %v2896
    %v3250 = vunpack.c.l.b16 %v2897
    %v3251 = vunpack.c.h.b16 %v2897
    %v3252 = vunpack.c.l.b16 %v2898
    %v3253 = vunpack.c.h.b16 %v2898
    %v3254 = vunpack.c.l.b16 %v2899
    %v3255 = vunpack.c.h.b16 %v2899
    %v3256 = vunpack.c.l.b16 %v2900
    %v3257 = vunpack.c.h.b16 %v2900
    %v3258 = vunpack.c.l.b16 %v2901
    %v3259 = vunpack.c.h.b16 %v2901
    %v3260 = vunpack.c.l.b16 %v2902
    %v3261 = vunpack.c.h.b16 %v2902
    %v3262 = vunpack.c.l.b16 %v2903
    %v3263 = vunpack.c.h.b16 %v2903
    %v3264 = vunpack.c.l.b16 %v2904
    %v3265 = vunpack.c.h.b16 %v2904
    %v3266 = vunpack.c.l.b16 %v2905
    %v3267 = vunpack.c.h.b16 %v2905
    %v3268 = vunpack.c.l.b16 %v2906
    %v3269 = vunpack.c.h.b16 %v2906
    %v3270 = vunpack.c.l.b16 %v2907
    %v3271 = vunpack.c.h.b16 %v2907
    %v3272 = vunpack.c.l.b16 %v2908
    %v3273 = vunpack.c.h.b16 %v2908
    %v3274 = vunpack.c.l.b16 %v2909
    %v3275 = vunpack.c.h.b16 %v2909
    %v3276 = vunpack.c.l.b16 %v2910
    %v3277 = vunpack.c.h.b16 %v2910
    %v3278 = vunpack.c.l.b16 %v2911
    %v3279 = vunpack.c.h.b16 %v2911
    %v3280 = vunpack.c.l.b16 %v2912
    %v3281 = vunpack.c.h.b16 %v2912
    %v3282 = vunpack.c.l.b16 %v2913
    %v3283 = vunpack.c.h.b16 %v2913
    %v3284 = vunpack.c.l.b16 %v2914
    %v3285 = vunpack.c.h.b16 %v2914
    %v3286 = vunpack.c.l.b16 %v2915
    %v3287 = vunpack.c.h.b16 %v2915
    %v3288 = vunpack.c.l.b16 %v2916
    %v3289 = vunpack.c.h.b16 %v2916
    %v3290 = vunpack.c.l.b16 %v2917
    %v3291 = vunpack.c.h.b16 %v2917
    %v3292 = vunpack.c.l.b16 %v2918
    %v3293 = vunpack.c.h.b16 %v2918
    %v3294 = vunpack.c.l.b16 %v2919
    %v3295 = vunpack.c.h.b16 %v2919
    %v3296 = vunpack.c.l.b16 %v2920
    %v3297 = vunpack.c.h.b16 %v2920
    %v3298 = vunpack.c.l.b16 %v2921
    %v3299 = vunpack.c.h.b16 %v2921
    %v3300 = vunpack.c.l.b16 %v2922
    %v3301 = vunpack.c.h.b16 %v2922
    %v3302 = vunpack.c.l.b16 %v2923
    %v3303 = vunpack.c.h.b16 %v2923
    %v3304 = vunpack.c.l.b16 %v2924
    %v3305 = vunpack.c.h.b16 %v2924
    %v3306 = vunpack.c.l.b16 %v2925
    %v3307 = vunpack.c.h.b16 %v2925
    %v3308 = vunpack.c.l.b16 %v2926
    %v3309 = vunpack.c.h.b16 %v2926
    %v3310 = vunpack.c.l.b16 %v2927
    %v3311 = vunpack.c.h.b16 %v2927
    %v3312 = vunpack.c.l.b16 %v2928
    %v3313 = vunpack.c.h.b16 %v2928
    %v3314 = vunpack.c.l.b16 %v2929
    %v3315 = vunpack.c.h.b16 %v2929
    %v3316 = vunpack.c.l.b16 %v2930
    %v3317 = vunpack.c.h.b16 %v2930
    %v3318 = vunpack.c.l.b16 %v2931
    %v3319 = vunpack.c.h.b16 %v2931
    %v3320 = vunpack.c.l.b16 %v2932
    %v3321 = vunpack.c.h.b16 %v2932
    %v3322 = vunpack.c.l.b16 %v2933
    %v3323 = vunpack.c.h.b16 %v2933
    %v3324 = vunpack.c.l.b16 %v2934
    %v3325 = vunpack.c.h.b16 %v2934
    %v3326 = vunpack.c.l.b16 %v2935
    %v3327 = vunpack.c.h.b16 %v2935
    %v3328 = vunpack.c.l.b16 %v2936
    %v3329 = vunpack.c.h.b16 %v2936
    %v3330 = vunpack.c.l.b16 %v2937
    %v3331 = vunpack.c.h.b16 %v2937
    %v3332 = vunpack.c.l.b16 %v2938
    %v3333 = vunpack.c.h.b16 %v2938
    %v3334 = vunpack.c.l.b16 %v2939
    %v3335 = vunpack.c.h.b16 %v2939
    %v3336 = vunpack.c.l.b16 %v2940
    %v3337 = vunpack.c.h.b16 %v2940
    %v3338 = vunpack.c.l.b16 %v2941
    %v3339 = vunpack.c.h.b16 %v2941
    %v3340 = vunpack.c.l.b16 %v2942
    %v3341 = vunpack.c.h.b16 %v2942
    %v3342 = vunpack.c.l.b16 %v2943
    %v3343 = vunpack.c.h.b16 %v2943
    %v3344 = vunpack.c.l.b16 %v2944
    %v3345 = vunpack.c.h.b16 %v2944
    %v3346 = vunpack.c.l.b16 %v2945
    %v3347 = vunpack.c.h.b16 %v2945
    %v3348 = vunpack.c.l.b16 %v2946
    %v3349 = vunpack.c.h.b16 %v2946
    %v3350 = vunpack.c.l.b16 %v2947
    %v3351 = vunpack.c.h.b16 %v2947
    %v3352 = vunpack.c.l.b16 %v2948
    %v3353 = vunpack.c.h.b16 %v2948
    %v3354 = vunpack.c.l.b16 %v2949
    %v3355 = vunpack.c.h.b16 %v2949
    %v3356 = vunpack.c.l.b16 %v2950
    %v3357 = vunpack.c.h.b16 %v2950
    %v3358 = vunpack.c.l.b16 %v2951
    %v3359 = vunpack.c.h.b16 %v2951
    %v3360 = vunpack.c.l.b16 %v2952
    %v3361 = vunpack.c.h.b16 %v2952
    %v3362 = vunpack.c.l.b16 %v2953
    %v3363 = vunpack.c.h.b16 %v2953
    %v3364 = vunpack.c.l.b16 %v2954
    %v3365 = vunpack.c.h.b16 %v2954
    %v3366 = vunpack.c.l.b16 %v2955
    %v3367 = vunpack.c.h.b16 %v2955
    %v3368 = vunpack.c.l.b16 %v2956
    %v3369 = vunpack.c.h.b16 %v2956
    %v3370 = vunpack.c.l.b16 %v2957
    %v3371 = vunpack.c.h.b16 %v2957
    %v3372 = vunpack.c.l.b16 %v2958
    %v3373 = vunpack.c.h.b16 %v2958
    %v3374 = vunpack.c.l.b16 %v2959
    %v3375 = vunpack.c.h.b16 %v2959
    %v3376 = vunpack.c.l.b16 %v2960
    %v3377 = vunpack.c.h.b16 %v2960
    %v3378 = vunpack.c.l.b16 %v2961
    %v3379 = vunpack.c.h.b16 %v2961
    %v3380 = vunpack.c.l.b16 %v2962
    %v3381 = vunpack.c.h.b16 %v2962
    %v3382 = vunpack.c.l.b16 %v2963
    %v3383 = vunpack.c.h.b16 %v2963
    %v3384 = vunpack.c.l.b16 %v2964
    %v3385 = vunpack.c.h.b16 %v2964
    %v3386 = vunpack.c.l.b16 %v2965
    %v3387 = vunpack.c.h.b16 %v2965
    %v3388 = vunpack.c.l.b16 %v2966
    %v3389 = vunpack.c.h.b16 %v2966
    %v3390 = vunpack.c.l.b16 %v2967
    %v3391 = vunpack.c.h.b16 %v2967
    %v3392 = vunpack.c.l.b16 %v2968
    %v3393 = vunpack.c.h.b16 %v2968
    %v3394 = vunpack.c.l.b16 %v2969
    %v3395 = vunpack.c.h.b16 %v2969
    %v3396 = vunpack.c.l.b16 %v2970
    %v3397 = vunpack.c.h.b16 %v2970
    %v3398 = vunpack.c.l.b16 %v2971
    %v3399 = vunpack.c.h.b16 %v2971
    %v3400 = vunpack.c.l.b16 %v2972
    %v3401 = vunpack.c.h.b16 %v2972
    %v3402 = vunpack.c.l.b16 %v2973
    %v3403 = vunpack.c.h.b16 %v2973
    %v3404 = vunpack.c.l.b16 %v2974
    %v3405 = vunpack.c.h.b16 %v2974
    %v3406 = vunpack.c.l.b16 %v2975
    %v3407 = vunpack.c.h.b16 %v2975
    %v3408 = vpack.c.b16 %v3122, %v3120
    %v3409 = vpack.c.b16 %v3123, %v3121
    %v3410 = vpack.c.b16 %v3126, %v3124
    %v3411 = vpack.c.b16 %v3127, %v3125
    %v3412 = vpack.c.b16 %v3130, %v3128
    %v3413 = vpack.c.b16 %v3131, %v3129
    %v3414 = vpack.c.b16 %v3134, %v3132
    %v3415 = vpack.c.b16 %v3135, %v3133
    %v3416 = vpack.c.b16 %v3138, %v3136
    %v3417 = vpack.c.b16 %v3139, %v3137
    %v3418 = vpack.c.b16 %v3142, %v3140
    %v3419 = vpack.c.b16 %v3143, %v3141
    %v3420 = vpack.c.b16 %v3146, %v3144
    %v3421 = vpack.c.b16 %v3147, %v3145
    %v3422 = vpack.c.b16 %v3150, %v3148
    %v3423 = vpack.c.b16 %v3151, %v3149
    %v3424 = vpack.c.b16 %v3154, %v3152
    %v3425 = vpack.c.b16 %v3155, %v3153
    %v3426 = vpack.c.b16 %v3158, %v3156
    %v3427 = vpack.c.b16 %v3159, %v3157
    %v3428 = vpack.c.b16 %v3162, %v3160
    %v3429 = vpack.c.b16 %v3163, %v3161
    %v3430 = vpack.c.b16 %v3166, %v3164
    %v3431 = vpack.c.b16 %v3167, %v3165
    %v3432 = vpack.c.b16 %v3170, %v3168
    %v3433 = vpack.c.b16 %v3171, %v3169
    %v3434 = vpack.c.b16 %v3174, %v3172
    %v3435 = vpack.c.b16 %v3175, %v3173
    %v3436 = vpack.c.b16 %v3178, %v3176
    %v3437 = vpack.c.b16 %v3179, %v3177
    %v3438 = vpack.c.b16 %v3182, %v3180
    %v3439 = vpack.c.b16 %v3183, %v3181
    %v3440 = vpack.c.b16 %v3186, %v3184
    %v3441 = vpack.c.b16 %v3187, %v3185
    %v3442 = vpack.c.b16 %v3190, %v3188
    %v3443 = vpack.c.b16 %v3191, %v3189
    %v3444 = vpack.c.b16 %v3194, %v3192
    %v3445 = vpack.c.b16 %v3195, %v3193
    %v3446 = vpack.c.b16 %v3198, %v3196
    %v3447 = vpack.c.b16 %v3199, %v3197
    %v3448 = vpack.c.b16 %v3202, %v3200
    %v3449 = vpack.c.b16 %v3203, %v3201
    %v3450 = vpack.c.b16 %v3206, %v3204
    %v3451 = vpack.c.b16 %v3207, %v3205
    %v3452 = vpack.c.b16 %v3210, %v3208
    %v3453 = vpack.c.b16 %v3211, %v3209
    %v3454 = vpack.c.b16 %v3214, %v3212
    %v3455 = vpack.c.b16 %v3215, %v3213
    %v3456 = vpack.c.b16 %v3218, %v3216
    %v3457 = vpack.c.b16 %v3219, %v3217
    %v3458 = vpack.c.b16 %v3222, %v3220
    %v3459 = vpack.c.b16 %v3223, %v3221
    %v3460 = vpack.c.b16 %v3226, %v3224
    %v3461 = vpack.c.b16 %v3227, %v3225
    %v3462 = vpack.c.b16 %v3230, %v3228
    %v3463 = vpack.c.b16 %v3231, %v3229
    %v3464 = vpack.c.b16 %v3234, %v3232
    %v3465 = vpack.c.b16 %v3235, %v3233
    %v3466 = vpack.c.b16 %v3238, %v3236
    %v3467 = vpack.c.b16 %v3239, %v3237
    %v3468 = vpack.c.b16 %v3242, %v3240
    %v3469 = vpack.c.b16 %v3243, %v3241
    %v3470 = vpack.c.b16 %v3246, %v3244
    %v3471 = vpack.c.b16 %v3247, %v3245
    %v3472 = vpack.c.b16 %v3250, %v3248
    %v3473 = vpack.c.b16 %v3251, %v3249
    %v3474 = vpack.c.b16 %v3254, %v3252
    %v3475 = vpack.c.b16 %v3255, %v3253
    %v3476 = vpack.c.b16 %v3258, %v3256
    %v3477 = vpack.c.b16 %v3259, %v3257
    %v3478 = vpack.c.b16 %v3262, %v3260
    %v3479 = vpack.c.b16 %v3263, %v3261
    %v3480 = vpack.c.b16 %v3266, %v3264
    %v3481 = vpack.c.b16 %v3267, %v3265
    %v3482 = vpack.c.b16 %v3270, %v3268
    %v3483 = vpack.c.b16 %v3271, %v3269
    %v3484 = vpack.c.b16 %v3274, %v3272
    %v3485 = vpack.c.b16 %v3275, %v3273
    %v3486 = vpack.c.b16 %v3278, %v3276
    %v3487 = vpack.c.b16 %v3279, %v3277
    %v3488 = vpack.c.b16 %v3282, %v3280
    %v3489 = vpack.c.b16 %v3283, %v3281
    %v3490 = vpack.c.b16 %v3286, %v3284
    %v3491 = vpack.c.b16 %v3287, %v3285
    %v3492 = vpack.c.b16 %v3290, %v3288
    %v3493 = vpack.c.b16 %v3291, %v3289
    %v3494 = vpack.c.b16 %v3294, %v3292
    %v3495 = vpack.c.b16 %v3295, %v3293
    %v3496 = vpack.c.b16 %v3298, %v3296
    %v3497 = vpack.c.b16 %v3299, %v3297
    %v3498 = vpack.c.b16 %v3302, %v3300
    %v3499 = vpack.c.b16 %v3303, %v3301
    %v3500 = vpack.c.b16 %v3306, %v3304
    %v3501 = vpack.c.b16 %v3307, %v3305
    %v3502 = vpack.c.b16 %v3310, %v3308
    %v3503 = vpack.c.b16 %v3311, %v3309
    %v3504 = vpack.c.b16 %v3314, %v3312
    %v3505 = vpack.c.b16 %v3315, %v3313
    %v3506 = vpack.c.b16 %v3318, %v3316
    %v3507 = vpack.c.b16 %v3319, %v3317
    %v3508 = vpack.c.b16 %v3322, %v3320
    %v3509 = vpack.c.b16 %v3323, %v3321
    %v3510 = vpack.c.b16 %v3326, %v3324
    %v3511 = vpack.c.b16 %v3327, %v3325
    %v3512 = vpack.c.b16 %v3330, %v3328
    %v3513 = vpack.c.b16 %v3331, %v3329
    %v3514 = vpack.c.b16 %v3334, %v3332
    %v3515 = vpack.c.b16 %v3335, %v3333
    %v3516 = vpack.c.b16 %v3338, %v3336
    %v3517 = vpack.c.b16 %v3339, %v3337
    %v3518 = vpack.c.b16 %v3342, %v3340
    %v3519 = vpack.c.b16 %v3343, %v3341
    %v3520 = vpack.c.b16 %v3346, %v3344
    %v3521 = vpack.c.b16 %v3347, %v3345
    %v3522 = vpack.c.b16 %v3350, %v3348
    %v3523 = vpack.c.b16 %v3351, %v3349
    %v3524 = vpack.c.b16 %v3354, %v3352
    %v3525 = vpack.c.b16 %v3355, %v3353
    %v3526 = vpack.c.b16 %v3358, %v3356
    %v3527 = vpack.c.b16 %v3359, %v3357
    %v3528 = vpack.c.b16 %v3362, %v3360
    %v3529 = vpack.c.b16 %v3363, %v3361
    %v3530 = vpack.c.b16 %v3366, %v3364
    %v3531 = vpack.c.b16 %v3367, %v3365
    %v3532 = vpack.c.b16 %v3370, %v3368
    %v3533 = vpack.c.b16 %v3371, %v3369
    %v3534 = vpack.c.b16 %v3374, %v3372
    %v3535 = vpack.c.b16 %v3375, %v3373
    %v3536 = vpack.c.b16 %v3378, %v3376
    %v3537 = vpack.c.b16 %v3379, %v3377
    %v3538 = vpack.c.b16 %v3382, %v3380
    %v3539 = vpack.c.b16 %v3383, %v3381
    %v3540 = vpack.c.b16 %v3386, %v3384
    %v3541 = vpack.c.b16 %v3387, %v3385
    %v3542 = vpack.c.b16 %v3390, %v3388
    %v3543 = vpack.c.b16 %v3391, %v3389
    %v3544 = vpack.c.b16 %v3394, %v3392
    %v3545 = vpack.c.b16 %v3395, %v3393
    %v3546 = vpack.c.b16 %v3398, %v3396
    %v3547 = vpack.c.b16 %v3399, %v3397
    %v3548 = vpack.c.b16 %v3402, %v3400
    %v3549 = vpack.c.b16 %v3403, %v3401
    %v3550 = vpack.c.b16 %v3406, %v3404
    %v3551 = vpack.c.b16 %v3407, %v3405
    %3696 = vmatprep.subr.bf16.mxu0 %v3423
    %3697 = vmatpush1.bf16.msra.mxu0 %v3422
    %3698 = vmatprep.subr.bf16.mxu0 %v3421
    %3699 = vmatpush1.bf16.msra.mxu0 %v3420
    %3700 = vmatprep.subr.bf16.mxu0 %v3419
    %3701 = vmatpush1.bf16.msra.mxu0 %v3418
    %3702 = vmatprep.subr.bf16.mxu0 %v3417
    %3703 = vmatpush1.bf16.msra.mxu0 %v3416
    %3704 = vmatprep.subr.bf16.mxu0 %v3415
    %3705 = vmatpush1.bf16.msra.mxu0 %v3414
    %3706 = vmatprep.subr.bf16.mxu0 %v3413
    %3707 = vmatpush1.bf16.msra.mxu0 %v3412
    %3708 = vmatprep.subr.bf16.mxu0 %v3411
    %3709 = vmatpush1.bf16.msra.mxu0 %v3410
    %3710 = vmatprep.subr.bf16.mxu0 %v3409
    %3711 = vmatpush1.bf16.msra.mxu0 %v3408
    %3712 = vmatprep.subr.bf16.mxu0 %v3439
    %3713 = vmatpush2.bf16.msra.mxu0 %v3438
    %3714 = vmatprep.subr.bf16.mxu0 %v3437
    %3715 = vmatpush2.bf16.msra.mxu0 %v3436
    %3716 = vmatprep.subr.bf16.mxu0 %v3435
    %3717 = vmatpush2.bf16.msra.mxu0 %v3434
    %3718 = vmatprep.subr.bf16.mxu0 %v3433
    %3719 = vmatpush2.bf16.msra.mxu0 %v3432
    %3720 = vmatprep.subr.bf16.mxu0 %v3431
    %3721 = vmatpush2.bf16.msra.mxu0 %v3430
    %3722 = vmatprep.subr.bf16.mxu0 %v3429
    %3723 = vmatpush2.bf16.msra.mxu0 %v3428
    %3724 = vmatprep.subr.bf16.mxu0 %v3427
    %3725 = vmatpush2.bf16.msra.mxu0 %v3426
    %3726 = vmatprep.subr.bf16.mxu0 %v3425
    %3727 = vmatpush2.bf16.msra.mxu0 %v3424
    %3728 = vmatprep.mubr.bf16.mxu0 %v2824
    %3729 = vmatmul.mubr.bf16.gmra.mxu0 %v2823
    %v3730 = vpop.f32.mrf.mxu0
    %v3731 = vadd.f32 0.0, %v3730
    %v3732 = vpop.f32.mrf.mxu0
    %v3733 = vadd.f32 0.0, %v3732
    %v3734 = vpop.f32.mrf.mxu0
    %v3735 = vadd.f32 0.0, %v3734
    %v3736 = vpop.f32.mrf.mxu0
    %v3737 = vadd.f32 0.0, %v3736
    %3738 = vdwg.mxu0
    %3739 = vmatprep.subr.bf16.mxu0 %v3455
    %3740 = vmatpush1.bf16.msra.mxu0 %v3454
    %3741 = vmatprep.subr.bf16.mxu0 %v3453
    %3742 = vmatpush1.bf16.msra.mxu0 %v3452
    %3743 = vmatprep.subr.bf16.mxu0 %v3451
    %3744 = vmatpush1.bf16.msra.mxu0 %v3450
    %3745 = vmatprep.subr.bf16.mxu0 %v3449
    %3746 = vmatpush1.bf16.msra.mxu0 %v3448
    %3747 = vmatprep.subr.bf16.mxu0 %v3447
    %3748 = vmatpush1.bf16.msra.mxu0 %v3446
    %3749 = vmatprep.subr.bf16.mxu0 %v3445
    %3750 = vmatpush1.bf16.msra.mxu0 %v3444
    %3751 = vmatprep.subr.bf16.mxu0 %v3443
    %3752 = vmatpush1.bf16.msra.mxu0 %v3442
    %3753 = vmatprep.subr.bf16.mxu0 %v3441
    %3754 = vmatpush1.bf16.msra.mxu0 %v3440
    %3755 = vmatprep.subr.bf16.mxu0 %v3471
    %3756 = vmatpush2.bf16.msra.mxu0 %v3470
    %3757 = vmatprep.subr.bf16.mxu0 %v3469
    %3758 = vmatpush2.bf16.msra.mxu0 %v3468
    %3759 = vmatprep.subr.bf16.mxu0 %v3467
    %3760 = vmatpush2.bf16.msra.mxu0 %v3466
    %3761 = vmatprep.subr.bf16.mxu0 %v3465
    %3762 = vmatpush2.bf16.msra.mxu0 %v3464
    %3763 = vmatprep.subr.bf16.mxu0 %v3463
    %3764 = vmatpush2.bf16.msra.mxu0 %v3462
    %3765 = vmatprep.subr.bf16.mxu0 %v3461
    %3766 = vmatpush2.bf16.msra.mxu0 %v3460
    %3767 = vmatprep.subr.bf16.mxu0 %v3459
    %3768 = vmatpush2.bf16.msra.mxu0 %v3458
    %3769 = vmatprep.subr.bf16.mxu0 %v3457
    %3770 = vmatpush2.bf16.msra.mxu0 %v3456
    %3771 = vmatprep.mubr.bf16.mxu0 %v2826
    %3772 = vmatmul.mubr.bf16.gmra.mxu0 %v2825
    %v3773 = vpop.f32.mrf.mxu0
    %v3774 = vadd.f32 %v3731, %v3773
    %v3775 = vpop.f32.mrf.mxu0
    %v3776 = vadd.f32 %v3733, %v3775
    %v3777 = vpop.f32.mrf.mxu0
    %v3778 = vadd.f32 %v3735, %v3777
    %v3779 = vpop.f32.mrf.mxu0
    %v3780 = vadd.f32 %v3737, %v3779
    %3781 = vdwg.mxu0
    %3782 = vmatprep.subr.bf16.mxu0 %v3487
    %3783 = vmatpush1.bf16.msra.mxu0 %v3486
    %3784 = vmatprep.subr.bf16.mxu0 %v3485
    %3785 = vmatpush1.bf16.msra.mxu0 %v3484
    %3786 = vmatprep.subr.bf16.mxu0 %v3483
    %3787 = vmatpush1.bf16.msra.mxu0 %v3482
    %3788 = vmatprep.subr.bf16.mxu0 %v3481
    %3789 = vmatpush1.bf16.msra.mxu0 %v3480
    %3790 = vmatprep.subr.bf16.mxu0 %v3479
    %3791 = vmatpush1.bf16.msra.mxu0 %v3478
    %3792 = vmatprep.subr.bf16.mxu0 %v3477
    %3793 = vmatpush1.bf16.msra.mxu0 %v3476
    %3794 = vmatprep.subr.bf16.mxu0 %v3475
    %3795 = vmatpush1.bf16.msra.mxu0 %v3474
    %3796 = vmatprep.subr.bf16.mxu0 %v3473
    %3797 = vmatpush1.bf16.msra.mxu0 %v3472
    %3798 = vmatprep.subr.bf16.mxu0 %v3503
    %3799 = vmatpush2.bf16.msra.mxu0 %v3502
    %3800 = vmatprep.subr.bf16.mxu0 %v3501
    %3801 = vmatpush2.bf16.msra.mxu0 %v3500
    %3802 = vmatprep.subr.bf16.mxu0 %v3499
    %3803 = vmatpush2.bf16.msra.mxu0 %v3498
    %3804 = vmatprep.subr.bf16.mxu0 %v3497
    %3805 = vmatpush2.bf16.msra.mxu0 %v3496
    %3806 = vmatprep.subr.bf16.mxu0 %v3495
    %3807 = vmatpush2.bf16.msra.mxu0 %v3494
    %3808 = vmatprep.subr.bf16.mxu0 %v3493
    %3809 = vmatpush2.bf16.msra.mxu0 %v3492
    %3810 = vmatprep.subr.bf16.mxu0 %v3491
    %3811 = vmatpush2.bf16.msra.mxu0 %v3490
    %3812 = vmatprep.subr.bf16.mxu0 %v3489
    %3813 = vmatpush2.bf16.msra.mxu0 %v3488
    %3814 = vmatprep.mubr.bf16.mxu0 %v2828
    %3815 = vmatmul.mubr.bf16.gmra.mxu0 %v2827
    %v3816 = vpop.f32.mrf.mxu0
    %v3817 = vadd.f32 %v3774, %v3816
    %v3818 = vpop.f32.mrf.mxu0
    %v3819 = vadd.f32 %v3776, %v3818
    %v3820 = vpop.f32.mrf.mxu0
    %v3821 = vadd.f32 %v3778, %v3820
    %v3822 = vpop.f32.mrf.mxu0
    %v3823 = vadd.f32 %v3780, %v3822
    %3824 = vdwg.mxu0
    %3825 = vmatprep.subr.bf16.mxu0 %v3519
    %3826 = vmatpush1.bf16.msra.mxu0 %v3518
    %3827 = vmatprep.subr.bf16.mxu0 %v3517
    %3828 = vmatpush1.bf16.msra.mxu0 %v3516
    %3829 = vmatprep.subr.bf16.mxu0 %v3515
    %3830 = vmatpush1.bf16.msra.mxu0 %v3514
    %3831 = vmatprep.subr.bf16.mxu0 %v3513
    %3832 = vmatpush1.bf16.msra.mxu0 %v3512
    %3833 = vmatprep.subr.bf16.mxu0 %v3511
    %3834 = vmatpush1.bf16.msra.mxu0 %v3510
    %3835 = vmatprep.subr.bf16.mxu0 %v3509
    %3836 = vmatpush1.bf16.msra.mxu0 %v3508
    %3837 = vmatprep.subr.bf16.mxu0 %v3507
    %3838 = vmatpush1.bf16.msra.mxu0 %v3506
    %3839 = vmatprep.subr.bf16.mxu0 %v3505
    %3840 = vmatpush1.bf16.msra.mxu0 %v3504
    %3841 = vmatprep.subr.bf16.mxu0 %v3535
    %3842 = vmatpush2.bf16.msra.mxu0 %v3534
    %3843 = vmatprep.subr.bf16.mxu0 %v3533
    %3844 = vmatpush2.bf16.msra.mxu0 %v3532
    %3845 = vmatprep.subr.bf16.mxu0 %v3531
    %3846 = vmatpush2.bf16.msra.mxu0 %v3530
    %3847 = vmatprep.subr.bf16.mxu0 %v3529
    %3848 = vmatpush2.bf16.msra.mxu0 %v3528
    %3849 = vmatprep.subr.bf16.mxu0 %v3527
    %3850 = vmatpush2.bf16.msra.mxu0 %v3526
    %3851 = vmatprep.subr.bf16.mxu0 %v3525
    %3852 = vmatpush2.bf16.msra.mxu0 %v3524
    %3853 = vmatprep.subr.bf16.mxu0 %v3523
    %3854 = vmatpush2.bf16.msra.mxu0 %v3522
    %3855 = vmatprep.subr.bf16.mxu0 %v3521
    %3856 = vmatpush2.bf16.msra.mxu0 %v3520
    %3857 = vmatprep.mubr.bf16.mxu0 %v2830
    %3858 = vmatmul.mubr.bf16.gmra.mxu0 %v2829
    %v3859 = vpop.f32.mrf.mxu0
    %v3860 = vadd.f32 %v3817, %v3859
    %v3861 = vpop.f32.mrf.mxu0
    %v3862 = vadd.f32 %v3819, %v3861
    %v3863 = vpop.f32.mrf.mxu0
    %v3864 = vadd.f32 %v3821, %v3863
    %v3865 = vpop.f32.mrf.mxu0
    %v3866 = vadd.f32 %v3823, %v3865
    %3867 = vdwg.mxu0
    %3868 = vmatprep.subr.bf16.mxu0 %v3551
    %3869 = vmatpush1.bf16.msra.mxu0 %v3550
    %3870 = vmatprep.subr.bf16.mxu0 %v3549
    %3871 = vmatpush1.bf16.msra.mxu0 %v3548
    %3872 = vmatprep.subr.bf16.mxu0 %v3547
    %3873 = vmatpush1.bf16.msra.mxu0 %v3546
    %3874 = vmatprep.subr.bf16.mxu0 %v3545
    %3875 = vmatpush1.bf16.msra.mxu0 %v3544
    %3876 = vmatprep.subr.bf16.mxu0 %v3543
    %3877 = vmatpush1.bf16.msra.mxu0 %v3542
    %3878 = vmatprep.subr.bf16.mxu0 %v3541
    %3879 = vmatpush1.bf16.msra.mxu0 %v3540
    %3880 = vmatprep.subr.bf16.mxu0 %v3539
    %3881 = vmatpush1.bf16.msra.mxu0 %v3538
    %3882 = vmatprep.subr.bf16.mxu0 %v3537
    %3883 = vmatpush1.bf16.msra.mxu0 %v3536
    %3884 = vmatprep.subr.bf16.mxu0 0
    %3885 = vmatpush2.bf16.msra.mxu0 0
    %3886 = vmatprep.subr.bf16.mxu0 0
    %3887 = vmatpush2.bf16.msra.mxu0 0
    %3888 = vmatprep.subr.bf16.mxu0 0
    %3889 = vmatpush2.bf16.msra.mxu0 0
    %3890 = vmatprep.subr.bf16.mxu0 0
    %3891 = vmatpush2.bf16.msra.mxu0 0
    %3892 = vmatprep.subr.bf16.mxu0 0
    %3893 = vmatpush2.bf16.msra.mxu0 0
    %3894 = vmatprep.subr.bf16.mxu0 0
    %3895 = vmatpush2.bf16.msra.mxu0 0
    %3896 = vmatprep.subr.bf16.mxu0 0
    %3897 = vmatpush2.bf16.msra.mxu0 0
    %3898 = vmatprep.subr.bf16.mxu0 0
    %3899 = vmatpush2.bf16.msra.mxu0 0
    %3900 = vmatprep.mubr.bf16.mxu0 0
    %3901 = vmatmul.mubr.bf16.gmra.mxu0 %v2831
    %v3902 = vpop.f32.mrf.mxu0
    %v3903 = vadd.f32 %v3860, %v3902
    %v3904 = vpop.f32.mrf.mxu0
    %v3905 = vadd.f32 %v3862, %v3904
    %v3906 = vpop.f32.mrf.mxu0
    %v3907 = vadd.f32 %v3864, %v3906
    %v3908 = vpop.f32.mrf.mxu0
    %v3909 = vadd.f32 %v3866, %v3908
    %3910 = vdwg.mxu0
    %v4231 = vunpack.c.l.b16 %v2503
    %v4232 = vunpack.c.h.b16 %v2503
    %v4233 = vunpack.c.l.b16 %v2504
    %v4234 = vunpack.c.h.b16 %v2504
    %v4235 = vunpack.c.l.b16 %v2505
    %v4236 = vunpack.c.h.b16 %v2505
    %v4237 = vunpack.c.l.b16 %v2506
    %v4238 = vunpack.c.h.b16 %v2506
    %v4239 = vunpack.c.l.b16 %v2507
    %v4240 = vunpack.c.h.b16 %v2507
    %v4241 = vunpack.c.l.b16 %v2508
    %v4242 = vunpack.c.h.b16 %v2508
    %v4243 = vunpack.c.l.b16 %v2509
    %v4244 = vunpack.c.h.b16 %v2509
    %v4245 = vunpack.c.l.b16 %v2510
    %v4246 = vunpack.c.h.b16 %v2510
    %v4247 = vunpack.c.l.b16 %v2511
    %v4248 = vunpack.c.h.b16 %v2511
    %v4249 = vunpack.c.l.b16 %v2512
    %v4250 = vunpack.c.h.b16 %v2512
    %v4251 = vunpack.c.l.b16 %v2513
    %v4252 = vunpack.c.h.b16 %v2513
    %v4253 = vunpack.c.l.b16 %v2514
    %v4254 = vunpack.c.h.b16 %v2514
    %v4255 = vunpack.c.l.b16 %v2515
    %v4256 = vunpack.c.h.b16 %v2515
    %v4257 = vunpack.c.l.b16 %v2516
    %v4258 = vunpack.c.h.b16 %v2516
    %v4259 = vunpack.c.l.b16 %v2517
    %v4260 = vunpack.c.h.b16 %v2517
    %v4261 = vunpack.c.l.b16 %v2518
    %v4262 = vunpack.c.h.b16 %v2518
    %v4263 = vunpack.c.l.b16 %v2519
    %v4264 = vunpack.c.h.b16 %v2519
    %v4265 = vunpack.c.l.b16 %v2520
    %v4266 = vunpack.c.h.b16 %v2520
    %v4267 = vunpack.c.l.b16 %v2521
    %v4268 = vunpack.c.h.b16 %v2521
    %v4269 = vunpack.c.l.b16 %v2522
    %v4270 = vunpack.c.h.b16 %v2522
    %v4271 = vunpack.c.l.b16 %v2523
    %v4272 = vunpack.c.h.b16 %v2523
    %v4273 = vunpack.c.l.b16 %v2524
    %v4274 = vunpack.c.h.b16 %v2524
    %v4275 = vunpack.c.l.b16 %v2525
    %v4276 = vunpack.c.h.b16 %v2525
    %v4277 = vunpack.c.l.b16 %v2526
    %v4278 = vunpack.c.h.b16 %v2526
    %v4279 = vunpack.c.l.b16 %v2527
    %v4280 = vunpack.c.h.b16 %v2527
    %v4281 = vunpack.c.l.b16 %v2528
    %v4282 = vunpack.c.h.b16 %v2528
    %v4283 = vunpack.c.l.b16 %v2529
    %v4284 = vunpack.c.h.b16 %v2529
    %v4285 = vunpack.c.l.b16 %v2530
    %v4286 = vunpack.c.h.b16 %v2530
    %v4287 = vunpack.c.l.b16 %v2531
    %v4288 = vunpack.c.h.b16 %v2531
    %v4289 = vunpack.c.l.b16 %v2532
    %v4290 = vunpack.c.h.b16 %v2532
    %v4291 = vunpack.c.l.b16 %v2533
    %v4292 = vunpack.c.h.b16 %v2533
    %v4293 = vunpack.c.l.b16 %v2534
    %v4294 = vunpack.c.h.b16 %v2534
    %v4295 = vunpack.c.l.b16 %v2535
    %v4296 = vunpack.c.h.b16 %v2535
    %v4297 = vunpack.c.l.b16 %v2536
    %v4298 = vunpack.c.h.b16 %v2536
    %v4299 = vunpack.c.l.b16 %v2537
    %v4300 = vunpack.c.h.b16 %v2537
    %v4301 = vunpack.c.l.b16 %v2538
    %v4302 = vunpack.c.h.b16 %v2538
    %v4303 = vunpack.c.l.b16 %v2539
    %v4304 = vunpack.c.h.b16 %v2539
    %v4305 = vunpack.c.l.b16 %v2540
    %v4306 = vunpack.c.h.b16 %v2540
    %v4307 = vunpack.c.l.b16 %v2541
    %v4308 = vunpack.c.h.b16 %v2541
    %v4309 = vunpack.c.l.b16 %v2542
    %v4310 = vunpack.c.h.b16 %v2542
    %v4311 = vunpack.c.l.b16 %v2543
    %v4312 = vunpack.c.h.b16 %v2543
    %v4313 = vunpack.c.l.b16 %v2544
    %v4314 = vunpack.c.h.b16 %v2544
    %v4315 = vunpack.c.l.b16 %v2545
    %v4316 = vunpack.c.h.b16 %v2545
    %v4317 = vunpack.c.l.b16 %v2546
    %v4318 = vunpack.c.h.b16 %v2546
    %v4319 = vunpack.c.l.b16 %v2547
    %v4320 = vunpack.c.h.b16 %v2547
    %v4321 = vunpack.c.l.b16 %v2548
    %v4322 = vunpack.c.h.b16 %v2548
    %v4323 = vunpack.c.l.b16 %v2549
    %v4324 = vunpack.c.h.b16 %v2549
    %v4325 = vunpack.c.l.b16 %v2550
    %v4326 = vunpack.c.h.b16 %v2550
    %v4327 = vunpack.c.l.b16 %v2551
    %v4328 = vunpack.c.h.b16 %v2551
    %v4329 = vunpack.c.l.b16 %v2552
    %v4330 = vunpack.c.h.b16 %v2552
    %v4331 = vunpack.c.l.b16 %v2553
    %v4332 = vunpack.c.h.b16 %v2553
    %v4333 = vunpack.c.l.b16 %v2554
    %v4334 = vunpack.c.h.b16 %v2554
    %v4335 = vunpack.c.l.b16 %v2555
    %v4336 = vunpack.c.h.b16 %v2555
    %v4337 = vunpack.c.l.b16 %v2556
    %v4338 = vunpack.c.h.b16 %v2556
    %v4339 = vunpack.c.l.b16 %v2557
    %v4340 = vunpack.c.h.b16 %v2557
    %v4341 = vunpack.c.l.b16 %v2558
    %v4342 = vunpack.c.h.b16 %v2558
    %v4343 = vunpack.c.l.b16 %v2559
    %v4344 = vunpack.c.h.b16 %v2559
    %v4345 = vunpack.c.l.b16 %v2560
    %v4346 = vunpack.c.h.b16 %v2560
    %v4347 = vunpack.c.l.b16 %v2561
    %v4348 = vunpack.c.h.b16 %v2561
    %v4349 = vunpack.c.l.b16 %v2562
    %v4350 = vunpack.c.h.b16 %v2562
    %v4351 = vunpack.c.l.b16 %v2563
    %v4352 = vunpack.c.h.b16 %v2563
    %v4353 = vunpack.c.l.b16 %v2564
    %v4354 = vunpack.c.h.b16 %v2564
    %v4355 = vunpack.c.l.b16 %v2565
    %v4356 = vunpack.c.h.b16 %v2565
    %v4357 = vunpack.c.l.b16 %v2566
    %v4358 = vunpack.c.h.b16 %v2566
    %v4359 = vunpack.c.l.b16 %v2567
    %v4360 = vunpack.c.h.b16 %v2567
    %v4361 = vunpack.c.l.b16 %v2568
    %v4362 = vunpack.c.h.b16 %v2568
    %v4363 = vunpack.c.l.b16 %v2569
    %v4364 = vunpack.c.h.b16 %v2569
    %v4365 = vunpack.c.l.b16 %v2570
    %v4366 = vunpack.c.h.b16 %v2570
    %v4367 = vunpack.c.l.b16 %v2571
    %v4368 = vunpack.c.h.b16 %v2571
    %v4369 = vunpack.c.l.b16 %v2572
    %v4370 = vunpack.c.h.b16 %v2572
    %v4371 = vunpack.c.l.b16 %v2573
    %v4372 = vunpack.c.h.b16 %v2573
    %v4373 = vunpack.c.l.b16 %v2574
    %v4374 = vunpack.c.h.b16 %v2574
    %v4375 = vunpack.c.l.b16 %v2575
    %v4376 = vunpack.c.h.b16 %v2575
    %v4377 = vunpack.c.l.b16 %v2576
    %v4378 = vunpack.c.h.b16 %v2576
    %v4379 = vunpack.c.l.b16 %v2577
    %v4380 = vunpack.c.h.b16 %v2577
    %v4381 = vunpack.c.l.b16 %v2578
    %v4382 = vunpack.c.h.b16 %v2578
    %v4383 = vunpack.c.l.b16 %v2579
    %v4384 = vunpack.c.h.b16 %v2579
    %v4385 = vunpack.c.l.b16 %v2580
    %v4386 = vunpack.c.h.b16 %v2580
    %v4387 = vunpack.c.l.b16 %v2581
    %v4388 = vunpack.c.h.b16 %v2581
    %v4389 = vunpack.c.l.b16 %v2582
    %v4390 = vunpack.c.h.b16 %v2582
    %v4391 = vunpack.c.l.b16 %v2583
    %v4392 = vunpack.c.h.b16 %v2583
    %v4393 = vunpack.c.l.b16 %v2584
    %v4394 = vunpack.c.h.b16 %v2584
    %v4395 = vunpack.c.l.b16 %v2585
    %v4396 = vunpack.c.h.b16 %v2585
    %v4397 = vunpack.c.l.b16 %v2586
    %v4398 = vunpack.c.h.b16 %v2586
    %v4399 = vunpack.c.l.b16 %v2587
    %v4400 = vunpack.c.h.b16 %v2587
    %v4401 = vunpack.c.l.b16 %v2588
    %v4402 = vunpack.c.h.b16 %v2588
    %v4403 = vunpack.c.l.b16 %v2589
    %v4404 = vunpack.c.h.b16 %v2589
    %v4405 = vunpack.c.l.b16 %v2590
    %v4406 = vunpack.c.h.b16 %v2590
    %v4407 = vunpack.c.l.b16 %v2591
    %v4408 = vunpack.c.h.b16 %v2591
    %v4409 = vunpack.c.l.b16 %v2592
    %v4410 = vunpack.c.h.b16 %v2592
    %v4411 = vunpack.c.l.b16 %v2593
    %v4412 = vunpack.c.h.b16 %v2593
    %v4413 = vunpack.c.l.b16 %v2594
    %v4414 = vunpack.c.h.b16 %v2594
    %v4415 = vunpack.c.l.b16 %v2595
    %v4416 = vunpack.c.h.b16 %v2595
    %v4417 = vunpack.c.l.b16 %v2596
    %v4418 = vunpack.c.h.b16 %v2596
    %v4419 = vunpack.c.l.b16 %v2597
    %v4420 = vunpack.c.h.b16 %v2597
    %v4421 = vunpack.c.l.b16 %v2598
    %v4422 = vunpack.c.h.b16 %v2598
    %v4423 = vunpack.c.l.b16 %v2599
    %v4424 = vunpack.c.h.b16 %v2599
    %v4425 = vunpack.c.l.b16 %v2600
    %v4426 = vunpack.c.h.b16 %v2600
    %v4427 = vunpack.c.l.b16 %v2601
    %v4428 = vunpack.c.h.b16 %v2601
    %v4429 = vunpack.c.l.b16 %v2602
    %v4430 = vunpack.c.h.b16 %v2602
    %v4431 = vunpack.c.l.b16 %v2603
    %v4432 = vunpack.c.h.b16 %v2603
    %v4433 = vunpack.c.l.b16 %v2604
    %v4434 = vunpack.c.h.b16 %v2604
    %v4435 = vunpack.c.l.b16 %v2605
    %v4436 = vunpack.c.h.b16 %v2605
    %v4437 = vunpack.c.l.b16 %v2606
    %v4438 = vunpack.c.h.b16 %v2606
    %v4439 = vunpack.c.l.b16 %v2607
    %v4440 = vunpack.c.h.b16 %v2607
    %v4441 = vunpack.c.l.b16 %v2608
    %v4442 = vunpack.c.h.b16 %v2608
    %v4443 = vunpack.c.l.b16 %v2609
    %v4444 = vunpack.c.h.b16 %v2609
    %v4445 = vunpack.c.l.b16 %v2610
    %v4446 = vunpack.c.h.b16 %v2610
    %v4447 = vunpack.c.l.b16 %v2611
    %v4448 = vunpack.c.h.b16 %v2611
    %v4449 = vunpack.c.l.b16 %v2612
    %v4450 = vunpack.c.h.b16 %v2612
    %v4451 = vunpack.c.l.b16 %v2613
    %v4452 = vunpack.c.h.b16 %v2613
    %v4453 = vunpack.c.l.b16 %v2614
    %v4454 = vunpack.c.h.b16 %v2614
    %v4455 = vunpack.c.l.b16 %v2615
    %v4456 = vunpack.c.h.b16 %v2615
    %v4457 = vunpack.c.l.b16 %v2616
    %v4458 = vunpack.c.h.b16 %v2616
    %v4459 = vunpack.c.l.b16 %v2617
    %v4460 = vunpack.c.h.b16 %v2617
    %v4461 = vunpack.c.l.b16 %v2618
    %v4462 = vunpack.c.h.b16 %v2618
    %v4463 = vunpack.c.l.b16 %v2619
    %v4464 = vunpack.c.h.b16 %v2619
    %v4465 = vunpack.c.l.b16 %v2620
    %v4466 = vunpack.c.h.b16 %v2620
    %v4467 = vunpack.c.l.b16 %v2621
    %v4468 = vunpack.c.h.b16 %v2621
    %v4469 = vunpack.c.l.b16 %v2622
    %v4470 = vunpack.c.h.b16 %v2622
    %v4471 = vunpack.c.l.b16 %v2623
    %v4472 = vunpack.c.h.b16 %v2623
    %v4473 = vunpack.c.l.b16 %v2624
    %v4474 = vunpack.c.h.b16 %v2624
    %v4475 = vunpack.c.l.b16 %v2625
    %v4476 = vunpack.c.h.b16 %v2625
    %v4477 = vunpack.c.l.b16 %v2626
    %v4478 = vunpack.c.h.b16 %v2626
    %v4479 = vunpack.c.l.b16 %v2627
    %v4480 = vunpack.c.h.b16 %v2627
    %v4481 = vunpack.c.l.b16 %v2628
    %v4482 = vunpack.c.h.b16 %v2628
    %v4483 = vunpack.c.l.b16 %v2629
    %v4484 = vunpack.c.h.b16 %v2629
    %v4485 = vunpack.c.l.b16 %v2630
    %v4486 = vunpack.c.h.b16 %v2630
    %v4487 = vunpack.c.l.b16 %v2631
    %v4488 = vunpack.c.h.b16 %v2631
    %v4489 = vunpack.c.l.b16 %v2632
    %v4490 = vunpack.c.h.b16 %v2632
    %v4491 = vunpack.c.l.b16 %v2633
    %v4492 = vunpack.c.h.b16 %v2633
    %v4493 = vunpack.c.l.b16 %v2634
    %v4494 = vunpack.c.h.b16 %v2634
    %v4495 = vunpack.c.l.b16 %v2635
    %v4496 = vunpack.c.h.b16 %v2635
    %v4497 = vunpack.c.l.b16 %v2636
    %v4498 = vunpack.c.h.b16 %v2636
    %v4499 = vunpack.c.l.b16 %v2637
    %v4500 = vunpack.c.h.b16 %v2637
    %v4501 = vunpack.c.l.b16 %v2638
    %v4502 = vunpack.c.h.b16 %v2638
    %v4503 = vunpack.c.l.b16 %v2639
    %v4504 = vunpack.c.h.b16 %v2639
    %v4505 = vunpack.c.l.b16 %v2640
    %v4506 = vunpack.c.h.b16 %v2640
    %v4507 = vunpack.c.l.b16 %v2641
    %v4508 = vunpack.c.h.b16 %v2641
    %v4509 = vunpack.c.l.b16 %v2642
    %v4510 = vunpack.c.h.b16 %v2642
    %v4511 = vunpack.c.l.b16 %v2643
    %v4512 = vunpack.c.h.b16 %v2643
    %v4513 = vunpack.c.l.b16 %v2644
    %v4514 = vunpack.c.h.b16 %v2644
    %v4515 = vunpack.c.l.b16 %v2645
    %v4516 = vunpack.c.h.b16 %v2645
    %v4517 = vunpack.c.l.b16 %v2646
    %v4518 = vunpack.c.h.b16 %v2646
    %v4519 = vunpack.c.l.b16 %v2647
    %v4520 = vunpack.c.h.b16 %v2647
    %v4521 = vunpack.c.l.b16 %v2648
    %v4522 = vunpack.c.h.b16 %v2648
    %v4523 = vunpack.c.l.b16 %v2649
    %v4524 = vunpack.c.h.b16 %v2649
    %v4525 = vunpack.c.l.b16 %v2650
    %v4526 = vunpack.c.h.b16 %v2650
    %v4527 = vunpack.c.l.b16 %v2651
    %v4528 = vunpack.c.h.b16 %v2651
    %v4529 = vunpack.c.l.b16 %v2652
    %v4530 = vunpack.c.h.b16 %v2652
    %v4531 = vunpack.c.l.b16 %v2653
    %v4532 = vunpack.c.h.b16 %v2653
    %v4533 = vunpack.c.l.b16 %v2654
    %v4534 = vunpack.c.h.b16 %v2654
    %v4535 = vunpack.c.l.b16 %v2655
    %v4536 = vunpack.c.h.b16 %v2655
    %v4537 = vunpack.c.l.b16 %v2656
    %v4538 = vunpack.c.h.b16 %v2656
    %v4539 = vunpack.c.l.b16 %v2657
    %v4540 = vunpack.c.h.b16 %v2657
    %v4541 = vunpack.c.l.b16 %v2658
    %v4542 = vunpack.c.h.b16 %v2658
    %v4543 = vunpack.c.l.b16 %v2659
    %v4544 = vunpack.c.h.b16 %v2659
    %v4545 = vunpack.c.l.b16 %v2660
    %v4546 = vunpack.c.h.b16 %v2660
    %v4547 = vunpack.c.l.b16 %v2661
    %v4548 = vunpack.c.h.b16 %v2661
    %v4549 = vunpack.c.l.b16 %v2662
    %v4550 = vunpack.c.h.b16 %v2662
    %v4551 = vunpack.c.l.b16 %v2663
    %v4552 = vunpack.c.h.b16 %v2663
    %v4553 = vunpack.c.l.b16 %v2664
    %v4554 = vunpack.c.h.b16 %v2664
    %v4555 = vunpack.c.l.b16 %v2665
    %v4556 = vunpack.c.h.b16 %v2665
    %v4557 = vunpack.c.l.b16 %v2666
    %v4558 = vunpack.c.h.b16 %v2666
    %v4559 = vunpack.c.l.b16 %v2667
    %v4560 = vunpack.c.h.b16 %v2667
    %v4561 = vunpack.c.l.b16 %v2668
    %v4562 = vunpack.c.h.b16 %v2668
    %v4563 = vunpack.c.l.b16 %v2669
    %v4564 = vunpack.c.h.b16 %v2669
    %v4565 = vunpack.c.l.b16 %v2670
    %v4566 = vunpack.c.h.b16 %v2670
    %v4567 = vunpack.c.l.b16 %v2671
    %v4568 = vunpack.c.h.b16 %v2671
    %v4569 = vunpack.c.l.b16 %v2672
    %v4570 = vunpack.c.h.b16 %v2672
    %v4571 = vunpack.c.l.b16 %v2673
    %v4572 = vunpack.c.h.b16 %v2673
    %v4573 = vunpack.c.l.b16 %v2674
    %v4574 = vunpack.c.h.b16 %v2674
    %v4575 = vunpack.c.l.b16 %v2675
    %v4576 = vunpack.c.h.b16 %v2675
    %v4577 = vunpack.c.l.b16 %v2676
    %v4578 = vunpack.c.h.b16 %v2676
    %v4579 = vunpack.c.l.b16 %v2677
    %v4580 = vunpack.c.h.b16 %v2677
    %v4581 = vunpack.c.l.b16 %v2678
    %v4582 = vunpack.c.h.b16 %v2678
    %v4583 = vunpack.c.l.b16 %v2679
    %v4584 = vunpack.c.h.b16 %v2679
    %v4585 = vunpack.c.l.b16 %v2680
    %v4586 = vunpack.c.h.b16 %v2680
    %v4587 = vunpack.c.l.b16 %v2681
    %v4588 = vunpack.c.h.b16 %v2681
    %v4589 = vunpack.c.l.b16 %v2682
    %v4590 = vunpack.c.h.b16 %v2682
    %v4591 = vunpack.c.l.b16 %v2683
    %v4592 = vunpack.c.h.b16 %v2683
    %v4593 = vunpack.c.l.b16 %v2684
    %v4594 = vunpack.c.h.b16 %v2684
    %v4595 = vunpack.c.l.b16 %v2685
    %v4596 = vunpack.c.h.b16 %v2685
    %v4597 = vunpack.c.l.b16 %v2686
    %v4598 = vunpack.c.h.b16 %v2686
    %v4599 = vunpack.c.l.b16 %v2687
    %v4600 = vunpack.c.h.b16 %v2687
    %v4601 = vunpack.c.l.b16 %v2688
    %v4602 = vunpack.c.h.b16 %v2688
    %v4603 = vunpack.c.l.b16 %v2689
    %v4604 = vunpack.c.h.b16 %v2689
    %v4605 = vunpack.c.l.b16 %v2690
    %v4606 = vunpack.c.h.b16 %v2690
    %v4607 = vunpack.c.l.b16 %v2691
    %v4608 = vunpack.c.h.b16 %v2691
    %v4609 = vunpack.c.l.b16 %v2692
    %v4610 = vunpack.c.h.b16 %v2692
    %v4611 = vunpack.c.l.b16 %v2693
    %v4612 = vunpack.c.h.b16 %v2693
    %v4613 = vunpack.c.l.b16 %v2694
    %v4614 = vunpack.c.h.b16 %v2694
    %v4615 = vunpack.c.l.b16 %v2695
    %v4616 = vunpack.c.h.b16 %v2695
    %v4617 = vunpack.c.l.b16 %v2696
    %v4618 = vunpack.c.h.b16 %v2696
    %v4619 = vunpack.c.l.b16 %v2697
    %v4620 = vunpack.c.h.b16 %v2697
    %v4621 = vunpack.c.l.b16 %v2698
    %v4622 = vunpack.c.h.b16 %v2698
    %v4623 = vunpack.c.l.b16 %v2699
    %v4624 = vunpack.c.h.b16 %v2699
    %v4625 = vunpack.c.l.b16 %v2700
    %v4626 = vunpack.c.h.b16 %v2700
    %v4627 = vunpack.c.l.b16 %v2701
    %v4628 = vunpack.c.h.b16 %v2701
    %v4629 = vunpack.c.l.b16 %v2702
    %v4630 = vunpack.c.h.b16 %v2702
    %v4631 = vunpack.c.l.b16 %v2703
    %v4632 = vunpack.c.h.b16 %v2703
    %v4633 = vunpack.c.l.b16 %v2704
    %v4634 = vunpack.c.h.b16 %v2704
    %v4635 = vunpack.c.l.b16 %v2705
    %v4636 = vunpack.c.h.b16 %v2705
    %v4637 = vunpack.c.l.b16 %v2706
    %v4638 = vunpack.c.h.b16 %v2706
    %v4639 = vunpack.c.l.b16 %v2707
    %v4640 = vunpack.c.h.b16 %v2707
    %v4641 = vunpack.c.l.b16 %v2708
    %v4642 = vunpack.c.h.b16 %v2708
    %v4643 = vunpack.c.l.b16 %v2709
    %v4644 = vunpack.c.h.b16 %v2709
    %v4645 = vunpack.c.l.b16 %v2710
    %v4646 = vunpack.c.h.b16 %v2710
    %v4647 = vunpack.c.l.b16 %v2711
    %v4648 = vunpack.c.h.b16 %v2711
    %v4649 = vunpack.c.l.b16 %v2712
    %v4650 = vunpack.c.h.b16 %v2712
    %v4651 = vunpack.c.l.b16 %v2713
    %v4652 = vunpack.c.h.b16 %v2713
    %v4653 = vunpack.c.l.b16 %v2714
    %v4654 = vunpack.c.h.b16 %v2714
    %v4655 = vunpack.c.l.b16 %v2715
    %v4656 = vunpack.c.h.b16 %v2715
    %v4657 = vunpack.c.l.b16 %v2716
    %v4658 = vunpack.c.h.b16 %v2716
    %v4659 = vunpack.c.l.b16 %v2717
    %v4660 = vunpack.c.h.b16 %v2717
    %v4661 = vunpack.c.l.b16 %v2718
    %v4662 = vunpack.c.h.b16 %v2718
    %v4663 = vunpack.c.l.b16 %v2719
    %v4664 = vunpack.c.h.b16 %v2719
    %v4665 = vunpack.c.l.b16 %v2720
    %v4666 = vunpack.c.h.b16 %v2720
    %v4667 = vunpack.c.l.b16 %v2721
    %v4668 = vunpack.c.h.b16 %v2721
    %v4669 = vunpack.c.l.b16 %v2722
    %v4670 = vunpack.c.h.b16 %v2722
    %v4671 = vunpack.c.l.b16 %v2723
    %v4672 = vunpack.c.h.b16 %v2723
    %v4673 = vunpack.c.l.b16 %v2724
    %v4674 = vunpack.c.h.b16 %v2724
    %v4675 = vunpack.c.l.b16 %v2725
    %v4676 = vunpack.c.h.b16 %v2725
    %v4677 = vunpack.c.l.b16 %v2726
    %v4678 = vunpack.c.h.b16 %v2726
    %v4679 = vunpack.c.l.b16 %v2727
    %v4680 = vunpack.c.h.b16 %v2727
    %v4681 = vunpack.c.l.b16 %v2728
    %v4682 = vunpack.c.h.b16 %v2728
    %v4683 = vunpack.c.l.b16 %v2729
    %v4684 = vunpack.c.h.b16 %v2729
    %v4685 = vunpack.c.l.b16 %v2730
    %v4686 = vunpack.c.h.b16 %v2730
    %v4687 = vunpack.c.l.b16 %v2731
    %v4688 = vunpack.c.h.b16 %v2731
    %v4689 = vunpack.c.l.b16 %v2732
    %v4690 = vunpack.c.h.b16 %v2732
    %v4691 = vunpack.c.l.b16 %v2733
    %v4692 = vunpack.c.h.b16 %v2733
    %v4693 = vunpack.c.l.b16 %v2734
    %v4694 = vunpack.c.h.b16 %v2734
    %v4695 = vunpack.c.l.b16 %v2735
    %v4696 = vunpack.c.h.b16 %v2735
    %v4697 = vunpack.c.l.b16 %v2736
    %v4698 = vunpack.c.h.b16 %v2736
    %v4699 = vunpack.c.l.b16 %v2737
    %v4700 = vunpack.c.h.b16 %v2737
    %v4701 = vunpack.c.l.b16 %v2738
    %v4702 = vunpack.c.h.b16 %v2738
    %v4703 = vunpack.c.l.b16 %v2739
    %v4704 = vunpack.c.h.b16 %v2739
    %v4705 = vunpack.c.l.b16 %v2740
    %v4706 = vunpack.c.h.b16 %v2740
    %v4707 = vunpack.c.l.b16 %v2741
    %v4708 = vunpack.c.h.b16 %v2741
    %v4709 = vunpack.c.l.b16 %v2742
    %v4710 = vunpack.c.h.b16 %v2742
    %v4711 = vunpack.c.l.b16 %v2743
    %v4712 = vunpack.c.h.b16 %v2743
    %v4713 = vunpack.c.l.b16 %v2744
    %v4714 = vunpack.c.h.b16 %v2744
    %v4715 = vunpack.c.l.b16 %v2745
    %v4716 = vunpack.c.h.b16 %v2745
    %v4717 = vunpack.c.l.b16 %v2746
    %v4718 = vunpack.c.h.b16 %v2746
    %v4719 = vunpack.c.l.b16 %v2747
    %v4720 = vunpack.c.h.b16 %v2747
    %v4721 = vunpack.c.l.b16 %v2748
    %v4722 = vunpack.c.h.b16 %v2748
    %v4723 = vunpack.c.l.b16 %v2749
    %v4724 = vunpack.c.h.b16 %v2749
    %v4725 = vunpack.c.l.b16 %v2750
    %v4726 = vunpack.c.h.b16 %v2750
    %v4727 = vunpack.c.l.b16 %v2751
    %v4728 = vunpack.c.h.b16 %v2751
    %v4729 = vunpack.c.l.b16 %v2752
    %v4730 = vunpack.c.h.b16 %v2752
    %v4731 = vunpack.c.l.b16 %v2753
    %v4732 = vunpack.c.h.b16 %v2753
    %v4733 = vunpack.c.l.b16 %v2754
    %v4734 = vunpack.c.h.b16 %v2754
    %v4735 = vunpack.c.l.b16 %v2755
    %v4736 = vunpack.c.h.b16 %v2755
    %v4737 = vunpack.c.l.b16 %v2756
    %v4738 = vunpack.c.h.b16 %v2756
    %v4739 = vunpack.c.l.b16 %v2757
    %v4740 = vunpack.c.h.b16 %v2757
    %v4741 = vunpack.c.l.b16 %v2758
    %v4742 = vunpack.c.h.b16 %v2758
    %v4743 = vunpack.c.l.b16 %v2759
    %v4744 = vunpack.c.h.b16 %v2759
    %v4745 = vunpack.c.l.b16 %v2760
    %v4746 = vunpack.c.h.b16 %v2760
    %v4747 = vunpack.c.l.b16 %v2761
    %v4748 = vunpack.c.h.b16 %v2761
    %v4749 = vunpack.c.l.b16 %v2762
    %v4750 = vunpack.c.h.b16 %v2762
    %v4751 = vunpack.c.l.b16 %v2763
    %v4752 = vunpack.c.h.b16 %v2763
    %v4753 = vunpack.c.l.b16 %v2764
    %v4754 = vunpack.c.h.b16 %v2764
    %v4755 = vunpack.c.l.b16 %v2765
    %v4756 = vunpack.c.h.b16 %v2765
    %v4757 = vunpack.c.l.b16 %v2766
    %v4758 = vunpack.c.h.b16 %v2766
    %v4759 = vunpack.c.l.b16 %v2767
    %v4760 = vunpack.c.h.b16 %v2767
    %v4761 = vunpack.c.l.b16 %v2768
    %v4762 = vunpack.c.h.b16 %v2768
    %v4763 = vunpack.c.l.b16 %v2769
    %v4764 = vunpack.c.h.b16 %v2769
    %v4765 = vunpack.c.l.b16 %v2770
    %v4766 = vunpack.c.h.b16 %v2770
    %v4767 = vunpack.c.l.b16 %v2771
    %v4768 = vunpack.c.h.b16 %v2771
    %v4769 = vunpack.c.l.b16 %v2772
    %v4770 = vunpack.c.h.b16 %v2772
    %v4771 = vunpack.c.l.b16 %v2773
    %v4772 = vunpack.c.h.b16 %v2773
    %v4773 = vunpack.c.l.b16 %v2774
    %v4774 = vunpack.c.h.b16 %v2774
    %v4775 = vunpack.c.l.b16 %v2775
    %v4776 = vunpack.c.h.b16 %v2775
    %v4777 = vunpack.c.l.b16 %v2776
    %v4778 = vunpack.c.h.b16 %v2776
    %v4779 = vunpack.c.l.b16 %v2777
    %v4780 = vunpack.c.h.b16 %v2777
    %v4781 = vunpack.c.l.b16 %v2778
    %v4782 = vunpack.c.h.b16 %v2778
    %v4783 = vunpack.c.l.b16 %v2779
    %v4784 = vunpack.c.h.b16 %v2779
    %v4785 = vunpack.c.l.b16 %v2780
    %v4786 = vunpack.c.h.b16 %v2780
    %v4787 = vunpack.c.l.b16 %v2781
    %v4788 = vunpack.c.h.b16 %v2781
    %v4789 = vunpack.c.l.b16 %v2782
    %v4790 = vunpack.c.h.b16 %v2782
    %v4791 = vunpack.c.l.b16 %v2783
    %v4792 = vunpack.c.h.b16 %v2783
    %v4793 = vunpack.c.l.b16 %v2784
    %v4794 = vunpack.c.h.b16 %v2784
    %v4795 = vunpack.c.l.b16 %v2785
    %v4796 = vunpack.c.h.b16 %v2785
    %v4797 = vunpack.c.l.b16 %v2786
    %v4798 = vunpack.c.h.b16 %v2786
    %v4799 = vunpack.c.l.b16 %v2787
    %v4800 = vunpack.c.h.b16 %v2787
    %v4801 = vunpack.c.l.b16 %v2788
    %v4802 = vunpack.c.h.b16 %v2788
    %v4803 = vunpack.c.l.b16 %v2789
    %v4804 = vunpack.c.h.b16 %v2789
    %v4805 = vunpack.c.l.b16 %v2790
    %v4806 = vunpack.c.h.b16 %v2790
    %v4807 = vunpack.c.l.b16 %v2791
    %v4808 = vunpack.c.h.b16 %v2791
    %v4809 = vunpack.c.l.b16 %v2792
    %v4810 = vunpack.c.h.b16 %v2792
    %v4811 = vunpack.c.l.b16 %v2793
    %v4812 = vunpack.c.h.b16 %v2793
    %v4813 = vunpack.c.l.b16 %v2794
    %v4814 = vunpack.c.h.b16 %v2794
    %v4815 = vunpack.c.l.b16 %v2795
    %v4816 = vunpack.c.h.b16 %v2795
    %v4817 = vunpack.c.l.b16 %v2796
    %v4818 = vunpack.c.h.b16 %v2796
    %v4819 = vunpack.c.l.b16 %v2797
    %v4820 = vunpack.c.h.b16 %v2797
    %v4821 = vunpack.c.l.b16 %v2798
    %v4822 = vunpack.c.h.b16 %v2798
    %v4823 = vunpack.c.l.b16 %v2799
    %v4824 = vunpack.c.h.b16 %v2799
    %v4825 = vunpack.c.l.b16 %v2800
    %v4826 = vunpack.c.h.b16 %v2800
    %v4827 = vunpack.c.l.b16 %v2801
    %v4828 = vunpack.c.h.b16 %v2801
    %v4829 = vunpack.c.l.b16 %v2802
    %v4830 = vunpack.c.h.b16 %v2802
    %v4831 = vunpack.c.l.b16 %v2803
    %v4832 = vunpack.c.h.b16 %v2803
    %v4833 = vunpack.c.l.b16 %v2804
    %v4834 = vunpack.c.h.b16 %v2804
    %v4835 = vunpack.c.l.b16 %v2805
    %v4836 = vunpack.c.h.b16 %v2805
    %v4837 = vunpack.c.l.b16 %v2806
    %v4838 = vunpack.c.h.b16 %v2806
    %v4839 = vunpack.c.l.b16 %v2807
    %v4840 = vunpack.c.h.b16 %v2807
    %v4841 = vunpack.c.l.b16 %v2808
    %v4842 = vunpack.c.h.b16 %v2808
    %v4843 = vunpack.c.l.b16 %v2809
    %v4844 = vunpack.c.h.b16 %v2809
    %v4845 = vunpack.c.l.b16 %v2810
    %v4846 = vunpack.c.h.b16 %v2810
    %v4847 = vunpack.c.l.b16 %v2811
    %v4848 = vunpack.c.h.b16 %v2811
    %v4849 = vunpack.c.l.b16 %v2812
    %v4850 = vunpack.c.h.b16 %v2812
    %v4851 = vunpack.c.l.b16 %v2813
    %v4852 = vunpack.c.h.b16 %v2813
    %v4853 = vunpack.c.l.b16 %v2814
    %v4854 = vunpack.c.h.b16 %v2814
    %v4855 = vunpack.c.l.b16 %v2815
    %v4856 = vunpack.c.h.b16 %v2815
    %v4857 = vunpack.c.l.b16 %v2816
    %v4858 = vunpack.c.h.b16 %v2816
    %v4859 = vunpack.c.l.b16 %v2817
    %v4860 = vunpack.c.h.b16 %v2817
    %v4861 = vunpack.c.l.b16 %v2818
    %v4862 = vunpack.c.h.b16 %v2818
    %v4863 = vunpack.c.l.b16 %v2819
    %v4864 = vunpack.c.h.b16 %v2819
    %v4865 = vunpack.c.l.b16 %v2820
    %v4866 = vunpack.c.h.b16 %v2820
    %v4867 = vunpack.c.l.b16 %v2821
    %v4868 = vunpack.c.h.b16 %v2821
    %v4869 = vunpack.c.l.b16 %v2822
    %v4870 = vunpack.c.h.b16 %v2822
    %v4871 = vpack.c.b16 %v4233, %v4231
    %v4872 = vpack.c.b16 %v4234, %v4232
    %v4873 = vpack.c.b16 %v4237, %v4235
    %v4874 = vpack.c.b16 %v4238, %v4236
    %v4875 = vpack.c.b16 %v4241, %v4239
    %v4876 = vpack.c.b16 %v4242, %v4240
    %v4877 = vpack.c.b16 %v4245, %v4243
    %v4878 = vpack.c.b16 %v4246, %v4244
    %v4879 = vpack.c.b16 %v4249, %v4247
    %v4880 = vpack.c.b16 %v4250, %v4248
    %v4881 = vpack.c.b16 %v4253, %v4251
    %v4882 = vpack.c.b16 %v4254, %v4252
    %v4883 = vpack.c.b16 %v4257, %v4255
    %v4884 = vpack.c.b16 %v4258, %v4256
    %v4885 = vpack.c.b16 %v4261, %v4259
    %v4886 = vpack.c.b16 %v4262, %v4260
    %v4887 = vpack.c.b16 %v4265, %v4263
    %v4888 = vpack.c.b16 %v4266, %v4264
    %v4889 = vpack.c.b16 %v4269, %v4267
    %v4890 = vpack.c.b16 %v4270, %v4268
    %v4891 = vpack.c.b16 %v4273, %v4271
    %v4892 = vpack.c.b16 %v4274, %v4272
    %v4893 = vpack.c.b16 %v4277, %v4275
    %v4894 = vpack.c.b16 %v4278, %v4276
    %v4895 = vpack.c.b16 %v4281, %v4279
    %v4896 = vpack.c.b16 %v4282, %v4280
    %v4897 = vpack.c.b16 %v4285, %v4283
    %v4898 = vpack.c.b16 %v4286, %v4284
    %v4899 = vpack.c.b16 %v4289, %v4287
    %v4900 = vpack.c.b16 %v4290, %v4288
    %v4901 = vpack.c.b16 %v4293, %v4291
    %v4902 = vpack.c.b16 %v4294, %v4292
    %v4903 = vpack.c.b16 %v4297, %v4295
    %v4904 = vpack.c.b16 %v4298, %v4296
    %v4905 = vpack.c.b16 %v4301, %v4299
    %v4906 = vpack.c.b16 %v4302, %v4300
    %v4907 = vpack.c.b16 %v4305, %v4303
    %v4908 = vpack.c.b16 %v4306, %v4304
    %v4909 = vpack.c.b16 %v4309, %v4307
    %v4910 = vpack.c.b16 %v4310, %v4308
    %v4911 = vpack.c.b16 %v4313, %v4311
    %v4912 = vpack.c.b16 %v4314, %v4312
    %v4913 = vpack.c.b16 %v4317, %v4315
    %v4914 = vpack.c.b16 %v4318, %v4316
    %v4915 = vpack.c.b16 %v4321, %v4319
    %v4916 = vpack.c.b16 %v4322, %v4320
    %v4917 = vpack.c.b16 %v4325, %v4323
    %v4918 = vpack.c.b16 %v4326, %v4324
    %v4919 = vpack.c.b16 %v4329, %v4327
    %v4920 = vpack.c.b16 %v4330, %v4328
    %v4921 = vpack.c.b16 %v4333, %v4331
    %v4922 = vpack.c.b16 %v4334, %v4332
    %v4923 = vpack.c.b16 %v4337, %v4335
    %v4924 = vpack.c.b16 %v4338, %v4336
    %v4925 = vpack.c.b16 %v4341, %v4339
    %v4926 = vpack.c.b16 %v4342, %v4340
    %v4927 = vpack.c.b16 %v4345, %v4343
    %v4928 = vpack.c.b16 %v4346, %v4344
    %v4929 = vpack.c.b16 %v4349, %v4347
    %v4930 = vpack.c.b16 %v4350, %v4348
    %v4931 = vpack.c.b16 %v4353, %v4351
    %v4932 = vpack.c.b16 %v4354, %v4352
    %v4933 = vpack.c.b16 %v4357, %v4355
    %v4934 = vpack.c.b16 %v4358, %v4356
    %v4935 = vpack.c.b16 %v4361, %v4359
    %v4936 = vpack.c.b16 %v4362, %v4360
    %v4937 = vpack.c.b16 %v4365, %v4363
    %v4938 = vpack.c.b16 %v4366, %v4364
    %v4939 = vpack.c.b16 %v4369, %v4367
    %v4940 = vpack.c.b16 %v4370, %v4368
    %v4941 = vpack.c.b16 %v4373, %v4371
    %v4942 = vpack.c.b16 %v4374, %v4372
    %v4943 = vpack.c.b16 %v4377, %v4375
    %v4944 = vpack.c.b16 %v4378, %v4376
    %v4945 = vpack.c.b16 %v4381, %v4379
    %v4946 = vpack.c.b16 %v4382, %v4380
    %v4947 = vpack.c.b16 %v4385, %v4383
    %v4948 = vpack.c.b16 %v4386, %v4384
    %v4949 = vpack.c.b16 %v4389, %v4387
    %v4950 = vpack.c.b16 %v4390, %v4388
    %v4951 = vpack.c.b16 %v4393, %v4391
    %v4952 = vpack.c.b16 %v4394, %v4392
    %v4953 = vpack.c.b16 %v4397, %v4395
    %v4954 = vpack.c.b16 %v4398, %v4396
    %v4955 = vpack.c.b16 %v4401, %v4399
    %v4956 = vpack.c.b16 %v4402, %v4400
    %v4957 = vpack.c.b16 %v4405, %v4403
    %v4958 = vpack.c.b16 %v4406, %v4404
    %v4959 = vpack.c.b16 %v4409, %v4407
    %v4960 = vpack.c.b16 %v4410, %v4408
    %v4961 = vpack.c.b16 %v4413, %v4411
    %v4962 = vpack.c.b16 %v4414, %v4412
    %v4963 = vpack.c.b16 %v4417, %v4415
    %v4964 = vpack.c.b16 %v4418, %v4416
    %v4965 = vpack.c.b16 %v4421, %v4419
    %v4966 = vpack.c.b16 %v4422, %v4420
    %v4967 = vpack.c.b16 %v4425, %v4423
    %v4968 = vpack.c.b16 %v4426, %v4424
    %v4969 = vpack.c.b16 %v4429, %v4427
    %v4970 = vpack.c.b16 %v4430, %v4428
    %v4971 = vpack.c.b16 %v4433, %v4431
    %v4972 = vpack.c.b16 %v4434, %v4432
    %v4973 = vpack.c.b16 %v4437, %v4435
    %v4974 = vpack.c.b16 %v4438, %v4436
    %v4975 = vpack.c.b16 %v4441, %v4439
    %v4976 = vpack.c.b16 %v4442, %v4440
    %v4977 = vpack.c.b16 %v4445, %v4443
    %v4978 = vpack.c.b16 %v4446, %v4444
    %v4979 = vpack.c.b16 %v4449, %v4447
    %v4980 = vpack.c.b16 %v4450, %v4448
    %v4981 = vpack.c.b16 %v4453, %v4451
    %v4982 = vpack.c.b16 %v4454, %v4452
    %v4983 = vpack.c.b16 %v4457, %v4455
    %v4984 = vpack.c.b16 %v4458, %v4456
    %v4985 = vpack.c.b16 %v4461, %v4459
    %v4986 = vpack.c.b16 %v4462, %v4460
    %v4987 = vpack.c.b16 %v4465, %v4463
    %v4988 = vpack.c.b16 %v4466, %v4464
    %v4989 = vpack.c.b16 %v4469, %v4467
    %v4990 = vpack.c.b16 %v4470, %v4468
    %v4991 = vpack.c.b16 %v4473, %v4471
    %v4992 = vpack.c.b16 %v4474, %v4472
    %v4993 = vpack.c.b16 %v4477, %v4475
    %v4994 = vpack.c.b16 %v4478, %v4476
    %v4995 = vpack.c.b16 %v4481, %v4479
    %v4996 = vpack.c.b16 %v4482, %v4480
    %v4997 = vpack.c.b16 %v4485, %v4483
    %v4998 = vpack.c.b16 %v4486, %v4484
    %v4999 = vpack.c.b16 %v4489, %v4487
    %v5000 = vpack.c.b16 %v4490, %v4488
    %v5001 = vpack.c.b16 %v4493, %v4491
    %v5002 = vpack.c.b16 %v4494, %v4492
    %v5003 = vpack.c.b16 %v4497, %v4495
    %v5004 = vpack.c.b16 %v4498, %v4496
    %v5005 = vpack.c.b16 %v4501, %v4499
    %v5006 = vpack.c.b16 %v4502, %v4500
    %v5007 = vpack.c.b16 %v4505, %v4503
    %v5008 = vpack.c.b16 %v4506, %v4504
    %v5009 = vpack.c.b16 %v4509, %v4507
    %v5010 = vpack.c.b16 %v4510, %v4508
    %v5011 = vpack.c.b16 %v4513, %v4511
    %v5012 = vpack.c.b16 %v4514, %v4512
    %v5013 = vpack.c.b16 %v4517, %v4515
    %v5014 = vpack.c.b16 %v4518, %v4516
    %v5015 = vpack.c.b16 %v4521, %v4519
    %v5016 = vpack.c.b16 %v4522, %v4520
    %v5017 = vpack.c.b16 %v4525, %v4523
    %v5018 = vpack.c.b16 %v4526, %v4524
    %v5019 = vpack.c.b16 %v4529, %v4527
    %v5020 = vpack.c.b16 %v4530, %v4528
    %v5021 = vpack.c.b16 %v4533, %v4531
    %v5022 = vpack.c.b16 %v4534, %v4532
    %v5023 = vpack.c.b16 %v4537, %v4535
    %v5024 = vpack.c.b16 %v4538, %v4536
    %v5025 = vpack.c.b16 %v4541, %v4539
    %v5026 = vpack.c.b16 %v4542, %v4540
    %v5027 = vpack.c.b16 %v4545, %v4543
    %v5028 = vpack.c.b16 %v4546, %v4544
    %v5029 = vpack.c.b16 %v4549, %v4547
    %v5030 = vpack.c.b16 %v4550, %v4548
    %v5031 = vpack.c.b16 %v4553, %v4551
    %v5032 = vpack.c.b16 %v4554, %v4552
    %v5033 = vpack.c.b16 %v4557, %v4555
    %v5034 = vpack.c.b16 %v4558, %v4556
    %v5035 = vpack.c.b16 %v4561, %v4559
    %v5036 = vpack.c.b16 %v4562, %v4560
    %v5037 = vpack.c.b16 %v4565, %v4563
    %v5038 = vpack.c.b16 %v4566, %v4564
    %v5039 = vpack.c.b16 %v4569, %v4567
    %v5040 = vpack.c.b16 %v4570, %v4568
    %v5041 = vpack.c.b16 %v4573, %v4571
    %v5042 = vpack.c.b16 %v4574, %v4572
    %v5043 = vpack.c.b16 %v4577, %v4575
    %v5044 = vpack.c.b16 %v4578, %v4576
    %v5045 = vpack.c.b16 %v4581, %v4579
    %v5046 = vpack.c.b16 %v4582, %v4580
    %v5047 = vpack.c.b16 %v4585, %v4583
    %v5048 = vpack.c.b16 %v4586, %v4584
    %v5049 = vpack.c.b16 %v4589, %v4587
    %v5050 = vpack.c.b16 %v4590, %v4588
    %v5051 = vpack.c.b16 %v4593, %v4591
    %v5052 = vpack.c.b16 %v4594, %v4592
    %v5053 = vpack.c.b16 %v4597, %v4595
    %v5054 = vpack.c.b16 %v4598, %v4596
    %v5055 = vpack.c.b16 %v4601, %v4599
    %v5056 = vpack.c.b16 %v4602, %v4600
    %v5057 = vpack.c.b16 %v4605, %v4603
    %v5058 = vpack.c.b16 %v4606, %v4604
    %v5059 = vpack.c.b16 %v4609, %v4607
    %v5060 = vpack.c.b16 %v4610, %v4608
    %v5061 = vpack.c.b16 %v4613, %v4611
    %v5062 = vpack.c.b16 %v4614, %v4612
    %v5063 = vpack.c.b16 %v4617, %v4615
    %v5064 = vpack.c.b16 %v4618, %v4616
    %v5065 = vpack.c.b16 %v4621, %v4619
    %v5066 = vpack.c.b16 %v4622, %v4620
    %v5067 = vpack.c.b16 %v4625, %v4623
    %v5068 = vpack.c.b16 %v4626, %v4624
    %v5069 = vpack.c.b16 %v4629, %v4627
    %v5070 = vpack.c.b16 %v4630, %v4628
    %v5071 = vpack.c.b16 %v4633, %v4631
    %v5072 = vpack.c.b16 %v4634, %v4632
    %v5073 = vpack.c.b16 %v4637, %v4635
    %v5074 = vpack.c.b16 %v4638, %v4636
    %v5075 = vpack.c.b16 %v4641, %v4639
    %v5076 = vpack.c.b16 %v4642, %v4640
    %v5077 = vpack.c.b16 %v4645, %v4643
    %v5078 = vpack.c.b16 %v4646, %v4644
    %v5079 = vpack.c.b16 %v4649, %v4647
    %v5080 = vpack.c.b16 %v4650, %v4648
    %v5081 = vpack.c.b16 %v4653, %v4651
    %v5082 = vpack.c.b16 %v4654, %v4652
    %v5083 = vpack.c.b16 %v4657, %v4655
    %v5084 = vpack.c.b16 %v4658, %v4656
    %v5085 = vpack.c.b16 %v4661, %v4659
    %v5086 = vpack.c.b16 %v4662, %v4660
    %v5087 = vpack.c.b16 %v4665, %v4663
    %v5088 = vpack.c.b16 %v4666, %v4664
    %v5089 = vpack.c.b16 %v4669, %v4667
    %v5090 = vpack.c.b16 %v4670, %v4668
    %v5091 = vpack.c.b16 %v4673, %v4671
    %v5092 = vpack.c.b16 %v4674, %v4672
    %v5093 = vpack.c.b16 %v4677, %v4675
    %v5094 = vpack.c.b16 %v4678, %v4676
    %v5095 = vpack.c.b16 %v4681, %v4679
    %v5096 = vpack.c.b16 %v4682, %v4680
    %v5097 = vpack.c.b16 %v4685, %v4683
    %v5098 = vpack.c.b16 %v4686, %v4684
    %v5099 = vpack.c.b16 %v4689, %v4687
    %v5100 = vpack.c.b16 %v4690, %v4688
    %v5101 = vpack.c.b16 %v4693, %v4691
    %v5102 = vpack.c.b16 %v4694, %v4692
    %v5103 = vpack.c.b16 %v4697, %v4695
    %v5104 = vpack.c.b16 %v4698, %v4696
    %v5105 = vpack.c.b16 %v4701, %v4699
    %v5106 = vpack.c.b16 %v4702, %v4700
    %v5107 = vpack.c.b16 %v4705, %v4703
    %v5108 = vpack.c.b16 %v4706, %v4704
    %v5109 = vpack.c.b16 %v4709, %v4707
    %v5110 = vpack.c.b16 %v4710, %v4708
    %v5111 = vpack.c.b16 %v4713, %v4711
    %v5112 = vpack.c.b16 %v4714, %v4712
    %v5113 = vpack.c.b16 %v4717, %v4715
    %v5114 = vpack.c.b16 %v4718, %v4716
    %v5115 = vpack.c.b16 %v4721, %v4719
    %v5116 = vpack.c.b16 %v4722, %v4720
    %v5117 = vpack.c.b16 %v4725, %v4723
    %v5118 = vpack.c.b16 %v4726, %v4724
    %v5119 = vpack.c.b16 %v4729, %v4727
    %v5120 = vpack.c.b16 %v4730, %v4728
    %v5121 = vpack.c.b16 %v4733, %v4731
    %v5122 = vpack.c.b16 %v4734, %v4732
    %v5123 = vpack.c.b16 %v4737, %v4735
    %v5124 = vpack.c.b16 %v4738, %v4736
    %v5125 = vpack.c.b16 %v4741, %v4739
    %v5126 = vpack.c.b16 %v4742, %v4740
    %v5127 = vpack.c.b16 %v4745, %v4743
    %v5128 = vpack.c.b16 %v4746, %v4744
    %v5129 = vpack.c.b16 %v4749, %v4747
    %v5130 = vpack.c.b16 %v4750, %v4748
    %v5131 = vpack.c.b16 %v4753, %v4751
    %v5132 = vpack.c.b16 %v4754, %v4752
    %v5133 = vpack.c.b16 %v4757, %v4755
    %v5134 = vpack.c.b16 %v4758, %v4756
    %v5135 = vpack.c.b16 %v4761, %v4759
    %v5136 = vpack.c.b16 %v4762, %v4760
    %v5137 = vpack.c.b16 %v4765, %v4763
    %v5138 = vpack.c.b16 %v4766, %v4764
    %v5139 = vpack.c.b16 %v4769, %v4767
    %v5140 = vpack.c.b16 %v4770, %v4768
    %v5141 = vpack.c.b16 %v4773, %v4771
    %v5142 = vpack.c.b16 %v4774, %v4772
    %v5143 = vpack.c.b16 %v4777, %v4775
    %v5144 = vpack.c.b16 %v4778, %v4776
    %v5145 = vpack.c.b16 %v4781, %v4779
    %v5146 = vpack.c.b16 %v4782, %v4780
    %v5147 = vpack.c.b16 %v4785, %v4783
    %v5148 = vpack.c.b16 %v4786, %v4784
    %v5149 = vpack.c.b16 %v4789, %v4787
    %v5150 = vpack.c.b16 %v4790, %v4788
    %v5151 = vpack.c.b16 %v4793, %v4791
    %v5152 = vpack.c.b16 %v4794, %v4792
    %v5153 = vpack.c.b16 %v4797, %v4795
    %v5154 = vpack.c.b16 %v4798, %v4796
    %v5155 = vpack.c.b16 %v4801, %v4799
    %v5156 = vpack.c.b16 %v4802, %v4800
    %v5157 = vpack.c.b16 %v4805, %v4803
    %v5158 = vpack.c.b16 %v4806, %v4804
    %v5159 = vpack.c.b16 %v4809, %v4807
    %v5160 = vpack.c.b16 %v4810, %v4808
    %v5161 = vpack.c.b16 %v4813, %v4811
    %v5162 = vpack.c.b16 %v4814, %v4812
    %v5163 = vpack.c.b16 %v4817, %v4815
    %v5164 = vpack.c.b16 %v4818, %v4816
    %v5165 = vpack.c.b16 %v4821, %v4819
    %v5166 = vpack.c.b16 %v4822, %v4820
    %v5167 = vpack.c.b16 %v4825, %v4823
    %v5168 = vpack.c.b16 %v4826, %v4824
    %v5169 = vpack.c.b16 %v4829, %v4827
    %v5170 = vpack.c.b16 %v4830, %v4828
    %v5171 = vpack.c.b16 %v4833, %v4831
    %v5172 = vpack.c.b16 %v4834, %v4832
    %v5173 = vpack.c.b16 %v4837, %v4835
    %v5174 = vpack.c.b16 %v4838, %v4836
    %v5175 = vpack.c.b16 %v4841, %v4839
    %v5176 = vpack.c.b16 %v4842, %v4840
    %v5177 = vpack.c.b16 %v4845, %v4843
    %v5178 = vpack.c.b16 %v4846, %v4844
    %v5179 = vpack.c.b16 %v4849, %v4847
    %v5180 = vpack.c.b16 %v4850, %v4848
    %v5181 = vpack.c.b16 %v4853, %v4851
    %v5182 = vpack.c.b16 %v4854, %v4852
    %v5183 = vpack.c.b16 %v4857, %v4855
    %v5184 = vpack.c.b16 %v4858, %v4856
    %v5185 = vpack.c.b16 %v4861, %v4859
    %v5186 = vpack.c.b16 %v4862, %v4860
    %v5187 = vpack.c.b16 %v4865, %v4863
    %v5188 = vpack.c.b16 %v4866, %v4864
    %v5189 = vpack.c.b16 %v4869, %v4867
    %v5190 = vpack.c.b16 %v4870, %v4868
    %5511 = vmatprep.subr.bf16.mxu0 %v4886
    %5512 = vmatpush1.bf16.msra.mxu0 %v4885
    %5513 = vmatprep.subr.bf16.mxu0 %v4884
    %5514 = vmatpush1.bf16.msra.mxu0 %v4883
    %5515 = vmatprep.subr.bf16.mxu0 %v4882
    %5516 = vmatpush1.bf16.msra.mxu0 %v4881
    %5517 = vmatprep.subr.bf16.mxu0 %v4880
    %5518 = vmatpush1.bf16.msra.mxu0 %v4879
    %5519 = vmatprep.subr.bf16.mxu0 %v4878
    %5520 = vmatpush1.bf16.msra.mxu0 %v4877
    %5521 = vmatprep.subr.bf16.mxu0 %v4876
    %5522 = vmatpush1.bf16.msra.mxu0 %v4875
    %5523 = vmatprep.subr.bf16.mxu0 %v4874
    %5524 = vmatpush1.bf16.msra.mxu0 %v4873
    %5525 = vmatprep.subr.bf16.mxu0 %v4872
    %5526 = vmatpush1.bf16.msra.mxu0 %v4871
    %5527 = vmatprep.subr.bf16.mxu0 %v4902
    %5528 = vmatpush2.bf16.msra.mxu0 %v4901
    %5529 = vmatprep.subr.bf16.mxu0 %v4900
    %5530 = vmatpush2.bf16.msra.mxu0 %v4899
    %5531 = vmatprep.subr.bf16.mxu0 %v4898
    %5532 = vmatpush2.bf16.msra.mxu0 %v4897
    %5533 = vmatprep.subr.bf16.mxu0 %v4896
    %5534 = vmatpush2.bf16.msra.mxu0 %v4895
    %5535 = vmatprep.subr.bf16.mxu0 %v4894
    %5536 = vmatpush2.bf16.msra.mxu0 %v4893
    %5537 = vmatprep.subr.bf16.mxu0 %v4892
    %5538 = vmatpush2.bf16.msra.mxu0 %v4891
    %5539 = vmatprep.subr.bf16.mxu0 %v4890
    %5540 = vmatpush2.bf16.msra.mxu0 %v4889
    %5541 = vmatprep.subr.bf16.mxu0 %v4888
    %5542 = vmatpush2.bf16.msra.mxu0 %v4887
    %5543 = vmatprep.mubr.bf16.mxu0 %v2484
    %5544 = vmatmul.mubr.bf16.gmra.mxu0 %v2483
    %v5545 = vpop.f32.mrf.mxu0
    %v5546 = vadd.f32 %v3903, %v5545
    %v5547 = vpop.f32.mrf.mxu0
    %v5548 = vadd.f32 %v3905, %v5547
    %v5549 = vpop.f32.mrf.mxu0
    %v5550 = vadd.f32 %v3907, %v5549
    %v5551 = vpop.f32.mrf.mxu0
    %v5552 = vadd.f32 %v3909, %v5551
    %5553 = vdwg.mxu0
    %5554 = vmatprep.subr.bf16.mxu0 %v4918
    %5555 = vmatpush1.bf16.msra.mxu0 %v4917
    %5556 = vmatprep.subr.bf16.mxu0 %v4916
    %5557 = vmatpush1.bf16.msra.mxu0 %v4915
    %5558 = vmatprep.subr.bf16.mxu0 %v4914
    %5559 = vmatpush1.bf16.msra.mxu0 %v4913
    %5560 = vmatprep.subr.bf16.mxu0 %v4912
    %5561 = vmatpush1.bf16.msra.mxu0 %v4911
    %5562 = vmatprep.subr.bf16.mxu0 %v4910
    %5563 = vmatpush1.bf16.msra.mxu0 %v4909
    %5564 = vmatprep.subr.bf16.mxu0 %v4908
    %5565 = vmatpush1.bf16.msra.mxu0 %v4907
    %5566 = vmatprep.subr.bf16.mxu0 %v4906
    %5567 = vmatpush1.bf16.msra.mxu0 %v4905
    %5568 = vmatprep.subr.bf16.mxu0 %v4904
    %5569 = vmatpush1.bf16.msra.mxu0 %v4903
    %5570 = vmatprep.subr.bf16.mxu0 %v4934
    %5571 = vmatpush2.bf16.msra.mxu0 %v4933
    %5572 = vmatprep.subr.bf16.mxu0 %v4932
    %5573 = vmatpush2.bf16.msra.mxu0 %v4931
    %5574 = vmatprep.subr.bf16.mxu0 %v4930
    %5575 = vmatpush2.bf16.msra.mxu0 %v4929
    %5576 = vmatprep.subr.bf16.mxu0 %v4928
    %5577 = vmatpush2.bf16.msra.mxu0 %v4927
    %5578 = vmatprep.subr.bf16.mxu0 %v4926
    %5579 = vmatpush2.bf16.msra.mxu0 %v4925
    %5580 = vmatprep.subr.bf16.mxu0 %v4924
    %5581 = vmatpush2.bf16.msra.mxu0 %v4923
    %5582 = vmatprep.subr.bf16.mxu0 %v4922
    %5583 = vmatpush2.bf16.msra.mxu0 %v4921
    %5584 = vmatprep.subr.bf16.mxu0 %v4920
    %5585 = vmatpush2.bf16.msra.mxu0 %v4919
    %5586 = vmatprep.mubr.bf16.mxu0 %v2486
    %5587 = vmatmul.mubr.bf16.gmra.mxu0 %v2485
    %v5588 = vpop.f32.mrf.mxu0
    %v5589 = vadd.f32 %v5546, %v5588
    %v5590 = vpop.f32.mrf.mxu0
    %v5591 = vadd.f32 %v5548, %v5590
    %v5592 = vpop.f32.mrf.mxu0
    %v5593 = vadd.f32 %v5550, %v5592
    %v5594 = vpop.f32.mrf.mxu0
    %v5595 = vadd.f32 %v5552, %v5594
    %5596 = vdwg.mxu0
    %5597 = vmatprep.subr.bf16.mxu0 %v4950
    %5598 = vmatpush1.bf16.msra.mxu0 %v4949
    %5599 = vmatprep.subr.bf16.mxu0 %v4948
    %5600 = vmatpush1.bf16.msra.mxu0 %v4947
    %5601 = vmatprep.subr.bf16.mxu0 %v4946
    %5602 = vmatpush1.bf16.msra.mxu0 %v4945
    %5603 = vmatprep.subr.bf16.mxu0 %v4944
    %5604 = vmatpush1.bf16.msra.mxu0 %v4943
    %5605 = vmatprep.subr.bf16.mxu0 %v4942
    %5606 = vmatpush1.bf16.msra.mxu0 %v4941
    %5607 = vmatprep.subr.bf16.mxu0 %v4940
    %5608 = vmatpush1.bf16.msra.mxu0 %v4939
    %5609 = vmatprep.subr.bf16.mxu0 %v4938
    %5610 = vmatpush1.bf16.msra.mxu0 %v4937
    %5611 = vmatprep.subr.bf16.mxu0 %v4936
    %5612 = vmatpush1.bf16.msra.mxu0 %v4935
    %5613 = vmatprep.subr.bf16.mxu0 %v4966
    %5614 = vmatpush2.bf16.msra.mxu0 %v4965
    %5615 = vmatprep.subr.bf16.mxu0 %v4964
    %5616 = vmatpush2.bf16.msra.mxu0 %v4963
    %5617 = vmatprep.subr.bf16.mxu0 %v4962
    %5618 = vmatpush2.bf16.msra.mxu0 %v4961
    %5619 = vmatprep.subr.bf16.mxu0 %v4960
    %5620 = vmatpush2.bf16.msra.mxu0 %v4959
    %5621 = vmatprep.subr.bf16.mxu0 %v4958
    %5622 = vmatpush2.bf16.msra.mxu0 %v4957
    %5623 = vmatprep.subr.bf16.mxu0 %v4956
    %5624 = vmatpush2.bf16.msra.mxu0 %v4955
    %5625 = vmatprep.subr.bf16.mxu0 %v4954
    %5626 = vmatpush2.bf16.msra.mxu0 %v4953
    %5627 = vmatprep.subr.bf16.mxu0 %v4952
    %5628 = vmatpush2.bf16.msra.mxu0 %v4951
    %5629 = vmatprep.mubr.bf16.mxu0 %v2488
    %5630 = vmatmul.mubr.bf16.gmra.mxu0 %v2487
    %v5631 = vpop.f32.mrf.mxu0
    %v5632 = vadd.f32 %v5589, %v5631
    %v5633 = vpop.f32.mrf.mxu0
    %v5634 = vadd.f32 %v5591, %v5633
    %v5635 = vpop.f32.mrf.mxu0
    %v5636 = vadd.f32 %v5593, %v5635
    %v5637 = vpop.f32.mrf.mxu0
    %v5638 = vadd.f32 %v5595, %v5637
    %5639 = vdwg.mxu0
    %5640 = vmatprep.subr.bf16.mxu0 %v4982
    %5641 = vmatpush1.bf16.msra.mxu0 %v4981
    %5642 = vmatprep.subr.bf16.mxu0 %v4980
    %5643 = vmatpush1.bf16.msra.mxu0 %v4979
    %5644 = vmatprep.subr.bf16.mxu0 %v4978
    %5645 = vmatpush1.bf16.msra.mxu0 %v4977
    %5646 = vmatprep.subr.bf16.mxu0 %v4976
    %5647 = vmatpush1.bf16.msra.mxu0 %v4975
    %5648 = vmatprep.subr.bf16.mxu0 %v4974
    %5649 = vmatpush1.bf16.msra.mxu0 %v4973
    %5650 = vmatprep.subr.bf16.mxu0 %v4972
    %5651 = vmatpush1.bf16.msra.mxu0 %v4971
    %5652 = vmatprep.subr.bf16.mxu0 %v4970
    %5653 = vmatpush1.bf16.msra.mxu0 %v4969
    %5654 = vmatprep.subr.bf16.mxu0 %v4968
    %5655 = vmatpush1.bf16.msra.mxu0 %v4967
    %5656 = vmatprep.subr.bf16.mxu0 %v4998
    %5657 = vmatpush2.bf16.msra.mxu0 %v4997
    %5658 = vmatprep.subr.bf16.mxu0 %v4996
    %5659 = vmatpush2.bf16.msra.mxu0 %v4995
    %5660 = vmatprep.subr.bf16.mxu0 %v4994
    %5661 = vmatpush2.bf16.msra.mxu0 %v4993
    %5662 = vmatprep.subr.bf16.mxu0 %v4992
    %5663 = vmatpush2.bf16.msra.mxu0 %v4991
    %5664 = vmatprep.subr.bf16.mxu0 %v4990
    %5665 = vmatpush2.bf16.msra.mxu0 %v4989
    %5666 = vmatprep.subr.bf16.mxu0 %v4988
    %5667 = vmatpush2.bf16.msra.mxu0 %v4987
    %5668 = vmatprep.subr.bf16.mxu0 %v4986
    %5669 = vmatpush2.bf16.msra.mxu0 %v4985
    %5670 = vmatprep.subr.bf16.mxu0 %v4984
    %5671 = vmatpush2.bf16.msra.mxu0 %v4983
    %5672 = vmatprep.mubr.bf16.mxu0 %v2490
    %5673 = vmatmul.mubr.bf16.gmra.mxu0 %v2489
    %v5674 = vpop.f32.mrf.mxu0
    %v5675 = vadd.f32 %v5632, %v5674
    %v5676 = vpop.f32.mrf.mxu0
    %v5677 = vadd.f32 %v5634, %v5676
    %v5678 = vpop.f32.mrf.mxu0
    %v5679 = vadd.f32 %v5636, %v5678
    %v5680 = vpop.f32.mrf.mxu0
    %v5681 = vadd.f32 %v5638, %v5680
    %5682 = vdwg.mxu0
    %5683 = vmatprep.subr.bf16.mxu0 %v5014
    %5684 = vmatpush1.bf16.msra.mxu0 %v5013
    %5685 = vmatprep.subr.bf16.mxu0 %v5012
    %5686 = vmatpush1.bf16.msra.mxu0 %v5011
    %5687 = vmatprep.subr.bf16.mxu0 %v5010
    %5688 = vmatpush1.bf16.msra.mxu0 %v5009
    %5689 = vmatprep.subr.bf16.mxu0 %v5008
    %5690 = vmatpush1.bf16.msra.mxu0 %v5007
    %5691 = vmatprep.subr.bf16.mxu0 %v5006
    %5692 = vmatpush1.bf16.msra.mxu0 %v5005
    %5693 = vmatprep.subr.bf16.mxu0 %v5004
    %5694 = vmatpush1.bf16.msra.mxu0 %v5003
    %5695 = vmatprep.subr.bf16.mxu0 %v5002
    %5696 = vmatpush1.bf16.msra.mxu0 %v5001
    %5697 = vmatprep.subr.bf16.mxu0 %v5000
    %5698 = vmatpush1.bf16.msra.mxu0 %v4999
    %5699 = vmatprep.subr.bf16.mxu0 %v5030
    %5700 = vmatpush2.bf16.msra.mxu0 %v5029
    %5701 = vmatprep.subr.bf16.mxu0 %v5028
    %5702 = vmatpush2.bf16.msra.mxu0 %v5027
    %5703 = vmatprep.subr.bf16.mxu0 %v5026
    %5704 = vmatpush2.bf16.msra.mxu0 %v5025
    %5705 = vmatprep.subr.bf16.mxu0 %v5024
    %5706 = vmatpush2.bf16.msra.mxu0 %v5023
    %5707 = vmatprep.subr.bf16.mxu0 %v5022
    %5708 = vmatpush2.bf16.msra.mxu0 %v5021
    %5709 = vmatprep.subr.bf16.mxu0 %v5020
    %5710 = vmatpush2.bf16.msra.mxu0 %v5019
    %5711 = vmatprep.subr.bf16.mxu0 %v5018
    %5712 = vmatpush2.bf16.msra.mxu0 %v5017
    %5713 = vmatprep.subr.bf16.mxu0 %v5016
    %5714 = vmatpush2.bf16.msra.mxu0 %v5015
    %5715 = vmatprep.mubr.bf16.mxu0 %v2492
    %5716 = vmatmul.mubr.bf16.gmra.mxu0 %v2491
    %v5717 = vpop.f32.mrf.mxu0
    %v5718 = vadd.f32 %v5675, %v5717
    %v5719 = vpop.f32.mrf.mxu0
    %v5720 = vadd.f32 %v5677, %v5719
    %v5721 = vpop.f32.mrf.mxu0
    %v5722 = vadd.f32 %v5679, %v5721
    %v5723 = vpop.f32.mrf.mxu0
    %v5724 = vadd.f32 %v5681, %v5723
    %5725 = vdwg.mxu0
    %5726 = vmatprep.subr.bf16.mxu0 %v5046
    %5727 = vmatpush1.bf16.msra.mxu0 %v5045
    %5728 = vmatprep.subr.bf16.mxu0 %v5044
    %5729 = vmatpush1.bf16.msra.mxu0 %v5043
    %5730 = vmatprep.subr.bf16.mxu0 %v5042
    %5731 = vmatpush1.bf16.msra.mxu0 %v5041
    %5732 = vmatprep.subr.bf16.mxu0 %v5040
    %5733 = vmatpush1.bf16.msra.mxu0 %v5039
    %5734 = vmatprep.subr.bf16.mxu0 %v5038
    %5735 = vmatpush1.bf16.msra.mxu0 %v5037
    %5736 = vmatprep.subr.bf16.mxu0 %v5036
    %5737 = vmatpush1.bf16.msra.mxu0 %v5035
    %5738 = vmatprep.subr.bf16.mxu0 %v5034
    %5739 = vmatpush1.bf16.msra.mxu0 %v5033
    %5740 = vmatprep.subr.bf16.mxu0 %v5032
    %5741 = vmatpush1.bf16.msra.mxu0 %v5031
    %5742 = vmatprep.subr.bf16.mxu0 %v5062
    %5743 = vmatpush2.bf16.msra.mxu0 %v5061
    %5744 = vmatprep.subr.bf16.mxu0 %v5060
    %5745 = vmatpush2.bf16.msra.mxu0 %v5059
    %5746 = vmatprep.subr.bf16.mxu0 %v5058
    %5747 = vmatpush2.bf16.msra.mxu0 %v5057
    %5748 = vmatprep.subr.bf16.mxu0 %v5056
    %5749 = vmatpush2.bf16.msra.mxu0 %v5055
    %5750 = vmatprep.subr.bf16.mxu0 %v5054
    %5751 = vmatpush2.bf16.msra.mxu0 %v5053
    %5752 = vmatprep.subr.bf16.mxu0 %v5052
    %5753 = vmatpush2.bf16.msra.mxu0 %v5051
    %5754 = vmatprep.subr.bf16.mxu0 %v5050
    %5755 = vmatpush2.bf16.msra.mxu0 %v5049
    %5756 = vmatprep.subr.bf16.mxu0 %v5048
    %5757 = vmatpush2.bf16.msra.mxu0 %v5047
    %5758 = vmatprep.mubr.bf16.mxu0 %v2494
    %5759 = vmatmul.mubr.bf16.gmra.mxu0 %v2493
    %v5760 = vpop.f32.mrf.mxu0
    %v5761 = vadd.f32 %v5718, %v5760
    %v5762 = vpop.f32.mrf.mxu0
    %v5763 = vadd.f32 %v5720, %v5762
    %v5764 = vpop.f32.mrf.mxu0
    %v5765 = vadd.f32 %v5722, %v5764
    %v5766 = vpop.f32.mrf.mxu0
    %v5767 = vadd.f32 %v5724, %v5766
    %5768 = vdwg.mxu0
    %5769 = vmatprep.subr.bf16.mxu0 %v5078
    %5770 = vmatpush1.bf16.msra.mxu0 %v5077
    %5771 = vmatprep.subr.bf16.mxu0 %v5076
    %5772 = vmatpush1.bf16.msra.mxu0 %v5075
    %5773 = vmatprep.subr.bf16.mxu0 %v5074
    %5774 = vmatpush1.bf16.msra.mxu0 %v5073
    %5775 = vmatprep.subr.bf16.mxu0 %v5072
    %5776 = vmatpush1.bf16.msra.mxu0 %v5071
    %5777 = vmatprep.subr.bf16.mxu0 %v5070
    %5778 = vmatpush1.bf16.msra.mxu0 %v5069
    %5779 = vmatprep.subr.bf16.mxu0 %v5068
    %5780 = vmatpush1.bf16.msra.mxu0 %v5067
    %5781 = vmatprep.subr.bf16.mxu0 %v5066
    %5782 = vmatpush1.bf16.msra.mxu0 %v5065
    %5783 = vmatprep.subr.bf16.mxu0 %v5064
    %5784 = vmatpush1.bf16.msra.mxu0 %v5063
    %5785 = vmatprep.subr.bf16.mxu0 %v5094
    %5786 = vmatpush2.bf16.msra.mxu0 %v5093
    %5787 = vmatprep.subr.bf16.mxu0 %v5092
    %5788 = vmatpush2.bf16.msra.mxu0 %v5091
    %5789 = vmatprep.subr.bf16.mxu0 %v5090
    %5790 = vmatpush2.bf16.msra.mxu0 %v5089
    %5791 = vmatprep.subr.bf16.mxu0 %v5088
    %5792 = vmatpush2.bf16.msra.mxu0 %v5087
    %5793 = vmatprep.subr.bf16.mxu0 %v5086
    %5794 = vmatpush2.bf16.msra.mxu0 %v5085
    %5795 = vmatprep.subr.bf16.mxu0 %v5084
    %5796 = vmatpush2.bf16.msra.mxu0 %v5083
    %5797 = vmatprep.subr.bf16.mxu0 %v5082
    %5798 = vmatpush2.bf16.msra.mxu0 %v5081
    %5799 = vmatprep.subr.bf16.mxu0 %v5080
    %5800 = vmatpush2.bf16.msra.mxu0 %v5079
    %5801 = vmatprep.mubr.bf16.mxu0 %v2496
    %5802 = vmatmul.mubr.bf16.gmra.mxu0 %v2495
    %v5803 = vpop.f32.mrf.mxu0
    %v5804 = vadd.f32 %v5761, %v5803
    %v5805 = vpop.f32.mrf.mxu0
    %v5806 = vadd.f32 %v5763, %v5805
    %v5807 = vpop.f32.mrf.mxu0
    %v5808 = vadd.f32 %v5765, %v5807
    %v5809 = vpop.f32.mrf.mxu0
    %v5810 = vadd.f32 %v5767, %v5809
    %5811 = vdwg.mxu0
    %5812 = vmatprep.subr.bf16.mxu0 %v5110
    %5813 = vmatpush1.bf16.msra.mxu0 %v5109
    %5814 = vmatprep.subr.bf16.mxu0 %v5108
    %5815 = vmatpush1.bf16.msra.mxu0 %v5107
    %5816 = vmatprep.subr.bf16.mxu0 %v5106
    %5817 = vmatpush1.bf16.msra.mxu0 %v5105
    %5818 = vmatprep.subr.bf16.mxu0 %v5104
    %5819 = vmatpush1.bf16.msra.mxu0 %v5103
    %5820 = vmatprep.subr.bf16.mxu0 %v5102
    %5821 = vmatpush1.bf16.msra.mxu0 %v5101
    %5822 = vmatprep.subr.bf16.mxu0 %v5100
    %5823 = vmatpush1.bf16.msra.mxu0 %v5099
    %5824 = vmatprep.subr.bf16.mxu0 %v5098
    %5825 = vmatpush1.bf16.msra.mxu0 %v5097
    %5826 = vmatprep.subr.bf16.mxu0 %v5096
    %5827 = vmatpush1.bf16.msra.mxu0 %v5095
    %5828 = vmatprep.subr.bf16.mxu0 %v5126
    %5829 = vmatpush2.bf16.msra.mxu0 %v5125
    %5830 = vmatprep.subr.bf16.mxu0 %v5124
    %5831 = vmatpush2.bf16.msra.mxu0 %v5123
    %5832 = vmatprep.subr.bf16.mxu0 %v5122
    %5833 = vmatpush2.bf16.msra.mxu0 %v5121
    %5834 = vmatprep.subr.bf16.mxu0 %v5120
    %5835 = vmatpush2.bf16.msra.mxu0 %v5119
    %5836 = vmatprep.subr.bf16.mxu0 %v5118
    %5837 = vmatpush2.bf16.msra.mxu0 %v5117
    %5838 = vmatprep.subr.bf16.mxu0 %v5116
    %5839 = vmatpush2.bf16.msra.mxu0 %v5115
    %5840 = vmatprep.subr.bf16.mxu0 %v5114
    %5841 = vmatpush2.bf16.msra.mxu0 %v5113
    %5842 = vmatprep.subr.bf16.mxu0 %v5112
    %5843 = vmatpush2.bf16.msra.mxu0 %v5111
    %5844 = vmatprep.mubr.bf16.mxu0 %v2498
    %5845 = vmatmul.mubr.bf16.gmra.mxu0 %v2497
    %v5846 = vpop.f32.mrf.mxu0
    %v5847 = vadd.f32 %v5804, %v5846
    %v5848 = vpop.f32.mrf.mxu0
    %v5849 = vadd.f32 %v5806, %v5848
    %v5850 = vpop.f32.mrf.mxu0
    %v5851 = vadd.f32 %v5808, %v5850
    %v5852 = vpop.f32.mrf.mxu0
    %v5853 = vadd.f32 %v5810, %v5852
    %5854 = vdwg.mxu0
    %5855 = vmatprep.subr.bf16.mxu0 %v5142
    %5856 = vmatpush1.bf16.msra.mxu0 %v5141
    %5857 = vmatprep.subr.bf16.mxu0 %v5140
    %5858 = vmatpush1.bf16.msra.mxu0 %v5139
    %5859 = vmatprep.subr.bf16.mxu0 %v5138
    %5860 = vmatpush1.bf16.msra.mxu0 %v5137
    %5861 = vmatprep.subr.bf16.mxu0 %v5136
    %5862 = vmatpush1.bf16.msra.mxu0 %v5135
    %5863 = vmatprep.subr.bf16.mxu0 %v5134
    %5864 = vmatpush1.bf16.msra.mxu0 %v5133
    %5865 = vmatprep.subr.bf16.mxu0 %v5132
    %5866 = vmatpush1.bf16.msra.mxu0 %v5131
    %5867 = vmatprep.subr.bf16.mxu0 %v5130
    %5868 = vmatpush1.bf16.msra.mxu0 %v5129
    %5869 = vmatprep.subr.bf16.mxu0 %v5128
    %5870 = vmatpush1.bf16.msra.mxu0 %v5127
    %5871 = vmatprep.subr.bf16.mxu0 %v5158
    %5872 = vmatpush2.bf16.msra.mxu0 %v5157
    %5873 = vmatprep.subr.bf16.mxu0 %v5156
    %5874 = vmatpush2.bf16.msra.mxu0 %v5155
    %5875 = vmatprep.subr.bf16.mxu0 %v5154
    %5876 = vmatpush2.bf16.msra.mxu0 %v5153
    %5877 = vmatprep.subr.bf16.mxu0 %v5152
    %5878 = vmatpush2.bf16.msra.mxu0 %v5151
    %5879 = vmatprep.subr.bf16.mxu0 %v5150
    %5880 = vmatpush2.bf16.msra.mxu0 %v5149
    %5881 = vmatprep.subr.bf16.mxu0 %v5148
    %5882 = vmatpush2.bf16.msra.mxu0 %v5147
    %5883 = vmatprep.subr.bf16.mxu0 %v5146
    %5884 = vmatpush2.bf16.msra.mxu0 %v5145
    %5885 = vmatprep.subr.bf16.mxu0 %v5144
    %5886 = vmatpush2.bf16.msra.mxu0 %v5143
    %5887 = vmatprep.mubr.bf16.mxu0 %v2500
    %5888 = vmatmul.mubr.bf16.gmra.mxu0 %v2499
    %v5889 = vpop.f32.mrf.mxu0
    %v5890 = vadd.f32 %v5847, %v5889
    %v5891 = vpop.f32.mrf.mxu0
    %v5892 = vadd.f32 %v5849, %v5891
    %v5893 = vpop.f32.mrf.mxu0
    %v5894 = vadd.f32 %v5851, %v5893
    %v5895 = vpop.f32.mrf.mxu0
    %v5896 = vadd.f32 %v5853, %v5895
    %5897 = vdwg.mxu0
    %5898 = vmatprep.subr.bf16.mxu0 %v5174
    %5899 = vmatpush1.bf16.msra.mxu0 %v5173
    %5900 = vmatprep.subr.bf16.mxu0 %v5172
    %5901 = vmatpush1.bf16.msra.mxu0 %v5171
    %5902 = vmatprep.subr.bf16.mxu0 %v5170
    %5903 = vmatpush1.bf16.msra.mxu0 %v5169
    %5904 = vmatprep.subr.bf16.mxu0 %v5168
    %5905 = vmatpush1.bf16.msra.mxu0 %v5167
    %5906 = vmatprep.subr.bf16.mxu0 %v5166
    %5907 = vmatpush1.bf16.msra.mxu0 %v5165
    %5908 = vmatprep.subr.bf16.mxu0 %v5164
    %5909 = vmatpush1.bf16.msra.mxu0 %v5163
    %5910 = vmatprep.subr.bf16.mxu0 %v5162
    %5911 = vmatpush1.bf16.msra.mxu0 %v5161
    %5912 = vmatprep.subr.bf16.mxu0 %v5160
    %5913 = vmatpush1.bf16.msra.mxu0 %v5159
    %5914 = vmatprep.subr.bf16.mxu0 %v5190
    %5915 = vmatpush2.bf16.msra.mxu0 %v5189
    %5916 = vmatprep.subr.bf16.mxu0 %v5188
    %5917 = vmatpush2.bf16.msra.mxu0 %v5187
    %5918 = vmatprep.subr.bf16.mxu0 %v5186
    %5919 = vmatpush2.bf16.msra.mxu0 %v5185
    %5920 = vmatprep.subr.bf16.mxu0 %v5184
    %5921 = vmatpush2.bf16.msra.mxu0 %v5183
    %5922 = vmatprep.subr.bf16.mxu0 %v5182
    %5923 = vmatpush2.bf16.msra.mxu0 %v5181
    %5924 = vmatprep.subr.bf16.mxu0 %v5180
    %5925 = vmatpush2.bf16.msra.mxu0 %v5179
    %5926 = vmatprep.subr.bf16.mxu0 %v5178
    %5927 = vmatpush2.bf16.msra.mxu0 %v5177
    %5928 = vmatprep.subr.bf16.mxu0 %v5176
    %5929 = vmatpush2.bf16.msra.mxu0 %v5175
    %5930 = vmatprep.mubr.bf16.mxu0 %v2502
    %5931 = vmatmul.mubr.bf16.gmra.mxu0 %v2501
    %v5932 = vpop.f32.mrf.mxu0
    %v5933 = vadd.f32 %v5890, %v5932
    %v5934 = vpop.f32.mrf.mxu0
    %v5935 = vadd.f32 %v5892, %v5934
    %v5936 = vpop.f32.mrf.mxu0
    %v5937 = vadd.f32 %v5894, %v5936
    %v5938 = vpop.f32.mrf.mxu0
    %v5939 = vadd.f32 %v5896, %v5938
    %5940 = vdwg.mxu0
    %v5941 = vld [vmem:[#allocation23] sm:$0x3]
    %v5943 = vlaneseq
    %v5944 = vshrl.u32 %v5943, 7
    %v5945 = vsub.s32 0, %v5944
    %v5946 = vrot.slane %v5941, %v5945
    %v5947 = vlaneseq
    %v5948 = vshrl.u32 %v5947, 7
    %v5949 = vsub.s32 1, %v5948
    %v5950 = vrot.slane %v5941, %v5949
    %v5953 = vadd.f32 %v5933, %v5946
    %v5954 = vadd.f32 %v5935, %v5950
    %v5955 = vadd.f32 %v5937, %v5946
    %v5956 = vadd.f32 %v5939, %v5950
    %v5957 = vmul.f32 %v5953, 0.5
    %v5958 = vmul.f32 %v5954, 0.5
    %v5959 = vmul.f32 %v5955, 0.5
    %v5960 = vmul.f32 %v5956, 0.5
    %v5961 = vmul.f32 %v5953, 0.70710677
    %v5962 = vmul.f32 %v5954, 0.70710677
    %v5963 = vmul.f32 %v5955, 0.70710677
    %v5964 = vmul.f32 %v5956, 0.70710677
    %v5965 = verf.f32.pop %v5961
    %v5966 = verf.f32.pop %v5962
    %v5967 = verf.f32.pop %v5963
    %v5968 = verf.f32.pop %v5964
    %v5969 = vadd.f32 %v5965, 1.0
    %v5970 = vadd.f32 %v5966, 1.0
    %v5971 = vadd.f32 %v5967, 1.0
    %v5972 = vadd.f32 %v5968, 1.0
    %v5973 = vmul.f32 %v5957, %v5969
    %v5974 = vmul.f32 %v5958, %v5970
    %v5975 = vmul.f32 %v5959, %v5971
    %v5976 = vmul.f32 %v5960, %v5972
    %5977 = vst [vmem:[#allocation25] sm:$0xff] %v5973
    %5978 = vst [vmem:[#allocation25 + $0x8] sm:$0xff] %v5974
    %5979 = vst [vmem:[#allocation25 + $0x10] sm:$0xff] %v5975
    %5980 = vst [vmem:[#allocation25 + $0x18] sm:$0xff] %v5976
    // Predicated region
    $region114: #{tpu_custom_call.1} parent=1 // pred_check
      _
    $region115: #{tpu_custom_call.1} parent=1 // pred_check_branch
      %5982 = sbr.rel (0) target = $region117
    $region116: #{tpu_custom_call.1} parent=1 // pred_region
      %s5984 = ssub.s32 512, 512
      %5985 = vsyncadd [#allocation4], %s5984
      %s5986 = sshll.u32 [#allocation25], 4
      %s5987 = int_to_ptr.vmem [resolvable:$true] %s5986
      %5992 = dma.vmem_to_hbm [thread:$0]  %s5987, 512, %s14, [#allocation4], 256, 256, 16
    $region117: #{tpu_custom_call.1} parent=1 // pred_fallthru
      _
    // Predicated region
    $region118: #{tpu_custom_call.1} parent=1 // pred_check
      _
    $region119: #{tpu_custom_call.1} parent=1 // pred_check_branch
      %5994 = sbr.rel (0) target = $region121
    $region120: #{tpu_custom_call.1} parent=1 // pred_region
      %5995 = dma.done [#allocation4], 512
    $region121: #{tpu_custom_call.1} parent=1 // pred_fallthru
      _
    %5996 = vsyncpa [#allocation3], 1
    %5997 = vsyncpa [#allocation6], 1
    %5998 = vsyncpa [#allocation9], 1
    %5999 = vsyncpa [#allocation12], 1
    %6000 = vsyncpa [#allocation15], 1
    %6001 = vsyncpa [#allocation18], 1
    %6002 = vsyncpa [#allocation21], 1
    %6003 = vsyncpa [#allocation24], 1
    %6004 = vsyncpa [#allocation4], 1

</llo_original>
